<compile_context>
chip_gen: v7x
topology: tpu7x:2x2x1
jax: 0.10.0
libtpu: 0.0.40
codegen_flags: <defaults>
</compile_context>

<pallas_src>
import math

import jax
import jax.numpy as jnp
from jax.experimental import pallas as pl
from jax.experimental.pallas import tpu as pltpu


def _round_up(x, m):
    return ((x + m - 1) // m) * m


def _cdiv(a, b):
    return -(-a // b)


# ---------------------------------------------------------------------------
# Fused kernel factory: the whole MLP stack for one row tile.
# ---------------------------------------------------------------------------
def _make_fused_kernel(layer_is_skip, hidden_dim, skip_dim):
    """layer_is_skip: tuple[bool] per layer (static config)."""
    n_layers = len(layer_is_skip)
    any_skip = any(layer_is_skip)

    def kernel(*refs):
        # refs = (x_ref, z_ref, w0, b0, w1, b1, ..., o_ref, act_scratch)
        x_ref, z_ref = refs[0], refs[1]
        o_ref = refs[2 + 2 * n_layers]
        act = refs[3 + 2 * n_layers]            # bf16 [tile, hidden(+skip)]

        if any_skip:
            # Stage z ONCE per row tile into the tail columns of the scratch:
            # skip layers then do a single dot with K = hidden+skip instead of
            # two K=hidden dots plus a VPU add.  These columns are never
            # overwritten by the per-layer stores below.
            act[:, hidden_dim:hidden_dim + skip_dim] = z_ref[...].astype(act.dtype)

        for li, is_skip in enumerate(layer_is_skip):
            w_ref = refs[2 + 2 * li]            # bf16 [dimin, hidden]
            b_ref = refs[3 + 2 * li]            # f32  [1, hidden]
            if li == 0:
                # No staging copy for layer 0: feed the x tile straight to MXU
                # (cast to bf16 in vregs; no-op if x is already bf16 upstream).
                lhs = x_ref[...].astype(jnp.bfloat16)
            elif is_skip:
                lhs = act[:, :hidden_dim + skip_dim]     # [y | z] fused K
            else:
                lhs = act[:, :hidden_dim]
            y = jnp.dot(lhs, w_ref[...], preferred_element_type=jnp.float32)
            y = jnp.maximum(y + b_ref[...], 0.0)          # bias + ReLU in f32
            if li == n_layers - 1:
                o_ref[...] = y.astype(o_ref.dtype)
            else:
                act[:, :hidden_dim] = y.astype(act.dtype)

    return kernel


# ---------------------------------------------------------------------------
# Parameter init (deterministic, mimics nn.Linear default init).
# ---------------------------------------------------------------------------
def init_mlp_with_input_skips(key, n_layers, input_dim, output_dim, skip_dim,
                              hidden_dim, input_skips):
    # NOTE: output_dim is unused by the reference __init__ (every layer's
    # dimout is hidden_dim) — reproduced exactly.
    params = []
    for li in range(n_layers):
        if li == 0:
            dimin, dimout = input_dim, hidden_dim
        elif li in input_skips:
            dimin, dimout = hidden_dim + skip_dim, hidden_dim
        else:
            dimin, dimout = hidden_dim, hidden_dim
        key, kw, kb = jax.random.split(key, 3)
        bound = 1.0 / math.sqrt(dimin)
        # stored as [in_dim, out_dim] (transposed relative to the torch weight)
        w = jax.random.uniform(kw, (dimin, dimout), jnp.float32, -bound, bound)
        b = jax.random.uniform(kb, (1, dimout), jnp.float32, -bound, bound)
        params.append((w, b))
    return params


# ---------------------------------------------------------------------------
# Forward pass: all matmul+bias+relu work runs in the single fused kernel.
# ---------------------------------------------------------------------------
def mlp_with_input_skips_forward(params, input_skips, x, z, *, tm=1024):
    """x: [..., input_dim], z: [..., skip_dim] -> [..., hidden_dim] (f32)."""
    input_skips = set(input_skips)
    # Layer 0 in input_skips is inconsistent in the reference module itself
    # (its Linear is built with dimin=input_dim but forward would concat z).
    assert 0 not in input_skips, "input_skips must not contain layer 0"

    lead = x.shape[:-1]
    n_rows = math.prod(lead) if lead else 1
    input_dim = x.shape[-1]
    skip_dim = z.shape[-1]
    hidden_dim = params[-1][0].shape[-1]
    n_layers = len(params)
    layer_is_skip = tuple((li in input_skips) and li != 0 for li in range(n_layers))
    any_skip = any(layer_is_skip)

    # ----- row tiling: minimise dead rows, keep the grid even for megacore ---
    n_tiles = max(1, _cdiv(n_rows, tm))
    if n_rows >= 32:
        n_tiles = max(n_tiles, 2)          # give both v7x TensorCores work
        if n_tiles % 2:
            n_tiles += 1                   # even split across the two cores
    tile_rows = _round_up(_cdiv(n_rows, n_tiles), 16)   # 16 = bf16 sublane tile
    if tile_rows >= n_rows:
        tile_rows = n_rows                 # single full-extent tile
    grid_rows = _cdiv(n_rows, tile_rows)   # boundary block clipped by Pallas

    # ----- params: bf16 weights (halve VMEM/HBM), f32 biases, NO padding -----
    flat_params = []
    for w, b in params:
        flat_params += [w.astype(jnp.bfloat16), b.astype(jnp.float32)]

    x2 = x.reshape(n_rows, input_dim)      # no padded HBM copies of x / z
    z2 = z.reshape(n_rows, skip_dim)

    act_w = hidden_dim + (skip_dim if any_skip else 0)
    kernel = _make_fused_kernel(layer_is_skip, hidden_dim, skip_dim)

    def run(single_buffer_params):
        def _resident(shape):
            if single_buffer_params:
                return pl.BlockSpec(shape, lambda i: (0, 0),
                                    pipeline_mode=pl.Buffered(1))
            return pl.BlockSpec(shape, lambda i: (0, 0))

        param_specs = [_resident(p.shape) for p in flat_params]

        # Explicit VMEM budget: resident params (x buffer count) + activation
        # scratch + double-buffered streamed x/z/out tiles; capped at 64 MiB so
        # the same budget is valid on v7x's 64 MiB/TC.
        param_bytes = sum(int(p.size) * p.dtype.itemsize for p in flat_params)
        param_bytes *= 1 if single_buffer_params else 2
        scratch_bytes = tile_rows * act_w * 2
        streamed_bytes = 2 * tile_rows * (
            input_dim * x2.dtype.itemsize + skip_dim * z2.dtype.itemsize
            + hidden_dim * 4)
        needed = param_bytes + scratch_bytes + streamed_bytes
        vmem_limit = int(min(max(2 * needed, 16 << 20), 64 << 20))
        # TODO(synk): if resident bf16 params alone exceed the v7x 64 MiB/TC
        # budget, stream weights over an extra "arbitrary" layer grid axis
        # instead of keeping the whole stack resident.

        return pl.pallas_call(
            kernel,
            out_shape=jax.ShapeDtypeStruct((n_rows, hidden_dim), jnp.float32),
            grid_spec=pltpu.PrefetchScalarGridSpec(
                num_scalar_prefetch=0,
                grid=(grid_rows,),
                in_specs=[
                    pl.BlockSpec((tile_rows, input_dim), lambda i: (i, 0)),  # x
                    pl.BlockSpec((tile_rows, skip_dim), lambda i: (i, 0)),   # z
                    *param_specs,                                 # resident W/b
                ],
                out_specs=pl.BlockSpec((tile_rows, hidden_dim), lambda i: (i, 0)),
                scratch_shapes=[pltpu.VMEM((tile_rows, act_w), jnp.bfloat16)],
            ),
            compiler_params=pltpu.CompilerParams(
                dimension_semantics=("parallel",),   # rows are independent
                vmem_limit_bytes=vmem_limit,
            ),
        )(x2, z2, *flat_params)

    try:
        out = jax.block_until_ready(run(single_buffer_params=True))
    except Exception:
        # pl.Buffered(1) not accepted by this jax/libtpu build -> fall back to
        # default double-buffered resident params (correctness unchanged).
        out = jax.block_until_ready(run(single_buffer_params=False))

    return out.reshape(*lead, hidden_dim)


# Pure-JAX f32 reference for correctness checking.
def _reference_forward(params, input_skips, x, z):
    input_skips = set(input_skips)
    y = x
    for li, (w, b) in enumerate(params):
        if li in input_skips:
            y = jnp.concatenate([y, z], axis=-1)
        y = jnp.maximum(jnp.einsum("...k,kn->...n", y, w) + b[0], 0.0)
    return y


if __name__ == "__main__":
    n_layers = 4
    input_dim = 32
    output_dim = 64     # unused by the reference module's __init__, kept for parity
    skip_dim = 32
    hidden_dim = 64
    input_skips = (2,)

    key = jax.random.PRNGKey(0)
    kp, kx, kz = jax.random.split(key, 3)
    params = init_mlp_with_input_skips(
        kp, n_layers, input_dim, output_dim, skip_dim, hidden_dim, input_skips)

    # batch=2, points=300 -> 600 rows: two 304-row tiles (1.3% dead rows, even
    # grid for megacore), exercises the fused K=96 skip layer (layer 2) and the
    # bf16 MXU path.
    x = jax.random.normal(kx, (2, 300, input_dim), jnp.float32)
    z = jax.random.normal(kz, (2, 300, skip_dim), jnp.float32)

    out = mlp_with_input_skips_forward(params, input_skips, x, z)
    out = jax.block_until_ready(out)

    ref = _reference_forward(params, input_skips, x, z)
    assert out.shape == (2, 300, hidden_dim)
    # bf16 weights/activations with f32 accumulation -> dtype-aware tolerance.
    assert jnp.allclose(out, ref, atol=5e-2, rtol=5e-2), "mismatch vs reference"

    print("KERNEL_OK")
</pallas_src>

<mosaic_0001>
module attributes {stable_mosaic.version = 11 : i64} {
  func.func @kernel(%arg0: i32, %arg1: memref<304x32xf32, #tpu.memory_space<vmem>>, %arg2: memref<304x32xf32, #tpu.memory_space<vmem>>, %arg3: memref<32x64xbf16, #tpu.memory_space<vmem>>, %arg4: memref<1x64xf32, #tpu.memory_space<vmem>>, %arg5: memref<64x64xbf16, #tpu.memory_space<vmem>>, %arg6: memref<1x64xf32, #tpu.memory_space<vmem>>, %arg7: memref<96x64xbf16, #tpu.memory_space<vmem>>, %arg8: memref<1x64xf32, #tpu.memory_space<vmem>>, %arg9: memref<64x64xbf16, #tpu.memory_space<vmem>>, %arg10: memref<1x64xf32, #tpu.memory_space<vmem>>, %arg11: memref<304x64xf32, #tpu.memory_space<vmem>>, %arg12: memref<304x96xbf16, #tpu.memory_space<vmem>>) attributes {dimension_semantics = [#tpu.dimension_semantics<parallel>], iteration_bounds = array<i64: 2>, scalar_prefetch = 0 : i64, scratch_operands = 1 : i64, tpu.core_type = #tpu.core_type<tc>, window_params = [{transform_indices = @transform_0, window_bounds = array<i64: 304, 32>}, {transform_indices = @transform_1, window_bounds = array<i64: 304, 32>}, {pipeline_mode = #tpu.pipeline_mode<synchronous>, transform_indices = @transform_2, window_bounds = array<i64: 32, 64>}, {pipeline_mode = #tpu.pipeline_mode<synchronous>, transform_indices = @transform_3, window_bounds = array<i64: 1, 64>}, {pipeline_mode = #tpu.pipeline_mode<synchronous>, transform_indices = @transform_4, window_bounds = array<i64: 64, 64>}, {pipeline_mode = #tpu.pipeline_mode<synchronous>, transform_indices = @transform_5, window_bounds = array<i64: 1, 64>}, {pipeline_mode = #tpu.pipeline_mode<synchronous>, transform_indices = @transform_6, window_bounds = array<i64: 96, 64>}, {pipeline_mode = #tpu.pipeline_mode<synchronous>, transform_indices = @transform_7, window_bounds = array<i64: 1, 64>}, {pipeline_mode = #tpu.pipeline_mode<synchronous>, transform_indices = @transform_8, window_bounds = array<i64: 64, 64>}, {pipeline_mode = #tpu.pipeline_mode<synchronous>, transform_indices = @transform_9, window_bounds = array<i64: 1, 64>}, {transform_indices = @transform_10, window_bounds = array<i64: 304, 64>}]} {
    %c0 = arith.constant 0 : index
    %c0_0 = arith.constant 0 : index
    %0 = vector.load %arg2[%c0, %c0_0] : memref<304x32xf32, #tpu.memory_space<vmem>>, vector<304x32xf32>
    %1 = arith.truncf %0 : vector<304x32xf32> to vector<304x32xbf16>
    %c0_1 = arith.constant 0 : index
    %c64 = arith.constant 64 : index
    %2 = vector.load %arg12[%c0_1, %c64] : memref<304x96xbf16, #tpu.memory_space<vmem>>, vector<304x32xbf16>
    tpu.vector_store %arg12[%c0_1, %c64], %1 {strides = array<i32>} : memref<304x96xbf16, #tpu.memory_space<vmem>>, vector<304x32xbf16>,
    %c0_2 = arith.constant 0 : index
    %c0_3 = arith.constant 0 : index
    %3 = vector.load %arg1[%c0_2, %c0_3] : memref<304x32xf32, #tpu.memory_space<vmem>>, vector<304x32xf32>
    %4 = arith.truncf %3 : vector<304x32xf32> to vector<304x32xbf16>
    %c0_4 = arith.constant 0 : index
    %c0_5 = arith.constant 0 : index
    %5 = vector.load %arg3[%c0_4, %c0_5] : memref<32x64xbf16, #tpu.memory_space<vmem>>, vector<32x64xbf16>
    %cst = arith.constant dense<0.000000e+00> : vector<304x64xf32>
    %6 = tpu.matmul %4, %5, %cst {dimension_numbers = #tpu.dot_dimension_numbers<[1], [0], [0], [1], [0, 0, 1, 1], [], []>} : vector<304x32xbf16>, vector<32x64xbf16>, vector<304x64xf32> -> vector<304x64xf32>
    %c0_6 = arith.constant 0 : index
    %c0_7 = arith.constant 0 : index
    %7 = vector.load %arg4[%c0_6, %c0_7] : memref<1x64xf32, #tpu.memory_space<vmem>>, vector<1x64xf32>
    %8 = vector.broadcast %7 : vector<1x64xf32> to vector<304x64xf32>
    %9 = arith.addf %6, %8 : vector<304x64xf32>
    %cst_8 = arith.constant 0.000000e+00 : f32
    %10 = vector.broadcast %cst_8 : f32 to vector<304x64xf32>
    %11 = arith.maximumf %9, %10 : vector<304x64xf32>
    %12 = arith.truncf %11 : vector<304x64xf32> to vector<304x64xbf16>
    %c0_9 = arith.constant 0 : index
    %c0_10 = arith.constant 0 : index
    %13 = vector.load %arg12[%c0_9, %c0_10] : memref<304x96xbf16, #tpu.memory_space<vmem>>, vector<304x64xbf16>
    tpu.vector_store %arg12[%c0_9, %c0_10], %12 {strides = array<i32>} : memref<304x96xbf16, #tpu.memory_space<vmem>>, vector<304x64xbf16>,
    %c0_11 = arith.constant 0 : index
    %c0_12 = arith.constant 0 : index
    %14 = vector.load %arg12[%c0_11, %c0_12] : memref<304x96xbf16, #tpu.memory_space<vmem>>, vector<304x64xbf16>
    %c0_13 = arith.constant 0 : index
    %c0_14 = arith.constant 0 : index
    %15 = vector.load %arg5[%c0_13, %c0_14] : memref<64x64xbf16, #tpu.memory_space<vmem>>, vector<64x64xbf16>
    %cst_15 = arith.constant dense<0.000000e+00> : vector<304x64xf32>
    %16 = tpu.matmul %14, %15, %cst_15 {dimension_numbers = #tpu.dot_dimension_numbers<[1], [0], [0], [1], [0, 0, 1, 1], [], []>} : vector<304x64xbf16>, vector<64x64xbf16>, vector<304x64xf32> -> vector<304x64xf32>
    %c0_16 = arith.constant 0 : index
    %c0_17 = arith.constant 0 : index
    %17 = vector.load %arg6[%c0_16, %c0_17] : memref<1x64xf32, #tpu.memory_space<vmem>>, vector<1x64xf32>
    %18 = vector.broadcast %17 : vector<1x64xf32> to vector<304x64xf32>
    %19 = arith.addf %16, %18 : vector<304x64xf32>
    %cst_18 = arith.constant 0.000000e+00 : f32
    %20 = vector.broadcast %cst_18 : f32 to vector<304x64xf32>
    %21 = arith.maximumf %19, %20 : vector<304x64xf32>
    %22 = arith.truncf %21 : vector<304x64xf32> to vector<304x64xbf16>
    %c0_19 = arith.constant 0 : index
    %c0_20 = arith.constant 0 : index
    %23 = vector.load %arg12[%c0_19, %c0_20] : memref<304x96xbf16, #tpu.memory_space<vmem>>, vector<304x64xbf16>
    tpu.vector_store %arg12[%c0_19, %c0_20], %22 {strides = array<i32>} : memref<304x96xbf16, #tpu.memory_space<vmem>>, vector<304x64xbf16>,
    %c0_21 = arith.constant 0 : index
    %c0_22 = arith.constant 0 : index
    %24 = vector.load %arg12[%c0_21, %c0_22] : memref<304x96xbf16, #tpu.memory_space<vmem>>, vector<304x96xbf16>
    %c0_23 = arith.constant 0 : index
    %c0_24 = arith.constant 0 : index
    %25 = vector.load %arg7[%c0_23, %c0_24] : memref<96x64xbf16, #tpu.memory_space<vmem>>, vector<96x64xbf16>
    %cst_25 = arith.constant dense<0.000000e+00> : vector<304x64xf32>
    %26 = tpu.matmul %24, %25, %cst_25 {dimension_numbers = #tpu.dot_dimension_numbers<[1], [0], [0], [1], [0, 0, 1, 1], [], []>} : vector<304x96xbf16>, vector<96x64xbf16>, vector<304x64xf32> -> vector<304x64xf32>
    %c0_26 = arith.constant 0 : index
    %c0_27 = arith.constant 0 : index
    %27 = vector.load %arg8[%c0_26, %c0_27] : memref<1x64xf32, #tpu.memory_space<vmem>>, vector<1x64xf32>
    %28 = vector.broadcast %27 : vector<1x64xf32> to vector<304x64xf32>
    %29 = arith.addf %26, %28 : vector<304x64xf32>
    %cst_28 = arith.constant 0.000000e+00 : f32
    %30 = vector.broadcast %cst_28 : f32 to vector<304x64xf32>
    %31 = arith.maximumf %29, %30 : vector<304x64xf32>
    %32 = arith.truncf %31 : vector<304x64xf32> to vector<304x64xbf16>
    %c0_29 = arith.constant 0 : index
    %c0_30 = arith.constant 0 : index
    %33 = vector.load %arg12[%c0_29, %c0_30] : memref<304x96xbf16, #tpu.memory_space<vmem>>, vector<304x64xbf16>
    tpu.vector_store %arg12[%c0_29, %c0_30], %32 {strides = array<i32>} : memref<304x96xbf16, #tpu.memory_space<vmem>>, vector<304x64xbf16>,
    %c0_31 = arith.constant 0 : index
    %c0_32 = arith.constant 0 : index
    %34 = vector.load %arg12[%c0_31, %c0_32] : memref<304x96xbf16, #tpu.memory_space<vmem>>, vector<304x64xbf16>
    %c0_33 = arith.constant 0 : index
    %c0_34 = arith.constant 0 : index
    %35 = vector.load %arg9[%c0_33, %c0_34] : memref<64x64xbf16, #tpu.memory_space<vmem>>, vector<64x64xbf16>
    %cst_35 = arith.constant dense<0.000000e+00> : vector<304x64xf32>
    %36 = tpu.matmul %34, %35, %cst_35 {dimension_numbers = #tpu.dot_dimension_numbers<[1], [0], [0], [1], [0, 0, 1, 1], [], []>} : vector<304x64xbf16>, vector<64x64xbf16>, vector<304x64xf32> -> vector<304x64xf32>
    %c0_36 = arith.constant 0 : index
    %c0_37 = arith.constant 0 : index
    %37 = vector.load %arg10[%c0_36, %c0_37] : memref<1x64xf32, #tpu.memory_space<vmem>>, vector<1x64xf32>
    %38 = vector.broadcast %37 : vector<1x64xf32> to vector<304x64xf32>
    %39 = arith.addf %36, %38 : vector<304x64xf32>
    %cst_38 = arith.constant 0.000000e+00 : f32
    %40 = vector.broadcast %cst_38 : f32 to vector<304x64xf32>
    %41 = arith.maximumf %39, %40 : vector<304x64xf32>
    %c0_39 = arith.constant 0 : index
    %c0_40 = arith.constant 0 : index
    %42 = vector.load %arg11[%c0_39, %c0_40] : memref<304x64xf32, #tpu.memory_space<vmem>>, vector<304x64xf32>
    tpu.vector_store %arg11[%c0_39, %c0_40], %41 {strides = array<i32>} : memref<304x64xf32, #tpu.memory_space<vmem>>, vector<304x64xf32>,
    return
  }
  func.func @transform_0(%arg0: i32) -> (i32, i32) {
    %c0_i32 = arith.constant 0 : i32
    %c0_i32_0 = arith.constant 0 : i32
    return %arg0, %c0_i32 : i32, i32
  }
  func.func @transform_1(%arg0: i32) -> (i32, i32) {
    %c0_i32 = arith.constant 0 : i32
    %c0_i32_0 = arith.constant 0 : i32
    return %arg0, %c0_i32 : i32, i32
  }
  func.func @transform_2(%arg0: i32) -> (i32, i32) {
    %c0_i32 = arith.constant 0 : i32
    %c0_i32_0 = arith.constant 0 : i32
    %c0_i32_1 = arith.constant 0 : i32
    return %c0_i32, %c0_i32_0 : i32, i32
  }
  func.func @transform_3(%arg0: i32) -> (i32, i32) {
    %c0_i32 = arith.constant 0 : i32
    %c0_i32_0 = arith.constant 0 : i32
    %c0_i32_1 = arith.constant 0 : i32
    return %c0_i32, %c0_i32_0 : i32, i32
  }
  func.func @transform_4(%arg0: i32) -> (i32, i32) {
    %c0_i32 = arith.constant 0 : i32
    %c0_i32_0 = arith.constant 0 : i32
    %c0_i32_1 = arith.constant 0 : i32
    return %c0_i32, %c0_i32_0 : i32, i32
  }
  func.func @transform_5(%arg0: i32) -> (i32, i32) {
    %c0_i32 = arith.constant 0 : i32
    %c0_i32_0 = arith.constant 0 : i32
    %c0_i32_1 = arith.constant 0 : i32
    return %c0_i32, %c0_i32_0 : i32, i32
  }
  func.func @transform_6(%arg0: i32) -> (i32, i32) {
    %c0_i32 = arith.constant 0 : i32
    %c0_i32_0 = arith.constant 0 : i32
    %c0_i32_1 = arith.constant 0 : i32
    return %c0_i32, %c0_i32_0 : i32, i32
  }
  func.func @transform_7(%arg0: i32) -> (i32, i32) {
    %c0_i32 = arith.constant 0 : i32
    %c0_i32_0 = arith.constant 0 : i32
    %c0_i32_1 = arith.constant 0 : i32
    return %c0_i32, %c0_i32_0 : i32, i32
  }
  func.func @transform_8(%arg0: i32) -> (i32, i32) {
    %c0_i32 = arith.constant 0 : i32
    %c0_i32_0 = arith.constant 0 : i32
    %c0_i32_1 = arith.constant 0 : i32
    return %c0_i32, %c0_i32_0 : i32, i32
  }
  func.func @transform_9(%arg0: i32) -> (i32, i32) {
    %c0_i32 = arith.constant 0 : i32
    %c0_i32_0 = arith.constant 0 : i32
    %c0_i32_1 = arith.constant 0 : i32
    return %c0_i32, %c0_i32_0 : i32, i32
  }
  func.func @transform_10(%arg0: i32) -> (i32, i32) {
    %c0_i32 = arith.constant 0 : i32
    %c0_i32_0 = arith.constant 0 : i32
    return %arg0, %c0_i32 : i32, i32
  }
}

module attributes {stable_mosaic.version = 11 : i64} {
  func.func @kernel(%arg0: i32, %arg1: memref<304x32xf32, #tpu.memory_space<vmem>>, %arg2: memref<304x32xf32, #tpu.memory_space<vmem>>, %arg3: memref<32x64xbf16, #tpu.memory_space<vmem>>, %arg4: memref<1x64xf32, #tpu.memory_space<vmem>>, %arg5: memref<64x64xbf16, #tpu.memory_space<vmem>>, %arg6: memref<1x64xf32, #tpu.memory_space<vmem>>, %arg7: memref<96x64xbf16, #tpu.memory_space<vmem>>, %arg8: memref<1x64xf32, #tpu.memory_space<vmem>>, %arg9: memref<64x64xbf16, #tpu.memory_space<vmem>>, %arg10: memref<1x64xf32, #tpu.memory_space<vmem>>, %arg11: memref<304x64xf32, #tpu.memory_space<vmem>>, %arg12: memref<304x96xbf16, #tpu.memory_space<vmem>>) attributes {dimension_semantics = [#tpu.dimension_semantics<parallel>], iteration_bounds = array<i64: 2>, scalar_prefetch = 0 : i64, scratch_operands = 1 : i64, tpu.core_type = #tpu.core_type<tc>, window_params = [{transform_indices = @transform_0, window_bounds = array<i64: 304, 32>}, {transform_indices = @transform_1, window_bounds = array<i64: 304, 32>}, {pipeline_mode = #tpu.pipeline_mode<synchronous>, transform_indices = @transform_2, window_bounds = array<i64: 32, 64>}, {pipeline_mode = #tpu.pipeline_mode<synchronous>, transform_indices = @transform_3, window_bounds = array<i64: 1, 64>}, {pipeline_mode = #tpu.pipeline_mode<synchronous>, transform_indices = @transform_4, window_bounds = array<i64: 64, 64>}, {pipeline_mode = #tpu.pipeline_mode<synchronous>, transform_indices = @transform_5, window_bounds = array<i64: 1, 64>}, {pipeline_mode = #tpu.pipeline_mode<synchronous>, transform_indices = @transform_6, window_bounds = array<i64: 96, 64>}, {pipeline_mode = #tpu.pipeline_mode<synchronous>, transform_indices = @transform_7, window_bounds = array<i64: 1, 64>}, {pipeline_mode = #tpu.pipeline_mode<synchronous>, transform_indices = @transform_8, window_bounds = array<i64: 64, 64>}, {pipeline_mode = #tpu.pipeline_mode<synchronous>, transform_indices = @transform_9, window_bounds = array<i64: 1, 64>}, {transform_indices = @transform_10, window_bounds = array<i64: 304, 64>}]} {
    %c0 = arith.constant 0 : index
    %c0_0 = arith.constant 0 : index
    %0 = vector.load %arg2[%c0, %c0_0] : memref<304x32xf32, #tpu.memory_space<vmem>>, vector<304x32xf32>
    %1 = arith.truncf %0 : vector<304x32xf32> to vector<304x32xbf16>
    %c0_1 = arith.constant 0 : index
    %c64 = arith.constant 64 : index
    %2 = vector.load %arg12[%c0_1, %c64] : memref<304x96xbf16, #tpu.memory_space<vmem>>, vector<304x32xbf16>
    tpu.vector_store %arg12[%c0_1, %c64], %1 {strides = array<i32>} : memref<304x96xbf16, #tpu.memory_space<vmem>>, vector<304x32xbf16>,
    %c0_2 = arith.constant 0 : index
    %c0_3 = arith.constant 0 : index
    %3 = vector.load %arg1[%c0_2, %c0_3] : memref<304x32xf32, #tpu.memory_space<vmem>>, vector<304x32xf32>
    %4 = arith.truncf %3 : vector<304x32xf32> to vector<304x32xbf16>
    %c0_4 = arith.constant 0 : index
    %c0_5 = arith.constant 0 : index
    %5 = vector.load %arg3[%c0_4, %c0_5] : memref<32x64xbf16, #tpu.memory_space<vmem>>, vector<32x64xbf16>
    %cst = arith.constant dense<0.000000e+00> : vector<304x64xf32>
    %6 = tpu.matmul %4, %5, %cst {dimension_numbers = #tpu.dot_dimension_numbers<[1], [0], [0], [1], [0, 0, 1, 1], [], []>} : vector<304x32xbf16>, vector<32x64xbf16>, vector<304x64xf32> -> vector<304x64xf32>
    %c0_6 = arith.constant 0 : index
    %c0_7 = arith.constant 0 : index
    %7 = vector.load %arg4[%c0_6, %c0_7] : memref<1x64xf32, #tpu.memory_space<vmem>>, vector<1x64xf32>
    %8 = vector.broadcast %7 : vector<1x64xf32> to vector<304x64xf32>
    %9 = arith.addf %6, %8 : vector<304x64xf32>
    %cst_8 = arith.constant 0.000000e+00 : f32
    %10 = vector.broadcast %cst_8 : f32 to vector<304x64xf32>
    %11 = arith.maximumf %9, %10 : vector<304x64xf32>
    %12 = arith.truncf %11 : vector<304x64xf32> to vector<304x64xbf16>
    %c0_9 = arith.constant 0 : index
    %c0_10 = arith.constant 0 : index
    %13 = vector.load %arg12[%c0_9, %c0_10] : memref<304x96xbf16, #tpu.memory_space<vmem>>, vector<304x64xbf16>
    tpu.vector_store %arg12[%c0_9, %c0_10], %12 {strides = array<i32>} : memref<304x96xbf16, #tpu.memory_space<vmem>>, vector<304x64xbf16>,
    %c0_11 = arith.constant 0 : index
    %c0_12 = arith.constant 0 : index
    %14 = vector.load %arg12[%c0_11, %c0_12] : memref<304x96xbf16, #tpu.memory_space<vmem>>, vector<304x64xbf16>
    %c0_13 = arith.constant 0 : index
    %c0_14 = arith.constant 0 : index
    %15 = vector.load %arg5[%c0_13, %c0_14] : memref<64x64xbf16, #tpu.memory_space<vmem>>, vector<64x64xbf16>
    %cst_15 = arith.constant dense<0.000000e+00> : vector<304x64xf32>
    %16 = tpu.matmul %14, %15, %cst_15 {dimension_numbers = #tpu.dot_dimension_numbers<[1], [0], [0], [1], [0, 0, 1, 1], [], []>} : vector<304x64xbf16>, vector<64x64xbf16>, vector<304x64xf32> -> vector<304x64xf32>
    %c0_16 = arith.constant 0 : index
    %c0_17 = arith.constant 0 : index
    %17 = vector.load %arg6[%c0_16, %c0_17] : memref<1x64xf32, #tpu.memory_space<vmem>>, vector<1x64xf32>
    %18 = vector.broadcast %17 : vector<1x64xf32> to vector<304x64xf32>
    %19 = arith.addf %16, %18 : vector<304x64xf32>
    %cst_18 = arith.constant 0.000000e+00 : f32
    %20 = vector.broadcast %cst_18 : f32 to vector<304x64xf32>
    %21 = arith.maximumf %19, %20 : vector<304x64xf32>
    %22 = arith.truncf %21 : vector<304x64xf32> to vector<304x64xbf16>
    %c0_19 = arith.constant 0 : index
    %c0_20 = arith.constant 0 : index
    %23 = vector.load %arg12[%c0_19, %c0_20] : memref<304x96xbf16, #tpu.memory_space<vmem>>, vector<304x64xbf16>
    tpu.vector_store %arg12[%c0_19, %c0_20], %22 {strides = array<i32>} : memref<304x96xbf16, #tpu.memory_space<vmem>>, vector<304x64xbf16>,
    %c0_21 = arith.constant 0 : index
    %c0_22 = arith.constant 0 : index
    %24 = vector.load %arg12[%c0_21, %c0_22] : memref<304x96xbf16, #tpu.memory_space<vmem>>, vector<304x96xbf16>
    %c0_23 = arith.constant 0 : index
    %c0_24 = arith.constant 0 : index
    %25 = vector.load %arg7[%c0_23, %c0_24] : memref<96x64xbf16, #tpu.memory_space<vmem>>, vector<96x64xbf16>
    %cst_25 = arith.constant dense<0.000000e+00> : vector<304x64xf32>
    %26 = tpu.matmul %24, %25, %cst_25 {dimension_numbers = #tpu.dot_dimension_numbers<[1], [0], [0], [1], [0, 0, 1, 1], [], []>} : vector<304x96xbf16>, vector<96x64xbf16>, vector<304x64xf32> -> vector<304x64xf32>
    %c0_26 = arith.constant 0 : index
    %c0_27 = arith.constant 0 : index
    %27 = vector.load %arg8[%c0_26, %c0_27] : memref<1x64xf32, #tpu.memory_space<vmem>>, vector<1x64xf32>
    %28 = vector.broadcast %27 : vector<1x64xf32> to vector<304x64xf32>
    %29 = arith.addf %26, %28 : vector<304x64xf32>
    %cst_28 = arith.constant 0.000000e+00 : f32
    %30 = vector.broadcast %cst_28 : f32 to vector<304x64xf32>
    %31 = arith.maximumf %29, %30 : vector<304x64xf32>
    %32 = arith.truncf %31 : vector<304x64xf32> to vector<304x64xbf16>
    %c0_29 = arith.constant 0 : index
    %c0_30 = arith.constant 0 : index
    %33 = vector.load %arg12[%c0_29, %c0_30] : memref<304x96xbf16, #tpu.memory_space<vmem>>, vector<304x64xbf16>
    tpu.vector_store %arg12[%c0_29, %c0_30], %32 {strides = array<i32>} : memref<304x96xbf16, #tpu.memory_space<vmem>>, vector<304x64xbf16>,
    %c0_31 = arith.constant 0 : index
    %c0_32 = arith.constant 0 : index
    %34 = vector.load %arg12[%c0_31, %c0_32] : memref<304x96xbf16, #tpu.memory_space<vmem>>, vector<304x64xbf16>
    %c0_33 = arith.constant 0 : index
    %c0_34 = arith.constant 0 : index
    %35 = vector.load %arg9[%c0_33, %c0_34] : memref<64x64xbf16, #tpu.memory_space<vmem>>, vector<64x64xbf16>
    %cst_35 = arith.constant dense<0.000000e+00> : vector<304x64xf32>
    %36 = tpu.matmul %34, %35, %cst_35 {dimension_numbers = #tpu.dot_dimension_numbers<[1], [0], [0], [1], [0, 0, 1, 1], [], []>} : vector<304x64xbf16>, vector<64x64xbf16>, vector<304x64xf32> -> vector<304x64xf32>
    %c0_36 = arith.constant 0 : index
    %c0_37 = arith.constant 0 : index
    %37 = vector.load %arg10[%c0_36, %c0_37] : memref<1x64xf32, #tpu.memory_space<vmem>>, vector<1x64xf32>
    %38 = vector.broadcast %37 : vector<1x64xf32> to vector<304x64xf32>
    %39 = arith.addf %36, %38 : vector<304x64xf32>
    %cst_38 = arith.constant 0.000000e+00 : f32
    %40 = vector.broadcast %cst_38 : f32 to vector<304x64xf32>
    %41 = arith.maximumf %39, %40 : vector<304x64xf32>
    %c0_39 = arith.constant 0 : index
    %c0_40 = arith.constant 0 : index
    %42 = vector.load %arg11[%c0_39, %c0_40] : memref<304x64xf32, #tpu.memory_space<vmem>>, vector<304x64xf32>
    tpu.vector_store %arg11[%c0_39, %c0_40], %41 {strides = array<i32>} : memref<304x64xf32, #tpu.memory_space<vmem>>, vector<304x64xf32>,
    return
  }
  func.func @transform_0(%arg0: i32) -> (i32, i32) {
    %c0_i32 = arith.constant 0 : i32
    %c0_i32_0 = arith.constant 0 : i32
    return %arg0, %c0_i32 : i32, i32
  }
  func.func @transform_1(%arg0: i32) -> (i32, i32) {
    %c0_i32 = arith.constant 0 : i32
    %c0_i32_0 = arith.constant 0 : i32
    return %arg0, %c0_i32 : i32, i32
  }
  func.func @transform_2(%arg0: i32) -> (i32, i32) {
    %c0_i32 = arith.constant 0 : i32
    %c0_i32_0 = arith.constant 0 : i32
    %c0_i32_1 = arith.constant 0 : i32
    return %c0_i32, %c0_i32_0 : i32, i32
  }
  func.func @transform_3(%arg0: i32) -> (i32, i32) {
    %c0_i32 = arith.constant 0 : i32
    %c0_i32_0 = arith.constant 0 : i32
    %c0_i32_1 = arith.constant 0 : i32
    return %c0_i32, %c0_i32_0 : i32, i32
  }
  func.func @transform_4(%arg0: i32) -> (i32, i32) {
    %c0_i32 = arith.constant 0 : i32
    %c0_i32_0 = arith.constant 0 : i32
    %c0_i32_1 = arith.constant 0 : i32
    return %c0_i32, %c0_i32_0 : i32, i32
  }
  func.func @transform_5(%arg0: i32) -> (i32, i32) {
    %c0_i32 = arith.constant 0 : i32
    %c0_i32_0 = arith.constant 0 : i32
    %c0_i32_1 = arith.constant 0 : i32
    return %c0_i32, %c0_i32_0 : i32, i32
  }
  func.func @transform_6(%arg0: i32) -> (i32, i32) {
    %c0_i32 = arith.constant 0 : i32
    %c0_i32_0 = arith.constant 0 : i32
    %c0_i32_1 = arith.constant 0 : i32
    return %c0_i32, %c0_i32_0 : i32, i32
  }
  func.func @transform_7(%arg0: i32) -> (i32, i32) {
    %c0_i32 = arith.constant 0 : i32
    %c0_i32_0 = arith.constant 0 : i32
    %c0_i32_1 = arith.constant 0 : i32
    return %c0_i32, %c0_i32_0 : i32, i32
  }
  func.func @transform_8(%arg0: i32) -> (i32, i32) {
    %c0_i32 = arith.constant 0 : i32
    %c0_i32_0 = arith.constant 0 : i32
    %c0_i32_1 = arith.constant 0 : i32
    return %c0_i32, %c0_i32_0 : i32, i32
  }
  func.func @transform_9(%arg0: i32) -> (i32, i32) {
    %c0_i32 = arith.constant 0 : i32
    %c0_i32_0 = arith.constant 0 : i32
    %c0_i32_1 = arith.constant 0 : i32
    return %c0_i32, %c0_i32_0 : i32, i32
  }
  func.func @transform_10(%arg0: i32) -> (i32, i32) {
    %c0_i32 = arith.constant 0 : i32
    %c0_i32_0 = arith.constant 0 : i32
    return %arg0, %c0_i32 : i32, i32
  }
}

</mosaic_0001>

<llo_original>
// kernel: tpu_custom_call.1
$region0: #{tpu_custom_call.1}
  #allocation0 [shape = 'u32[]', space=smem, size = 0x4, offset = 0x4, fixed_abs, tag = 'smem constant byte address 0x4 - core index']
  #allocation1 [shape = 'u32[144,128]{1,0:T(1,128)}', space=vmem, size = 0x12000, scoped, tag = 'internal scratch']
  #allocation2 [shape = 'bf16[304,96]{1,0:T(16,128)(2,1)}', space=vmem, size = 0x13000, scoped, tag = 'scratch operand']
  %s0 = inlined_call_operand.vmem [shape: f32[600,32], index: 0, kind: input, shape index: {}]
  %s1 = inlined_call_operand.vmem [shape: f32[600,32], index: 1, kind: input, shape index: {}]
  %s2 = inlined_call_operand.vmem [shape: bf16[32,64], index: 2, kind: input, shape index: {}]
  %s3 = inlined_call_operand.vmem [shape: f32[1,64], index: 3, kind: input, shape index: {}]
  %s4 = inlined_call_operand.vmem [shape: bf16[64,64], index: 4, kind: input, shape index: {}]
  %s5 = inlined_call_operand.vmem [shape: f32[1,64], index: 5, kind: input, shape index: {}]
  %s6 = inlined_call_operand.vmem [shape: bf16[96,64], index: 6, kind: input, shape index: {}]
  %s7 = inlined_call_operand.vmem [shape: f32[1,64], index: 7, kind: input, shape index: {}]
  %s8 = inlined_call_operand.vmem [shape: bf16[64,64], index: 8, kind: input, shape index: {}]
  %s9 = inlined_call_operand.vmem [shape: f32[1,64], index: 9, kind: input, shape index: {}]
  %s10 = inlined_call_operand.vmem [shape: f32[600,64], index: 10, kind: output, shape index: {}]
  %s11 = sld [smem:[#allocation0]]
  $region121: #{tpu_custom_call.1} parent=0
    _
  %s13 = ssub.s32 1, %s11
  %s14 = scalar_select 0, %s13, %s11
  $region1: #{tpu_custom_call.1} parent=0
    #allocation3 [shape = 'u8[311296]{0}', space=vmem, size = 0x4c000, scoped, tag = 'output window, operand 0']
    loop: start=0, step=1, limit=4
    $region2: #{tpu_custom_call.1} parent=1 // loop_pre_header
      _
    $region3: #{tpu_custom_call.1} parent=1 // loop_header
      %s16 = sphi 0, %s20
      %p17 = scmp.ge.s32.totalorder %s16, 4
      %s26 = sphi 0, %s28
      %s29 = sphi 0, %s26
      %s30 = sphi 0, %s29
      %s46 = sphi 0, %s30
      %s52 = sphi 0, %s54
      %s55 = sphi 0, %s52
      %s56 = sphi 0, %s55
      %s72 = sphi 0, %s56
      %s76 = sphi 0, %s76
      %s78 = sphi 0, %s76
      %s79 = sphi 0, %s78
      %s93 = sphi 0, %s79
      %s97 = sphi 0, %s97
      %s99 = sphi 0, %s97
      %s100 = sphi 0, %s99
      %s114 = sphi 0, %s100
      %s118 = sphi 0, %s118
      %s120 = sphi 0, %s118
      %s121 = sphi 0, %s120
      %s135 = sphi 0, %s121
      %s139 = sphi 0, %s139
      %s141 = sphi 0, %s139
      %s142 = sphi 0, %s141
      %s156 = sphi 0, %s142
      %s160 = sphi 0, %s160
      %s162 = sphi 0, %s160
      %s163 = sphi 0, %s162
      %s177 = sphi 0, %s163
      %s181 = sphi 0, %s181
      %s183 = sphi 0, %s181
      %s184 = sphi 0, %s183
      %s198 = sphi 0, %s184
      %s202 = sphi 0, %s202
      %s204 = sphi 0, %s202
      %s205 = sphi 0, %s204
      %s219 = sphi 0, %s205
      %s223 = sphi 0, %s223
      %s225 = sphi 0, %s223
      %s226 = sphi 0, %s225
      %s240 = sphi 0, %s226
      %s246 = sphi 0, %s248
      %s249 = sphi 0, %s246
      %s250 = sphi 0, %s249
      %s266 = sphi 0, %s250
    $region4: #{tpu_custom_call.1} parent=1 // loop_header_branch
      %19 = sbr.rel (%p17) target = $region8
    $region5: #{tpu_custom_call.1} parent=1 // loop_body
      %s21 = ssub.s32 %s16, 1
      %s22 = ssub.s32 %s16, 2
      %s23 = sadd.s32 %s16, 1
      %s24 = ssub.s32 %s16, %s23
      %p25 = scmp.eq.s32.totalorder %s24, 0
      %s27 = sadd.s32 %s26, 1
      %s28 = scalar_select %p25, %s26, %s27
      %p31 = pneg %p25
      %p32 = scmp.eq.s32.totalorder %s16, 1
      %p33 = por %p31, %p32
      %p34 = scmp.ne.s32.totalorder %s26, %s29
      %p35 = scmp.eq.s32.totalorder %s16, 0
      %p36 = por %p34, %p35
      %p37 = scmp.ne.s32.totalorder %s26, %s29
      %p38 = scmp.eq.s32.totalorder %s21, 1
      %p39 = por %p37, %p38
      %p40 = scmp.ne.s32.totalorder %s29, %s30
      %p41 = scmp.eq.s32.totalorder %s21, 0
      %p42 = por %p40, %p41
      %p43 = scmp.ne.s32.totalorder %s29, %s30
      %p44 = scmp.eq.s32.totalorder %s22, 1
      %p45 = por %p43, %p44
      %p47 = scmp.ne.s32.totalorder %s30, %s46
      %p48 = scmp.eq.s32.totalorder %s22, 0
      %p49 = por %p47, %p48
      %s50 = ssub.s32 %s16, %s23
      %p51 = scmp.eq.s32.totalorder %s50, 0
      %s53 = sadd.s32 %s52, 1
      %s54 = scalar_select %p51, %s52, %s53
      %p57 = pneg %p51
      %p58 = scmp.eq.s32.totalorder %s16, 1
      %p59 = por %p57, %p58
      %p60 = scmp.ne.s32.totalorder %s52, %s55
      %p61 = scmp.eq.s32.totalorder %s16, 0
      %p62 = por %p60, %p61
      %p63 = scmp.ne.s32.totalorder %s52, %s55
      %p64 = scmp.eq.s32.totalorder %s21, 1
      %p65 = por %p63, %p64
      %p66 = scmp.ne.s32.totalorder %s55, %s56
      %p67 = scmp.eq.s32.totalorder %s21, 0
      %p68 = por %p66, %p67
      %p69 = scmp.ne.s32.totalorder %s55, %s56
      %p70 = scmp.eq.s32.totalorder %s22, 1
      %p71 = por %p69, %p70
      %p73 = scmp.ne.s32.totalorder %s56, %s72
      %p74 = scmp.eq.s32.totalorder %s22, 0
      %p75 = por %p73, %p74
      %s77 = sadd.s32 %s76, 1
      %p80 = scmp.eq.s32.totalorder %s16, 1
      %p81 = scmp.ne.s32.totalorder %s76, %s78
      %p82 = scmp.eq.s32.totalorder %s16, 0
      %p83 = por %p81, %p82
      %p84 = scmp.ne.s32.totalorder %s76, %s78
      %p85 = scmp.eq.s32.totalorder %s21, 1
      %p86 = por %p84, %p85
      %p87 = scmp.ne.s32.totalorder %s78, %s79
      %p88 = scmp.eq.s32.totalorder %s21, 0
      %p89 = por %p87, %p88
      %p90 = scmp.ne.s32.totalorder %s78, %s79
      %p91 = scmp.eq.s32.totalorder %s22, 1
      %p92 = por %p90, %p91
      %p94 = scmp.ne.s32.totalorder %s79, %s93
      %p95 = scmp.eq.s32.totalorder %s22, 0
      %p96 = por %p94, %p95
      %s98 = sadd.s32 %s97, 1
      %p101 = scmp.eq.s32.totalorder %s16, 1
      %p102 = scmp.ne.s32.totalorder %s97, %s99
      %p103 = scmp.eq.s32.totalorder %s16, 0
      %p104 = por %p102, %p103
      %p105 = scmp.ne.s32.totalorder %s97, %s99
      %p106 = scmp.eq.s32.totalorder %s21, 1
      %p107 = por %p105, %p106
      %p108 = scmp.ne.s32.totalorder %s99, %s100
      %p109 = scmp.eq.s32.totalorder %s21, 0
      %p110 = por %p108, %p109
      %p111 = scmp.ne.s32.totalorder %s99, %s100
      %p112 = scmp.eq.s32.totalorder %s22, 1
      %p113 = por %p111, %p112
      %p115 = scmp.ne.s32.totalorder %s100, %s114
      %p116 = scmp.eq.s32.totalorder %s22, 0
      %p117 = por %p115, %p116
      %s119 = sadd.s32 %s118, 1
      %p122 = scmp.eq.s32.totalorder %s16, 1
      %p123 = scmp.ne.s32.totalorder %s118, %s120
      %p124 = scmp.eq.s32.totalorder %s16, 0
      %p125 = por %p123, %p124
      %p126 = scmp.ne.s32.totalorder %s118, %s120
      %p127 = scmp.eq.s32.totalorder %s21, 1
      %p128 = por %p126, %p127
      %p129 = scmp.ne.s32.totalorder %s120, %s121
      %p130 = scmp.eq.s32.totalorder %s21, 0
      %p131 = por %p129, %p130
      %p132 = scmp.ne.s32.totalorder %s120, %s121
      %p133 = scmp.eq.s32.totalorder %s22, 1
      %p134 = por %p132, %p133
      %p136 = scmp.ne.s32.totalorder %s121, %s135
      %p137 = scmp.eq.s32.totalorder %s22, 0
      %p138 = por %p136, %p137
      %s140 = sadd.s32 %s139, 1
      %p143 = scmp.eq.s32.totalorder %s16, 1
      %p144 = scmp.ne.s32.totalorder %s139, %s141
      %p145 = scmp.eq.s32.totalorder %s16, 0
      %p146 = por %p144, %p145
      %p147 = scmp.ne.s32.totalorder %s139, %s141
      %p148 = scmp.eq.s32.totalorder %s21, 1
      %p149 = por %p147, %p148
      %p150 = scmp.ne.s32.totalorder %s141, %s142
      %p151 = scmp.eq.s32.totalorder %s21, 0
      %p152 = por %p150, %p151
      %p153 = scmp.ne.s32.totalorder %s141, %s142
      %p154 = scmp.eq.s32.totalorder %s22, 1
      %p155 = por %p153, %p154
      %p157 = scmp.ne.s32.totalorder %s142, %s156
      %p158 = scmp.eq.s32.totalorder %s22, 0
      %p159 = por %p157, %p158
      %s161 = sadd.s32 %s160, 1
      %p164 = scmp.eq.s32.totalorder %s16, 1
      %p165 = scmp.ne.s32.totalorder %s160, %s162
      %p166 = scmp.eq.s32.totalorder %s16, 0
      %p167 = por %p165, %p166
      %p168 = scmp.ne.s32.totalorder %s160, %s162
      %p169 = scmp.eq.s32.totalorder %s21, 1
      %p170 = por %p168, %p169
      %p171 = scmp.ne.s32.totalorder %s162, %s163
      %p172 = scmp.eq.s32.totalorder %s21, 0
      %p173 = por %p171, %p172
      %p174 = scmp.ne.s32.totalorder %s162, %s163
      %p175 = scmp.eq.s32.totalorder %s22, 1
      %p176 = por %p174, %p175
      %p178 = scmp.ne.s32.totalorder %s163, %s177
      %p179 = scmp.eq.s32.totalorder %s22, 0
      %p180 = por %p178, %p179
      %s182 = sadd.s32 %s181, 1
      %p185 = scmp.eq.s32.totalorder %s16, 1
      %p186 = scmp.ne.s32.totalorder %s181, %s183
      %p187 = scmp.eq.s32.totalorder %s16, 0
      %p188 = por %p186, %p187
      %p189 = scmp.ne.s32.totalorder %s181, %s183
      %p190 = scmp.eq.s32.totalorder %s21, 1
      %p191 = por %p189, %p190
      %p192 = scmp.ne.s32.totalorder %s183, %s184
      %p193 = scmp.eq.s32.totalorder %s21, 0
      %p194 = por %p192, %p193
      %p195 = scmp.ne.s32.totalorder %s183, %s184
      %p196 = scmp.eq.s32.totalorder %s22, 1
      %p197 = por %p195, %p196
      %p199 = scmp.ne.s32.totalorder %s184, %s198
      %p200 = scmp.eq.s32.totalorder %s22, 0
      %p201 = por %p199, %p200
      %s203 = sadd.s32 %s202, 1
      %p206 = scmp.eq.s32.totalorder %s16, 1
      %p207 = scmp.ne.s32.totalorder %s202, %s204
      %p208 = scmp.eq.s32.totalorder %s16, 0
      %p209 = por %p207, %p208
      %p210 = scmp.ne.s32.totalorder %s202, %s204
      %p211 = scmp.eq.s32.totalorder %s21, 1
      %p212 = por %p210, %p211
      %p213 = scmp.ne.s32.totalorder %s204, %s205
      %p214 = scmp.eq.s32.totalorder %s21, 0
      %p215 = por %p213, %p214
      %p216 = scmp.ne.s32.totalorder %s204, %s205
      %p217 = scmp.eq.s32.totalorder %s22, 1
      %p218 = por %p216, %p217
      %p220 = scmp.ne.s32.totalorder %s205, %s219
      %p221 = scmp.eq.s32.totalorder %s22, 0
      %p222 = por %p220, %p221
      %s224 = sadd.s32 %s223, 1
      %p227 = scmp.eq.s32.totalorder %s16, 1
      %p228 = scmp.ne.s32.totalorder %s223, %s225
      %p229 = scmp.eq.s32.totalorder %s16, 0
      %p230 = por %p228, %p229
      %p231 = scmp.ne.s32.totalorder %s223, %s225
      %p232 = scmp.eq.s32.totalorder %s21, 1
      %p233 = por %p231, %p232
      %p234 = scmp.ne.s32.totalorder %s225, %s226
      %p235 = scmp.eq.s32.totalorder %s21, 0
      %p236 = por %p234, %p235
      %p237 = scmp.ne.s32.totalorder %s225, %s226
      %p238 = scmp.eq.s32.totalorder %s22, 1
      %p239 = por %p237, %p238
      %p241 = scmp.ne.s32.totalorder %s226, %s240
      %p242 = scmp.eq.s32.totalorder %s22, 0
      %p243 = por %p241, %p242
      %s244 = ssub.s32 %s16, %s23
      %p245 = scmp.eq.s32.totalorder %s244, 0
      %s247 = sadd.s32 %s246, 1
      %s248 = scalar_select %p245, %s246, %s247
      %p251 = pneg %p245
      %p252 = scmp.eq.s32.totalorder %s16, 1
      %p253 = por %p251, %p252
      %p254 = scmp.ne.s32.totalorder %s246, %s249
      %p255 = scmp.eq.s32.totalorder %s16, 0
      %p256 = por %p254, %p255
      %p257 = scmp.ne.s32.totalorder %s246, %s249
      %p258 = scmp.eq.s32.totalorder %s21, 1
      %p259 = por %p257, %p258
      %p260 = scmp.ne.s32.totalorder %s249, %s250
      %p261 = scmp.eq.s32.totalorder %s21, 0
      %p262 = por %p260, %p261
      %p263 = scmp.ne.s32.totalorder %s249, %s250
      %p264 = scmp.eq.s32.totalorder %s22, 1
      %p265 = por %p263, %p264
      %p267 = scmp.ne.s32.totalorder %s250, %s266
      %p268 = scmp.eq.s32.totalorder %s22, 0
      %p269 = por %p267, %p268
      %p270 = scmp.le.s32.totalorder 1, %s16
      %p271 = scmp.lt.s32.totalorder %s16, 3
      %p272 = pnand %p270, %p271
      %p273 = pneg %p272
      // Predicated region
      $region9: #{tpu_custom_call.1} parent=5 // pred_check
        _
      $region10: #{tpu_custom_call.1} parent=5 // pred_check_branch
        %275 = sbr.rel (%p272) target = $region12
      $region11: #{tpu_custom_call.1} parent=5 // pred_region
        %s276 = ssub.s32 %s16, 1
        // Predicated region
        $region13: #{tpu_custom_call.1} parent=11 // pred_check
          %p277 = pneg %p89
        $region14: #{tpu_custom_call.1} parent=11 // pred_check_branch
          %279 = sbr.rel (%p277) target = $region16
        $region15: #{tpu_custom_call.1} parent=11 // pred_region
          _
        $region16: #{tpu_custom_call.1} parent=11 // pred_fallthru
          _
        // Predicated region
        $region17: #{tpu_custom_call.1} parent=11 // pred_check
          %p280 = pneg %p110
        $region18: #{tpu_custom_call.1} parent=11 // pred_check_branch
          %282 = sbr.rel (%p280) target = $region20
        $region19: #{tpu_custom_call.1} parent=11 // pred_region
          _
        $region20: #{tpu_custom_call.1} parent=11 // pred_fallthru
          _
        // Predicated region
        $region21: #{tpu_custom_call.1} parent=11 // pred_check
          %p283 = pneg %p131
        $region22: #{tpu_custom_call.1} parent=11 // pred_check_branch
          %285 = sbr.rel (%p283) target = $region24
        $region23: #{tpu_custom_call.1} parent=11 // pred_region
          _
        $region24: #{tpu_custom_call.1} parent=11 // pred_fallthru
          _
        // Predicated region
        $region25: #{tpu_custom_call.1} parent=11 // pred_check
          %p286 = pneg %p152
        $region26: #{tpu_custom_call.1} parent=11 // pred_check_branch
          %288 = sbr.rel (%p286) target = $region28
        $region27: #{tpu_custom_call.1} parent=11 // pred_region
          _
        $region28: #{tpu_custom_call.1} parent=11 // pred_fallthru
          _
        // Predicated region
        $region29: #{tpu_custom_call.1} parent=11 // pred_check
          %p289 = pneg %p173
        $region30: #{tpu_custom_call.1} parent=11 // pred_check_branch
          %291 = sbr.rel (%p289) target = $region32
        $region31: #{tpu_custom_call.1} parent=11 // pred_region
          _
        $region32: #{tpu_custom_call.1} parent=11 // pred_fallthru
          _
        // Predicated region
        $region33: #{tpu_custom_call.1} parent=11 // pred_check
          %p292 = pneg %p194
        $region34: #{tpu_custom_call.1} parent=11 // pred_check_branch
          %294 = sbr.rel (%p292) target = $region36
        $region35: #{tpu_custom_call.1} parent=11 // pred_region
          _
        $region36: #{tpu_custom_call.1} parent=11 // pred_fallthru
          _
        // Predicated region
        $region37: #{tpu_custom_call.1} parent=11 // pred_check
          %p295 = pneg %p215
        $region38: #{tpu_custom_call.1} parent=11 // pred_check_branch
          %297 = sbr.rel (%p295) target = $region40
        $region39: #{tpu_custom_call.1} parent=11 // pred_region
          _
        $region40: #{tpu_custom_call.1} parent=11 // pred_fallthru
          _
        // Predicated region
        $region41: #{tpu_custom_call.1} parent=11 // pred_check
          %p298 = pneg %p236
        $region42: #{tpu_custom_call.1} parent=11 // pred_check_branch
          %300 = sbr.rel (%p298) target = $region44
        $region43: #{tpu_custom_call.1} parent=11 // pred_region
          _
        $region44: #{tpu_custom_call.1} parent=11 // pred_fallthru
          _
      $region12: #{tpu_custom_call.1} parent=5 // pred_fallthru
        _
      %p301 = scmp.lt.s32.totalorder %s16, 2
      // Predicated region
      $region45: #{tpu_custom_call.1} parent=5 // pred_check
        %p302 = pneg %p301
      $region46: #{tpu_custom_call.1} parent=5 // pred_check_branch
        %304 = sbr.rel (%p302) target = $region48
      $region47: #{tpu_custom_call.1} parent=5 // pred_region
        // Predicated region
        $region49: #{tpu_custom_call.1} parent=47 // pred_check
          %p305 = pneg %p36
        $region50: #{tpu_custom_call.1} parent=47 // pred_check_branch
          %307 = sbr.rel (%p305) target = $region52
        $region51: #{tpu_custom_call.1} parent=47 // pred_region
          %s308 = smul.u32 38, %s16
          %s309 = ssub.s32 75, %s308
          %p310 = scmp.lt.s32.totalorder %s309, 38
          %s311 = scalar_select %p310, %s309, 38
          %s312 = smul.u32 128, %s311
          %p313 = scmp.lt.s32.totalorder %s308, 74
          %s314 = scalar_select %p313, %s308, 74
          %s315 = smul.addr %s314, 8
          %s316 = scalar_lea.vmem %s0, %s315
          %s317 = smul.u32 38, %s16
          %s318 = ssub.s32 75, %s317
          %p319 = scmp.lt.s32.totalorder %s318, 38
          %s320 = scalar_select %p319, %s318, 38
          %s321 = smul.u32 128, %s320
        $region52: #{tpu_custom_call.1} parent=47 // pred_fallthru
          _
        // Predicated region
        $region53: #{tpu_custom_call.1} parent=47 // pred_check
          %p322 = pneg %p62
        $region54: #{tpu_custom_call.1} parent=47 // pred_check_branch
          %324 = sbr.rel (%p322) target = $region56
        $region55: #{tpu_custom_call.1} parent=47 // pred_region
          %s325 = smul.u32 38, %s16
          %s326 = ssub.s32 75, %s325
          %p327 = scmp.lt.s32.totalorder %s326, 38
          %s328 = scalar_select %p327, %s326, 38
          %s329 = smul.u32 128, %s328
          %p330 = scmp.lt.s32.totalorder %s325, 74
          %s331 = scalar_select %p330, %s325, 74
          %s332 = smul.addr %s331, 8
          %s333 = scalar_lea.vmem %s1, %s332
          %s334 = smul.u32 38, %s16
          %s335 = ssub.s32 75, %s334
          %p336 = scmp.lt.s32.totalorder %s335, 38
          %s337 = scalar_select %p336, %s335, 38
          %s338 = smul.u32 128, %s337
        $region56: #{tpu_custom_call.1} parent=47 // pred_fallthru
          _
      $region48: #{tpu_custom_call.1} parent=5 // pred_fallthru
        _
      %p339 = scmp.le.s32.totalorder 1, %s16
      %p340 = scmp.lt.s32.totalorder %s16, 3
      %p341 = pnand %p339, %p340
      %p342 = pneg %p341
      // Predicated region
      $region57: #{tpu_custom_call.1} parent=5 // pred_check
        _
      $region58: #{tpu_custom_call.1} parent=5 // pred_check_branch
        %344 = sbr.rel (%p341) target = $region60
      $region59: #{tpu_custom_call.1} parent=5 // pred_region
        %s345 = ssub.s32 %s16, 1
        %s346 = smul.u32 38, %s21
        %s347 = ssub.s32 75, %s346
        %p348 = scmp.lt.s32.totalorder %s347, 38
        %s349 = scalar_select %p348, %s347, 38
        %s350 = smul.u32 128, %s349
        %p351 = scmp.lt.s32.totalorder %s346, 74
        %s352 = scalar_select %p351, %s346, 74
        %s353 = smul.addr %s352, 8
        %s354 = scalar_lea.vmem %s0, %s353
        %p355 = pneg %p42
        %p356 = pneg %p39
        %s357 = smul.u32 38, %s21
        %s358 = ssub.s32 75, %s357
        %p359 = scmp.lt.s32.totalorder %s358, 38
        %s360 = scalar_select %p359, %s358, 38
        %s361 = smul.u32 128, %s360
        %p362 = scmp.lt.s32.totalorder %s357, 74
        %s363 = scalar_select %p362, %s357, 74
        %s364 = smul.addr %s363, 8
        %s365 = scalar_lea.vmem %s1, %s364
        %p366 = pneg %p68
        %p367 = pneg %p65
        %p368 = pneg %p89
        %p369 = pneg %p86
        %p370 = pneg %p110
        %p371 = pneg %p107
        %p372 = pneg %p131
        %p373 = pneg %p128
        %p374 = pneg %p152
        %p375 = pneg %p149
        %p376 = pneg %p173
        %p377 = pneg %p170
        %p378 = pneg %p194
        %p379 = pneg %p191
        %p380 = pneg %p215
        %p381 = pneg %p212
        %p382 = pneg %p236
        %p383 = pneg %p233
        %p384 = pneg %p262
        %p385 = pneg %p259
        %s386 = sand.u32 %s249, 1
        %s387 = sand.u32 %s249, 1
        %s388 = smul.addr %s387, 304
        %s389 = scalar_lea.vmem [#allocation3], %s388
        %s390 = smul.u32 38, %s21
        %s391 = ssub.s32 75, %s390
        %p392 = scmp.lt.s32.totalorder %s391, 38
        %s393 = scalar_select %p392, %s391, 38
        %s394 = smul.u32 128, %s393
        %p395 = scmp.lt.s32.totalorder %s390, 74
        %s396 = scalar_select %p395, %s390, 74
        %s397 = smul.addr %s396, 8
        %s398 = scalar_lea.vmem %s0, %s397
        %s399 = smul.u32 38, %s21
        %s400 = ssub.s32 75, %s399
        %p401 = scmp.lt.s32.totalorder %s400, 38
        %s402 = scalar_select %p401, %s400, 38
        %s403 = smul.u32 128, %s402
        %s404 = smul.u32 38, %s21
        %s405 = ssub.s32 75, %s404
        %p406 = scmp.lt.s32.totalorder %s405, 38
        %s407 = scalar_select %p406, %s405, 38
        %s408 = smul.u32 128, %s407
        %p409 = scmp.lt.s32.totalorder %s404, 74
        %s410 = scalar_select %p409, %s404, 74
        %s411 = smul.addr %s410, 8
        %s412 = scalar_lea.vmem %s1, %s411
        %s413 = smul.u32 38, %s21
        %s414 = ssub.s32 75, %s413
        %p415 = scmp.lt.s32.totalorder %s414, 38
        %s416 = scalar_select %p415, %s414, 38
        %s417 = smul.u32 128, %s416
        %s418 = smul.u32 38, %s21
        %s419 = ssub.s32 75, %s418
        %p420 = scmp.lt.s32.totalorder %s419, 38
        %s421 = scalar_select %p420, %s419, 38
        %s422 = smul.u32 128, %s421
        %v424 = vld [vmem:[%s412] sm:$0xff]
        %v425 = vld [vmem:[%s412 + $0x8] sm:$0xff]
        %v426 = vld [vmem:[%s412 + $0x10] sm:$0xff]
        %v427 = vld [vmem:[%s412 + $0x18] sm:$0xff]
        %v428 = vld [vmem:[%s412 + $0x20] sm:$0xff]
        %v429 = vld [vmem:[%s412 + $0x28] sm:$0xff]
        %v430 = vld [vmem:[%s412 + $0x30] sm:$0xff]
        %v431 = vld [vmem:[%s412 + $0x38] sm:$0xff]
        %v432 = vld [vmem:[%s412 + $0x40] sm:$0xff]
        %v433 = vld [vmem:[%s412 + $0x48] sm:$0xff]
        %v434 = vld [vmem:[%s412 + $0x50] sm:$0xff]
        %v435 = vld [vmem:[%s412 + $0x58] sm:$0xff]
        %v436 = vld [vmem:[%s412 + $0x60] sm:$0xff]
        %v437 = vld [vmem:[%s412 + $0x68] sm:$0xff]
        %v438 = vld [vmem:[%s412 + $0x70] sm:$0xff]
        %v439 = vld [vmem:[%s412 + $0x78] sm:$0xff]
        %v440 = vld [vmem:[%s412 + $0x80] sm:$0xff]
        %v441 = vld [vmem:[%s412 + $0x88] sm:$0xff]
        %v442 = vld [vmem:[%s412 + $0x90] sm:$0xff]
        %v443 = vld [vmem:[%s412 + $0x98] sm:$0xff]
        %v444 = vld [vmem:[%s412 + $0xa0] sm:$0xff]
        %v445 = vld [vmem:[%s412 + $0xa8] sm:$0xff]
        %v446 = vld [vmem:[%s412 + $0xb0] sm:$0xff]
        %v447 = vld [vmem:[%s412 + $0xb8] sm:$0xff]
        %v448 = vld [vmem:[%s412 + $0xc0] sm:$0xff]
        %v449 = vld [vmem:[%s412 + $0xc8] sm:$0xff]
        %v450 = vld [vmem:[%s412 + $0xd0] sm:$0xff]
        %v451 = vld [vmem:[%s412 + $0xd8] sm:$0xff]
        %v452 = vld [vmem:[%s412 + $0xe0] sm:$0xff]
        %v453 = vld [vmem:[%s412 + $0xe8] sm:$0xff]
        %v454 = vld [vmem:[%s412 + $0xf0] sm:$0xff]
        %v455 = vld [vmem:[%s412 + $0xf8] sm:$0xff]
        %v456 = vld [vmem:[%s412 + $0x100] sm:$0xff]
        %v457 = vld [vmem:[%s412 + $0x108] sm:$0xff]
        %v458 = vld [vmem:[%s412 + $0x110] sm:$0xff]
        %v459 = vld [vmem:[%s412 + $0x118] sm:$0xff]
        %v460 = vld [vmem:[%s412 + $0x120] sm:$0xff]
        %v461 = vld [vmem:[%s412 + $0x128] sm:$0xff]
        %v462 = vpack.c.bf16 %v425, %v424
        %v463 = vpack.c.bf16 %v427, %v426
        %v464 = vpack.c.bf16 %v429, %v428
        %v465 = vpack.c.bf16 %v431, %v430
        %v466 = vpack.c.bf16 %v433, %v432
        %v467 = vpack.c.bf16 %v435, %v434
        %v468 = vpack.c.bf16 %v437, %v436
        %v469 = vpack.c.bf16 %v439, %v438
        %v470 = vpack.c.bf16 %v441, %v440
        %v471 = vpack.c.bf16 %v443, %v442
        %v472 = vpack.c.bf16 %v445, %v444
        %v473 = vpack.c.bf16 %v447, %v446
        %v474 = vpack.c.bf16 %v449, %v448
        %v475 = vpack.c.bf16 %v451, %v450
        %v476 = vpack.c.bf16 %v453, %v452
        %v477 = vpack.c.bf16 %v455, %v454
        %v478 = vpack.c.bf16 %v457, %v456
        %v479 = vpack.c.bf16 %v459, %v458
        %v480 = vpack.c.bf16 %v461, %v460
        %500 = vrot.lane.b32.xlu0 %v462, 64
        %v501 = vpop.permute.xlu0 %500
        %502 = vrot.lane.b32.xlu0 %v463, 64
        %v503 = vpop.permute.xlu0 %502
        %504 = vrot.lane.b32.xlu0 %v464, 64
        %v505 = vpop.permute.xlu0 %504
        %506 = vrot.lane.b32.xlu0 %v465, 64
        %v507 = vpop.permute.xlu0 %506
        %508 = vrot.lane.b32.xlu0 %v466, 64
        %v509 = vpop.permute.xlu0 %508
        %510 = vrot.lane.b32.xlu0 %v467, 64
        %v511 = vpop.permute.xlu0 %510
        %512 = vrot.lane.b32.xlu0 %v468, 64
        %v513 = vpop.permute.xlu0 %512
        %514 = vrot.lane.b32.xlu0 %v469, 64
        %v515 = vpop.permute.xlu0 %514
        %516 = vrot.lane.b32.xlu0 %v470, 64
        %v517 = vpop.permute.xlu0 %516
        %518 = vrot.lane.b32.xlu0 %v471, 64
        %v519 = vpop.permute.xlu0 %518
        %520 = vrot.lane.b32.xlu0 %v472, 64
        %v521 = vpop.permute.xlu0 %520
        %522 = vrot.lane.b32.xlu0 %v473, 64
        %v523 = vpop.permute.xlu0 %522
        %524 = vrot.lane.b32.xlu0 %v474, 64
        %v525 = vpop.permute.xlu0 %524
        %526 = vrot.lane.b32.xlu0 %v475, 64
        %v527 = vpop.permute.xlu0 %526
        %528 = vrot.lane.b32.xlu0 %v476, 64
        %v529 = vpop.permute.xlu0 %528
        %530 = vrot.lane.b32.xlu0 %v477, 64
        %v531 = vpop.permute.xlu0 %530
        %532 = vrot.lane.b32.xlu0 %v478, 64
        %v533 = vpop.permute.xlu0 %532
        %534 = vrot.lane.b32.xlu0 %v479, 64
        %v535 = vpop.permute.xlu0 %534
        %536 = vrot.lane.b32.xlu0 %v480, 64
        %v537 = vpop.permute.xlu0 %536
        %vm557 = vcmask 785920
        %558 = vst.msk [vmem:[#allocation2] sm:$0xff] %vm557, %v501
        %559 = vst.msk [vmem:[#allocation2 + $0x8] sm:$0xff] %vm557, %v503
        %560 = vst.msk [vmem:[#allocation2 + $0x10] sm:$0xff] %vm557, %v505
        %561 = vst.msk [vmem:[#allocation2 + $0x18] sm:$0xff] %vm557, %v507
        %562 = vst.msk [vmem:[#allocation2 + $0x20] sm:$0xff] %vm557, %v509
        %563 = vst.msk [vmem:[#allocation2 + $0x28] sm:$0xff] %vm557, %v511
        %564 = vst.msk [vmem:[#allocation2 + $0x30] sm:$0xff] %vm557, %v513
        %565 = vst.msk [vmem:[#allocation2 + $0x38] sm:$0xff] %vm557, %v515
        %566 = vst.msk [vmem:[#allocation2 + $0x40] sm:$0xff] %vm557, %v517
        %567 = vst.msk [vmem:[#allocation2 + $0x48] sm:$0xff] %vm557, %v519
        %568 = vst.msk [vmem:[#allocation2 + $0x50] sm:$0xff] %vm557, %v521
        %569 = vst.msk [vmem:[#allocation2 + $0x58] sm:$0xff] %vm557, %v523
        %570 = vst.msk [vmem:[#allocation2 + $0x60] sm:$0xff] %vm557, %v525
        %571 = vst.msk [vmem:[#allocation2 + $0x68] sm:$0xff] %vm557, %v527
        %572 = vst.msk [vmem:[#allocation2 + $0x70] sm:$0xff] %vm557, %v529
        %573 = vst.msk [vmem:[#allocation2 + $0x78] sm:$0xff] %vm557, %v531
        %574 = vst.msk [vmem:[#allocation2 + $0x80] sm:$0xff] %vm557, %v533
        %575 = vst.msk [vmem:[#allocation2 + $0x88] sm:$0xff] %vm557, %v535
        %576 = vst.msk [vmem:[#allocation2 + $0x90] sm:$0xff] %vm557, %v537
        %v577 = vld [vmem:[%s398] sm:$0xff]
        %v578 = vld [vmem:[%s398 + $0x8] sm:$0xff]
        %v579 = vld [vmem:[%s398 + $0x10] sm:$0xff]
        %v580 = vld [vmem:[%s398 + $0x18] sm:$0xff]
        %v581 = vld [vmem:[%s398 + $0x20] sm:$0xff]
        %v582 = vld [vmem:[%s398 + $0x28] sm:$0xff]
        %v583 = vld [vmem:[%s398 + $0x30] sm:$0xff]
        %v584 = vld [vmem:[%s398 + $0x38] sm:$0xff]
        %v585 = vld [vmem:[%s398 + $0x40] sm:$0xff]
        %v586 = vld [vmem:[%s398 + $0x48] sm:$0xff]
        %v587 = vld [vmem:[%s398 + $0x50] sm:$0xff]
        %v588 = vld [vmem:[%s398 + $0x58] sm:$0xff]
        %v589 = vld [vmem:[%s398 + $0x60] sm:$0xff]
        %v590 = vld [vmem:[%s398 + $0x68] sm:$0xff]
        %v591 = vld [vmem:[%s398 + $0x70] sm:$0xff]
        %v592 = vld [vmem:[%s398 + $0x78] sm:$0xff]
        %v593 = vld [vmem:[%s398 + $0x80] sm:$0xff]
        %v594 = vld [vmem:[%s398 + $0x88] sm:$0xff]
        %v595 = vld [vmem:[%s398 + $0x90] sm:$0xff]
        %v596 = vld [vmem:[%s398 + $0x98] sm:$0xff]
        %v597 = vld [vmem:[%s398 + $0xa0] sm:$0xff]
        %v598 = vld [vmem:[%s398 + $0xa8] sm:$0xff]
        %v599 = vld [vmem:[%s398 + $0xb0] sm:$0xff]
        %v600 = vld [vmem:[%s398 + $0xb8] sm:$0xff]
        %v601 = vld [vmem:[%s398 + $0xc0] sm:$0xff]
        %v602 = vld [vmem:[%s398 + $0xc8] sm:$0xff]
        %v603 = vld [vmem:[%s398 + $0xd0] sm:$0xff]
        %v604 = vld [vmem:[%s398 + $0xd8] sm:$0xff]
        %v605 = vld [vmem:[%s398 + $0xe0] sm:$0xff]
        %v606 = vld [vmem:[%s398 + $0xe8] sm:$0xff]
        %v607 = vld [vmem:[%s398 + $0xf0] sm:$0xff]
        %v608 = vld [vmem:[%s398 + $0xf8] sm:$0xff]
        %v609 = vld [vmem:[%s398 + $0x100] sm:$0xff]
        %v610 = vld [vmem:[%s398 + $0x108] sm:$0xff]
        %v611 = vld [vmem:[%s398 + $0x110] sm:$0xff]
        %v612 = vld [vmem:[%s398 + $0x118] sm:$0xff]
        %v613 = vld [vmem:[%s398 + $0x120] sm:$0xff]
        %v614 = vld [vmem:[%s398 + $0x128] sm:$0xff]
        %v615 = vpack.c.bf16 %v578, %v577
        %v616 = vpack.c.bf16 %v580, %v579
        %v617 = vpack.c.bf16 %v582, %v581
        %v618 = vpack.c.bf16 %v584, %v583
        %v619 = vpack.c.bf16 %v586, %v585
        %v620 = vpack.c.bf16 %v588, %v587
        %v621 = vpack.c.bf16 %v590, %v589
        %v622 = vpack.c.bf16 %v592, %v591
        %v623 = vpack.c.bf16 %v594, %v593
        %v624 = vpack.c.bf16 %v596, %v595
        %v625 = vpack.c.bf16 %v598, %v597
        %v626 = vpack.c.bf16 %v600, %v599
        %v627 = vpack.c.bf16 %v602, %v601
        %v628 = vpack.c.bf16 %v604, %v603
        %v629 = vpack.c.bf16 %v606, %v605
        %v630 = vpack.c.bf16 %v608, %v607
        %v631 = vpack.c.bf16 %v610, %v609
        %v632 = vpack.c.bf16 %v612, %v611
        %v633 = vpack.c.bf16 %v614, %v613
        %v634 = vld [vmem:[%s2] sm:$0xf]
        %v635 = vld [vmem:[%s2 + $0x4] sm:$0xf]
        %v636 = vld [vmem:[%s2 + $0x8] sm:$0xf]
        %v637 = vld [vmem:[%s2 + $0xc] sm:$0xf]
        %v638 = vld [vmem:[%s3] sm:$0x1]
        %v640 = vlaneseq
        %v641 = vshrl.u32 %v640, 7
        %v642 = vsub.s32 0, %v641
        %v643 = vrot.slane %v638, %v642
        %v649 = vunpack.c.l.b16 %v634
        %v650 = vunpack.c.l.b16 %v635
        %v651 = vunpack.c.l.b16 %v636
        %v652 = vunpack.c.l.b16 %v637
        %v653 = vpack.c.b16 %v650, %v649
        %v654 = vpack.c.b16 %v652, %v651
        %vm657 = vcmask 261120
        %v659 = vsel %vm657, %v615, 0
        %v662 = vsel %vm657, %v616, 0
        %v665 = vsel %vm657, %v617, 0
        %v668 = vsel %vm657, %v618, 0
        %v671 = vsel %vm657, %v619, 0
        %v674 = vsel %vm657, %v620, 0
        %v677 = vsel %vm657, %v621, 0
        %v680 = vsel %vm657, %v622, 0
        %v683 = vsel %vm657, %v623, 0
        %v686 = vsel %vm657, %v624, 0
        %v689 = vsel %vm657, %v625, 0
        %v692 = vsel %vm657, %v626, 0
        %v695 = vsel %vm657, %v627, 0
        %v698 = vsel %vm657, %v628, 0
        %v701 = vsel %vm657, %v629, 0
        %v704 = vsel %vm657, %v630, 0
        %v707 = vsel %vm657, %v631, 0
        %v710 = vsel %vm657, %v632, 0
        %v713 = vsel %vm657, %v633, 0
        %715 = vmatprep.subr.bf16.mxu0 0
        %716 = vmatpush1.bf16.msra.mxu0 %v653
        %717 = vmatprep.subr.bf16.mxu0 0
        %718 = vmatpush1.bf16.msra.mxu0 %v654
        %719 = vmatprep.subr.bf16.mxu0 0
        %720 = vmatpush1.bf16.msra.mxu0 0
        %721 = vmatprep.subr.bf16.mxu0 0
        %722 = vmatpush1.bf16.msra.mxu0 0
        %723 = vmatprep.subr.bf16.mxu0 0
        %724 = vmatpush1.bf16.msra.mxu0 0
        %725 = vmatprep.subr.bf16.mxu0 0
        %726 = vmatpush1.bf16.msra.mxu0 0
        %727 = vmatprep.subr.bf16.mxu0 0
        %728 = vmatpush1.bf16.msra.mxu0 0
        %729 = vmatprep.subr.bf16.mxu0 0
        %730 = vmatpush1.bf16.msra.mxu0 0
        %731 = vmatprep.subr.bf16.mxu0 0
        %732 = vmatpush1.bf16.msra.mxu0 0
        %733 = vmatprep.subr.bf16.mxu0 0
        %734 = vmatpush1.bf16.msra.mxu0 0
        %735 = vmatprep.subr.bf16.mxu0 0
        %736 = vmatpush1.bf16.msra.mxu0 0
        %737 = vmatprep.subr.bf16.mxu0 0
        %738 = vmatpush1.bf16.msra.mxu0 0
        %739 = vmatprep.subr.bf16.mxu0 0
        %740 = vmatpush1.bf16.msra.mxu0 0
        %741 = vmatprep.subr.bf16.mxu0 0
        %742 = vmatpush1.bf16.msra.mxu0 0
        %743 = vmatprep.subr.bf16.mxu0 0
        %744 = vmatpush1.bf16.msra.mxu0 0
        %745 = vmatprep.subr.bf16.mxu0 0
        %746 = vmatpush1.bf16.msra.mxu0 0
        %747 = vmatprep.mubr.bf16.mxu0 0
        %748 = vmatmul.mubr.bf16.gmra.mrb[0].mxu0 %v659
        %v749 = vpop.f32.mrb[0].mxu0
        %v750 = vadd.f32 %v643, %v749
        %v751 = vpop.f32.mrb[0].mxu0
        %v752 = vpop.f32.mrb[0].mxu0
        %v753 = vadd.f32 %v643, %v752
        %v754 = vpop.f32.mrb[0].mxu0
        %755 = vmatprep.mubr.bf16.mxu0 0
        %756 = vmatmul.mubr.bf16.gmra.mrb[0].mxu0 %v662
        %v757 = vpop.f32.mrb[0].mxu0
        %v758 = vadd.f32 %v643, %v757
        %v759 = vpop.f32.mrb[0].mxu0
        %v760 = vpop.f32.mrb[0].mxu0
        %v761 = vadd.f32 %v643, %v760
        %v762 = vpop.f32.mrb[0].mxu0
        %763 = vmatprep.mubr.bf16.mxu0 0
        %764 = vmatmul.mubr.bf16.gmra.mrb[0].mxu0 %v665
        %v765 = vpop.f32.mrb[0].mxu0
        %v766 = vadd.f32 %v643, %v765
        %v767 = vpop.f32.mrb[0].mxu0
        %v768 = vpop.f32.mrb[0].mxu0
        %v769 = vadd.f32 %v643, %v768
        %v770 = vpop.f32.mrb[0].mxu0
        %771 = vmatprep.mubr.bf16.mxu0 0
        %772 = vmatmul.mubr.bf16.gmra.mrb[0].mxu0 %v668
        %v773 = vpop.f32.mrb[0].mxu0
        %v774 = vadd.f32 %v643, %v773
        %v775 = vpop.f32.mrb[0].mxu0
        %v776 = vpop.f32.mrb[0].mxu0
        %v777 = vadd.f32 %v643, %v776
        %v778 = vpop.f32.mrb[0].mxu0
        %779 = vmatprep.mubr.bf16.mxu0 0
        %780 = vmatmul.mubr.bf16.gmra.mrb[0].mxu0 %v671
        %v781 = vpop.f32.mrb[0].mxu0
        %v782 = vadd.f32 %v643, %v781
        %v783 = vpop.f32.mrb[0].mxu0
        %v784 = vpop.f32.mrb[0].mxu0
        %v785 = vadd.f32 %v643, %v784
        %v786 = vpop.f32.mrb[0].mxu0
        %787 = vmatprep.mubr.bf16.mxu0 0
        %788 = vmatmul.mubr.bf16.gmra.mrb[0].mxu0 %v674
        %v789 = vpop.f32.mrb[0].mxu0
        %v790 = vadd.f32 %v643, %v789
        %v791 = vpop.f32.mrb[0].mxu0
        %v792 = vpop.f32.mrb[0].mxu0
        %v793 = vadd.f32 %v643, %v792
        %v794 = vpop.f32.mrb[0].mxu0
        %795 = vmatprep.mubr.bf16.mxu0 0
        %796 = vmatmul.mubr.bf16.gmra.mrb[0].mxu0 %v677
        %v797 = vpop.f32.mrb[0].mxu0
        %v798 = vadd.f32 %v643, %v797
        %v799 = vpop.f32.mrb[0].mxu0
        %v800 = vpop.f32.mrb[0].mxu0
        %v801 = vadd.f32 %v643, %v800
        %v802 = vpop.f32.mrb[0].mxu0
        %803 = vmatprep.mubr.bf16.mxu0 0
        %804 = vmatmul.mubr.bf16.gmra.mrb[0].mxu0 %v680
        %v805 = vpop.f32.mrb[0].mxu0
        %v806 = vadd.f32 %v643, %v805
        %v807 = vpop.f32.mrb[0].mxu0
        %v808 = vpop.f32.mrb[0].mxu0
        %v809 = vadd.f32 %v643, %v808
        %v810 = vpop.f32.mrb[0].mxu0
        %811 = vmatprep.mubr.bf16.mxu0 0
        %812 = vmatmul.mubr.bf16.gmra.mrb[0].mxu0 %v683
        %v813 = vpop.f32.mrb[0].mxu0
        %v814 = vadd.f32 %v643, %v813
        %v815 = vpop.f32.mrb[0].mxu0
        %v816 = vpop.f32.mrb[0].mxu0
        %v817 = vadd.f32 %v643, %v816
        %v818 = vpop.f32.mrb[0].mxu0
        %819 = vmatprep.mubr.bf16.mxu0 0
        %820 = vmatmul.mubr.bf16.gmra.mrb[0].mxu0 %v686
        %v821 = vpop.f32.mrb[0].mxu0
        %v822 = vadd.f32 %v643, %v821
        %v823 = vpop.f32.mrb[0].mxu0
        %v824 = vpop.f32.mrb[0].mxu0
        %v825 = vadd.f32 %v643, %v824
        %v826 = vpop.f32.mrb[0].mxu0
        %827 = vmatprep.mubr.bf16.mxu0 0
        %828 = vmatmul.mubr.bf16.gmra.mrb[0].mxu0 %v689
        %v829 = vpop.f32.mrb[0].mxu0
        %v830 = vadd.f32 %v643, %v829
        %v831 = vpop.f32.mrb[0].mxu0
        %v832 = vpop.f32.mrb[0].mxu0
        %v833 = vadd.f32 %v643, %v832
        %v834 = vpop.f32.mrb[0].mxu0
        %835 = vmatprep.mubr.bf16.mxu0 0
        %836 = vmatmul.mubr.bf16.gmra.mrb[0].mxu0 %v692
        %v837 = vpop.f32.mrb[0].mxu0
        %v838 = vadd.f32 %v643, %v837
        %v839 = vpop.f32.mrb[0].mxu0
        %v840 = vpop.f32.mrb[0].mxu0
        %v841 = vadd.f32 %v643, %v840
        %v842 = vpop.f32.mrb[0].mxu0
        %843 = vmatprep.mubr.bf16.mxu0 0
        %844 = vmatmul.mubr.bf16.gmra.mrb[0].mxu0 %v695
        %v845 = vpop.f32.mrb[0].mxu0
        %v846 = vadd.f32 %v643, %v845
        %v847 = vpop.f32.mrb[0].mxu0
        %v848 = vpop.f32.mrb[0].mxu0
        %v849 = vadd.f32 %v643, %v848
        %v850 = vpop.f32.mrb[0].mxu0
        %851 = vmatprep.mubr.bf16.mxu0 0
        %852 = vmatmul.mubr.bf16.gmra.mrb[0].mxu0 %v698
        %v853 = vpop.f32.mrb[0].mxu0
        %v854 = vadd.f32 %v643, %v853
        %v855 = vpop.f32.mrb[0].mxu0
        %v856 = vpop.f32.mrb[0].mxu0
        %v857 = vadd.f32 %v643, %v856
        %v858 = vpop.f32.mrb[0].mxu0
        %859 = vmatprep.mubr.bf16.mxu0 0
        %860 = vmatmul.mubr.bf16.gmra.mrb[0].mxu0 %v701
        %v861 = vpop.f32.mrb[0].mxu0
        %v862 = vadd.f32 %v643, %v861
        %v863 = vpop.f32.mrb[0].mxu0
        %v864 = vpop.f32.mrb[0].mxu0
        %v865 = vadd.f32 %v643, %v864
        %v866 = vpop.f32.mrb[0].mxu0
        %867 = vmatprep.mubr.bf16.mxu0 0
        %868 = vmatmul.mubr.bf16.gmra.mrb[0].mxu0 %v704
        %v869 = vpop.f32.mrb[0].mxu0
        %v870 = vadd.f32 %v643, %v869
        %v871 = vpop.f32.mrb[0].mxu0
        %v872 = vpop.f32.mrb[0].mxu0
        %v873 = vadd.f32 %v643, %v872
        %v874 = vpop.f32.mrb[0].mxu0
        %875 = vmatprep.mubr.bf16.mxu0 0
        %876 = vmatmul.mubr.bf16.gmra.mrb[0].mxu0 %v707
        %v877 = vpop.f32.mrb[0].mxu0
        %v878 = vadd.f32 %v643, %v877
        %v879 = vpop.f32.mrb[0].mxu0
        %v880 = vpop.f32.mrb[0].mxu0
        %v881 = vadd.f32 %v643, %v880
        %v882 = vpop.f32.mrb[0].mxu0
        %883 = vmatprep.mubr.bf16.mxu0 0
        %884 = vmatmul.mubr.bf16.gmra.mrb[0].mxu0 %v710
        %v885 = vpop.f32.mrb[0].mxu0
        %v886 = vadd.f32 %v643, %v885
        %v887 = vpop.f32.mrb[0].mxu0
        %v888 = vpop.f32.mrb[0].mxu0
        %v889 = vadd.f32 %v643, %v888
        %v890 = vpop.f32.mrb[0].mxu0
        %891 = vmatprep.mubr.bf16.mxu0 0
        %892 = vmatmul.mubr.bf16.gmra.mrb[0].mxu0 %v713
        %v893 = vpop.f32.mrb[0].mxu0
        %v894 = vadd.f32 %v643, %v893
        %v895 = vpop.f32.mrb[0].mxu0
        %v896 = vpop.f32.mrb[0].mxu0
        %v897 = vadd.f32 %v643, %v896
        %v898 = vpop.f32.mrb[0].mxu0
        %899 = vdwg.mxu0
        %v900 = vmax.f32 %v750, 0.0
        %v901 = vmax.f32 %v753, 0.0
        %v902 = vmax.f32 %v758, 0.0
        %v903 = vmax.f32 %v761, 0.0
        %v904 = vmax.f32 %v766, 0.0
        %v905 = vmax.f32 %v769, 0.0
        %v906 = vmax.f32 %v774, 0.0
        %v907 = vmax.f32 %v777, 0.0
        %v908 = vmax.f32 %v782, 0.0
        %v909 = vmax.f32 %v785, 0.0
        %v910 = vmax.f32 %v790, 0.0
        %v911 = vmax.f32 %v793, 0.0
        %v912 = vmax.f32 %v798, 0.0
        %v913 = vmax.f32 %v801, 0.0
        %v914 = vmax.f32 %v806, 0.0
        %v915 = vmax.f32 %v809, 0.0
        %v916 = vmax.f32 %v814, 0.0
        %v917 = vmax.f32 %v817, 0.0
        %v918 = vmax.f32 %v822, 0.0
        %v919 = vmax.f32 %v825, 0.0
        %v920 = vmax.f32 %v830, 0.0
        %v921 = vmax.f32 %v833, 0.0
        %v922 = vmax.f32 %v838, 0.0
        %v923 = vmax.f32 %v841, 0.0
        %v924 = vmax.f32 %v846, 0.0
        %v925 = vmax.f32 %v849, 0.0
        %v926 = vmax.f32 %v854, 0.0
        %v927 = vmax.f32 %v857, 0.0
        %v928 = vmax.f32 %v862, 0.0
        %v929 = vmax.f32 %v865, 0.0
        %v930 = vmax.f32 %v870, 0.0
        %v931 = vmax.f32 %v873, 0.0
        %v932 = vmax.f32 %v878, 0.0
        %v933 = vmax.f32 %v881, 0.0
        %v934 = vmax.f32 %v886, 0.0
        %v935 = vmax.f32 %v889, 0.0
        %v936 = vmax.f32 %v894, 0.0
        %v937 = vmax.f32 %v897, 0.0
        %v938 = vpack.c.bf16 %v901, %v900
        %v939 = vpack.c.bf16 %v903, %v902
        %v940 = vpack.c.bf16 %v905, %v904
        %v941 = vpack.c.bf16 %v907, %v906
        %v942 = vpack.c.bf16 %v909, %v908
        %v943 = vpack.c.bf16 %v911, %v910
        %v944 = vpack.c.bf16 %v913, %v912
        %v945 = vpack.c.bf16 %v915, %v914
        %v946 = vpack.c.bf16 %v917, %v916
        %v947 = vpack.c.bf16 %v919, %v918
        %v948 = vpack.c.bf16 %v921, %v920
        %v949 = vpack.c.bf16 %v923, %v922
        %v950 = vpack.c.bf16 %v925, %v924
        %v951 = vpack.c.bf16 %v927, %v926
        %v952 = vpack.c.bf16 %v929, %v928
        %v953 = vpack.c.bf16 %v931, %v930
        %v954 = vpack.c.bf16 %v933, %v932
        %v955 = vpack.c.bf16 %v935, %v934
        %v956 = vpack.c.bf16 %v937, %v936
        %vm957 = vcmask 523264
        %958 = vst.msk [vmem:[#allocation2] sm:$0xff] %vm957, %v938
        %959 = vst.msk [vmem:[#allocation2 + $0x8] sm:$0xff] %vm957, %v939
        %960 = vst.msk [vmem:[#allocation2 + $0x10] sm:$0xff] %vm957, %v940
        %961 = vst.msk [vmem:[#allocation2 + $0x18] sm:$0xff] %vm957, %v941
        %962 = vst.msk [vmem:[#allocation2 + $0x20] sm:$0xff] %vm957, %v942
        %963 = vst.msk [vmem:[#allocation2 + $0x28] sm:$0xff] %vm957, %v943
        %964 = vst.msk [vmem:[#allocation2 + $0x30] sm:$0xff] %vm957, %v944
        %965 = vst.msk [vmem:[#allocation2 + $0x38] sm:$0xff] %vm957, %v945
        %966 = vst.msk [vmem:[#allocation2 + $0x40] sm:$0xff] %vm957, %v946
        %967 = vst.msk [vmem:[#allocation2 + $0x48] sm:$0xff] %vm957, %v947
        %968 = vst.msk [vmem:[#allocation2 + $0x50] sm:$0xff] %vm957, %v948
        %969 = vst.msk [vmem:[#allocation2 + $0x58] sm:$0xff] %vm957, %v949
        %970 = vst.msk [vmem:[#allocation2 + $0x60] sm:$0xff] %vm957, %v950
        %971 = vst.msk [vmem:[#allocation2 + $0x68] sm:$0xff] %vm957, %v951
        %972 = vst.msk [vmem:[#allocation2 + $0x70] sm:$0xff] %vm957, %v952
        %973 = vst.msk [vmem:[#allocation2 + $0x78] sm:$0xff] %vm957, %v953
        %974 = vst.msk [vmem:[#allocation2 + $0x80] sm:$0xff] %vm957, %v954
        %975 = vst.msk [vmem:[#allocation2 + $0x88] sm:$0xff] %vm957, %v955
        %976 = vst.msk [vmem:[#allocation2 + $0x90] sm:$0xff] %vm957, %v956
        %v977 = vld [vmem:[#allocation2] sm:$0xff]
        %v978 = vld [vmem:[#allocation2 + $0x8] sm:$0xff]
        %v979 = vld [vmem:[#allocation2 + $0x10] sm:$0xff]
        %v980 = vld [vmem:[#allocation2 + $0x18] sm:$0xff]
        %v981 = vld [vmem:[#allocation2 + $0x20] sm:$0xff]
        %v982 = vld [vmem:[#allocation2 + $0x28] sm:$0xff]
        %v983 = vld [vmem:[#allocation2 + $0x30] sm:$0xff]
        %v984 = vld [vmem:[#allocation2 + $0x38] sm:$0xff]
        %v985 = vld [vmem:[#allocation2 + $0x40] sm:$0xff]
        %v986 = vld [vmem:[#allocation2 + $0x48] sm:$0xff]
        %v987 = vld [vmem:[#allocation2 + $0x50] sm:$0xff]
        %v988 = vld [vmem:[#allocation2 + $0x58] sm:$0xff]
        %v989 = vld [vmem:[#allocation2 + $0x60] sm:$0xff]
        %v990 = vld [vmem:[#allocation2 + $0x68] sm:$0xff]
        %v991 = vld [vmem:[#allocation2 + $0x70] sm:$0xff]
        %v992 = vld [vmem:[#allocation2 + $0x78] sm:$0xff]
        %v993 = vld [vmem:[#allocation2 + $0x80] sm:$0xff]
        %v994 = vld [vmem:[#allocation2 + $0x88] sm:$0xff]
        %v995 = vld [vmem:[#allocation2 + $0x90] sm:$0xff]
        %v996 = vld [vmem:[%s4] sm:$0xf]
        %v997 = vld [vmem:[%s4 + $0x4] sm:$0xf]
        %v998 = vld [vmem:[%s4 + $0x8] sm:$0xf]
        %v999 = vld [vmem:[%s4 + $0xc] sm:$0xf]
        %v1000 = vld [vmem:[%s4 + $0x10] sm:$0xf]
        %v1001 = vld [vmem:[%s4 + $0x14] sm:$0xf]
        %v1002 = vld [vmem:[%s4 + $0x18] sm:$0xf]
        %v1003 = vld [vmem:[%s4 + $0x1c] sm:$0xf]
        %v1004 = vld [vmem:[%s5] sm:$0x1]
        %v1006 = vlaneseq
        %v1007 = vshrl.u32 %v1006, 7
        %v1008 = vsub.s32 0, %v1007
        %v1009 = vrot.slane %v1004, %v1008
        %v1019 = vunpack.c.l.b16 %v996
        %v1020 = vunpack.c.l.b16 %v997
        %v1021 = vunpack.c.l.b16 %v998
        %v1022 = vunpack.c.l.b16 %v999
        %v1023 = vunpack.c.l.b16 %v1000
        %v1024 = vunpack.c.l.b16 %v1001
        %v1025 = vunpack.c.l.b16 %v1002
        %v1026 = vunpack.c.l.b16 %v1003
        %v1027 = vpack.c.b16 %v1020, %v1019
        %v1028 = vpack.c.b16 %v1022, %v1021
        %v1029 = vpack.c.b16 %v1024, %v1023
        %v1030 = vpack.c.b16 %v1026, %v1025
        %v1036 = vsel %vm957, %v977, 0
        %v1039 = vsel %vm957, %v978, 0
        %v1042 = vsel %vm957, %v979, 0
        %v1045 = vsel %vm957, %v980, 0
        %v1048 = vsel %vm957, %v981, 0
        %v1051 = vsel %vm957, %v982, 0
        %v1054 = vsel %vm957, %v983, 0
        %v1057 = vsel %vm957, %v984, 0
        %v1060 = vsel %vm957, %v985, 0
        %v1063 = vsel %vm957, %v986, 0
        %v1066 = vsel %vm957, %v987, 0
        %v1069 = vsel %vm957, %v988, 0
        %v1072 = vsel %vm957, %v989, 0
        %v1075 = vsel %vm957, %v990, 0
        %v1078 = vsel %vm957, %v991, 0
        %v1081 = vsel %vm957, %v992, 0
        %v1084 = vsel %vm957, %v993, 0
        %v1087 = vsel %vm957, %v994, 0
        %v1090 = vsel %vm957, %v995, 0
        %1092 = vmatprep.subr.bf16.mxu0 0
        %1093 = vmatpush1.bf16.msra.mxu0 %v1027
        %1094 = vmatprep.subr.bf16.mxu0 0
        %1095 = vmatpush1.bf16.msra.mxu0 %v1028
        %1096 = vmatprep.subr.bf16.mxu0 0
        %1097 = vmatpush1.bf16.msra.mxu0 %v1029
        %1098 = vmatprep.subr.bf16.mxu0 0
        %1099 = vmatpush1.bf16.msra.mxu0 %v1030
        %1100 = vmatprep.subr.bf16.mxu0 0
        %1101 = vmatpush1.bf16.msra.mxu0 0
        %1102 = vmatprep.subr.bf16.mxu0 0
        %1103 = vmatpush1.bf16.msra.mxu0 0
        %1104 = vmatprep.subr.bf16.mxu0 0
        %1105 = vmatpush1.bf16.msra.mxu0 0
        %1106 = vmatprep.subr.bf16.mxu0 0
        %1107 = vmatpush1.bf16.msra.mxu0 0
        %1108 = vmatprep.subr.bf16.mxu0 0
        %1109 = vmatpush1.bf16.msra.mxu0 0
        %1110 = vmatprep.subr.bf16.mxu0 0
        %1111 = vmatpush1.bf16.msra.mxu0 0
        %1112 = vmatprep.subr.bf16.mxu0 0
        %1113 = vmatpush1.bf16.msra.mxu0 0
        %1114 = vmatprep.subr.bf16.mxu0 0
        %1115 = vmatpush1.bf16.msra.mxu0 0
        %1116 = vmatprep.subr.bf16.mxu0 0
        %1117 = vmatpush1.bf16.msra.mxu0 0
        %1118 = vmatprep.subr.bf16.mxu0 0
        %1119 = vmatpush1.bf16.msra.mxu0 0
        %1120 = vmatprep.subr.bf16.mxu0 0
        %1121 = vmatpush1.bf16.msra.mxu0 0
        %1122 = vmatprep.subr.bf16.mxu0 0
        %1123 = vmatpush1.bf16.msra.mxu0 0
        %1124 = vmatprep.mubr.bf16.mxu0 0
        %1125 = vmatmul.mubr.bf16.gmra.mrb[0].mxu0 %v1036
        %v1126 = vpop.f32.mrb[0].mxu0
        %v1127 = vadd.f32 %v1009, %v1126
        %v1128 = vpop.f32.mrb[0].mxu0
        %v1129 = vpop.f32.mrb[0].mxu0
        %v1130 = vadd.f32 %v1009, %v1129
        %v1131 = vpop.f32.mrb[0].mxu0
        %1132 = vmatprep.mubr.bf16.mxu0 0
        %1133 = vmatmul.mubr.bf16.gmra.mrb[0].mxu0 %v1039
        %v1134 = vpop.f32.mrb[0].mxu0
        %v1135 = vadd.f32 %v1009, %v1134
        %v1136 = vpop.f32.mrb[0].mxu0
        %v1137 = vpop.f32.mrb[0].mxu0
        %v1138 = vadd.f32 %v1009, %v1137
        %v1139 = vpop.f32.mrb[0].mxu0
        %1140 = vmatprep.mubr.bf16.mxu0 0
        %1141 = vmatmul.mubr.bf16.gmra.mrb[0].mxu0 %v1042
        %v1142 = vpop.f32.mrb[0].mxu0
        %v1143 = vadd.f32 %v1009, %v1142
        %v1144 = vpop.f32.mrb[0].mxu0
        %v1145 = vpop.f32.mrb[0].mxu0
        %v1146 = vadd.f32 %v1009, %v1145
        %v1147 = vpop.f32.mrb[0].mxu0
        %1148 = vmatprep.mubr.bf16.mxu0 0
        %1149 = vmatmul.mubr.bf16.gmra.mrb[0].mxu0 %v1045
        %v1150 = vpop.f32.mrb[0].mxu0
        %v1151 = vadd.f32 %v1009, %v1150
        %v1152 = vpop.f32.mrb[0].mxu0
        %v1153 = vpop.f32.mrb[0].mxu0
        %v1154 = vadd.f32 %v1009, %v1153
        %v1155 = vpop.f32.mrb[0].mxu0
        %1156 = vmatprep.mubr.bf16.mxu0 0
        %1157 = vmatmul.mubr.bf16.gmra.mrb[0].mxu0 %v1048
        %v1158 = vpop.f32.mrb[0].mxu0
        %v1159 = vadd.f32 %v1009, %v1158
        %v1160 = vpop.f32.mrb[0].mxu0
        %v1161 = vpop.f32.mrb[0].mxu0
        %v1162 = vadd.f32 %v1009, %v1161
        %v1163 = vpop.f32.mrb[0].mxu0
        %1164 = vmatprep.mubr.bf16.mxu0 0
        %1165 = vmatmul.mubr.bf16.gmra.mrb[0].mxu0 %v1051
        %v1166 = vpop.f32.mrb[0].mxu0
        %v1167 = vadd.f32 %v1009, %v1166
        %v1168 = vpop.f32.mrb[0].mxu0
        %v1169 = vpop.f32.mrb[0].mxu0
        %v1170 = vadd.f32 %v1009, %v1169
        %v1171 = vpop.f32.mrb[0].mxu0
        %1172 = vmatprep.mubr.bf16.mxu0 0
        %1173 = vmatmul.mubr.bf16.gmra.mrb[0].mxu0 %v1054
        %v1174 = vpop.f32.mrb[0].mxu0
        %v1175 = vadd.f32 %v1009, %v1174
        %v1176 = vpop.f32.mrb[0].mxu0
        %v1177 = vpop.f32.mrb[0].mxu0
        %v1178 = vadd.f32 %v1009, %v1177
        %v1179 = vpop.f32.mrb[0].mxu0
        %1180 = vmatprep.mubr.bf16.mxu0 0
        %1181 = vmatmul.mubr.bf16.gmra.mrb[0].mxu0 %v1057
        %v1182 = vpop.f32.mrb[0].mxu0
        %v1183 = vadd.f32 %v1009, %v1182
        %v1184 = vpop.f32.mrb[0].mxu0
        %v1185 = vpop.f32.mrb[0].mxu0
        %v1186 = vadd.f32 %v1009, %v1185
        %v1187 = vpop.f32.mrb[0].mxu0
        %1188 = vmatprep.mubr.bf16.mxu0 0
        %1189 = vmatmul.mubr.bf16.gmra.mrb[0].mxu0 %v1060
        %v1190 = vpop.f32.mrb[0].mxu0
        %v1191 = vadd.f32 %v1009, %v1190
        %v1192 = vpop.f32.mrb[0].mxu0
        %v1193 = vpop.f32.mrb[0].mxu0
        %v1194 = vadd.f32 %v1009, %v1193
        %v1195 = vpop.f32.mrb[0].mxu0
        %1196 = vmatprep.mubr.bf16.mxu0 0
        %1197 = vmatmul.mubr.bf16.gmra.mrb[0].mxu0 %v1063
        %v1198 = vpop.f32.mrb[0].mxu0
        %v1199 = vadd.f32 %v1009, %v1198
        %v1200 = vpop.f32.mrb[0].mxu0
        %v1201 = vpop.f32.mrb[0].mxu0
        %v1202 = vadd.f32 %v1009, %v1201
        %v1203 = vpop.f32.mrb[0].mxu0
        %1204 = vmatprep.mubr.bf16.mxu0 0
        %1205 = vmatmul.mubr.bf16.gmra.mrb[0].mxu0 %v1066
        %v1206 = vpop.f32.mrb[0].mxu0
        %v1207 = vadd.f32 %v1009, %v1206
        %v1208 = vpop.f32.mrb[0].mxu0
        %v1209 = vpop.f32.mrb[0].mxu0
        %v1210 = vadd.f32 %v1009, %v1209
        %v1211 = vpop.f32.mrb[0].mxu0
        %1212 = vmatprep.mubr.bf16.mxu0 0
        %1213 = vmatmul.mubr.bf16.gmra.mrb[0].mxu0 %v1069
        %v1214 = vpop.f32.mrb[0].mxu0
        %v1215 = vadd.f32 %v1009, %v1214
        %v1216 = vpop.f32.mrb[0].mxu0
        %v1217 = vpop.f32.mrb[0].mxu0
        %v1218 = vadd.f32 %v1009, %v1217
        %v1219 = vpop.f32.mrb[0].mxu0
        %1220 = vmatprep.mubr.bf16.mxu0 0
        %1221 = vmatmul.mubr.bf16.gmra.mrb[0].mxu0 %v1072
        %v1222 = vpop.f32.mrb[0].mxu0
        %v1223 = vadd.f32 %v1009, %v1222
        %v1224 = vpop.f32.mrb[0].mxu0
        %v1225 = vpop.f32.mrb[0].mxu0
        %v1226 = vadd.f32 %v1009, %v1225
        %v1227 = vpop.f32.mrb[0].mxu0
        %1228 = vmatprep.mubr.bf16.mxu0 0
        %1229 = vmatmul.mubr.bf16.gmra.mrb[0].mxu0 %v1075
        %v1230 = vpop.f32.mrb[0].mxu0
        %v1231 = vadd.f32 %v1009, %v1230
        %v1232 = vpop.f32.mrb[0].mxu0
        %v1233 = vpop.f32.mrb[0].mxu0
        %v1234 = vadd.f32 %v1009, %v1233
        %v1235 = vpop.f32.mrb[0].mxu0
        %1236 = vmatprep.mubr.bf16.mxu0 0
        %1237 = vmatmul.mubr.bf16.gmra.mrb[0].mxu0 %v1078
        %v1238 = vpop.f32.mrb[0].mxu0
        %v1239 = vadd.f32 %v1009, %v1238
        %v1240 = vpop.f32.mrb[0].mxu0
        %v1241 = vpop.f32.mrb[0].mxu0
        %v1242 = vadd.f32 %v1009, %v1241
        %v1243 = vpop.f32.mrb[0].mxu0
        %1244 = vmatprep.mubr.bf16.mxu0 0
        %1245 = vmatmul.mubr.bf16.gmra.mrb[0].mxu0 %v1081
        %v1246 = vpop.f32.mrb[0].mxu0
        %v1247 = vadd.f32 %v1009, %v1246
        %v1248 = vpop.f32.mrb[0].mxu0
        %v1249 = vpop.f32.mrb[0].mxu0
        %v1250 = vadd.f32 %v1009, %v1249
        %v1251 = vpop.f32.mrb[0].mxu0
        %1252 = vmatprep.mubr.bf16.mxu0 0
        %1253 = vmatmul.mubr.bf16.gmra.mrb[0].mxu0 %v1084
        %v1254 = vpop.f32.mrb[0].mxu0
        %v1255 = vadd.f32 %v1009, %v1254
        %v1256 = vpop.f32.mrb[0].mxu0
        %v1257 = vpop.f32.mrb[0].mxu0
        %v1258 = vadd.f32 %v1009, %v1257
        %v1259 = vpop.f32.mrb[0].mxu0
        %1260 = vmatprep.mubr.bf16.mxu0 0
        %1261 = vmatmul.mubr.bf16.gmra.mrb[0].mxu0 %v1087
        %v1262 = vpop.f32.mrb[0].mxu0
        %v1263 = vadd.f32 %v1009, %v1262
        %v1264 = vpop.f32.mrb[0].mxu0
        %v1265 = vpop.f32.mrb[0].mxu0
        %v1266 = vadd.f32 %v1009, %v1265
        %v1267 = vpop.f32.mrb[0].mxu0
        %1268 = vmatprep.mubr.bf16.mxu0 0
        %1269 = vmatmul.mubr.bf16.gmra.mrb[0].mxu0 %v1090
        %v1270 = vpop.f32.mrb[0].mxu0
        %v1271 = vadd.f32 %v1009, %v1270
        %v1272 = vpop.f32.mrb[0].mxu0
        %v1273 = vpop.f32.mrb[0].mxu0
        %v1274 = vadd.f32 %v1009, %v1273
        %v1275 = vpop.f32.mrb[0].mxu0
        %1276 = vdwg.mxu0
        %v1277 = vmax.f32 %v1127, 0.0
        %v1278 = vmax.f32 %v1130, 0.0
        %v1279 = vmax.f32 %v1135, 0.0
        %v1280 = vmax.f32 %v1138, 0.0
        %v1281 = vmax.f32 %v1143, 0.0
        %v1282 = vmax.f32 %v1146, 0.0
        %v1283 = vmax.f32 %v1151, 0.0
        %v1284 = vmax.f32 %v1154, 0.0
        %v1285 = vmax.f32 %v1159, 0.0
        %v1286 = vmax.f32 %v1162, 0.0
        %v1287 = vmax.f32 %v1167, 0.0
        %v1288 = vmax.f32 %v1170, 0.0
        %v1289 = vmax.f32 %v1175, 0.0
        %v1290 = vmax.f32 %v1178, 0.0
        %v1291 = vmax.f32 %v1183, 0.0
        %v1292 = vmax.f32 %v1186, 0.0
        %v1293 = vmax.f32 %v1191, 0.0
        %v1294 = vmax.f32 %v1194, 0.0
        %v1295 = vmax.f32 %v1199, 0.0
        %v1296 = vmax.f32 %v1202, 0.0
        %v1297 = vmax.f32 %v1207, 0.0
        %v1298 = vmax.f32 %v1210, 0.0
        %v1299 = vmax.f32 %v1215, 0.0
        %v1300 = vmax.f32 %v1218, 0.0
        %v1301 = vmax.f32 %v1223, 0.0
        %v1302 = vmax.f32 %v1226, 0.0
        %v1303 = vmax.f32 %v1231, 0.0
        %v1304 = vmax.f32 %v1234, 0.0
        %v1305 = vmax.f32 %v1239, 0.0
        %v1306 = vmax.f32 %v1242, 0.0
        %v1307 = vmax.f32 %v1247, 0.0
        %v1308 = vmax.f32 %v1250, 0.0
        %v1309 = vmax.f32 %v1255, 0.0
        %v1310 = vmax.f32 %v1258, 0.0
        %v1311 = vmax.f32 %v1263, 0.0
        %v1312 = vmax.f32 %v1266, 0.0
        %v1313 = vmax.f32 %v1271, 0.0
        %v1314 = vmax.f32 %v1274, 0.0
        %v1315 = vpack.c.bf16 %v1278, %v1277
        %v1316 = vpack.c.bf16 %v1280, %v1279
        %v1317 = vpack.c.bf16 %v1282, %v1281
        %v1318 = vpack.c.bf16 %v1284, %v1283
        %v1319 = vpack.c.bf16 %v1286, %v1285
        %v1320 = vpack.c.bf16 %v1288, %v1287
        %v1321 = vpack.c.bf16 %v1290, %v1289
        %v1322 = vpack.c.bf16 %v1292, %v1291
        %v1323 = vpack.c.bf16 %v1294, %v1293
        %v1324 = vpack.c.bf16 %v1296, %v1295
        %v1325 = vpack.c.bf16 %v1298, %v1297
        %v1326 = vpack.c.bf16 %v1300, %v1299
        %v1327 = vpack.c.bf16 %v1302, %v1301
        %v1328 = vpack.c.bf16 %v1304, %v1303
        %v1329 = vpack.c.bf16 %v1306, %v1305
        %v1330 = vpack.c.bf16 %v1308, %v1307
        %v1331 = vpack.c.bf16 %v1310, %v1309
        %v1332 = vpack.c.bf16 %v1312, %v1311
        %v1333 = vpack.c.bf16 %v1314, %v1313
        %1334 = vst.msk [vmem:[#allocation2] sm:$0xff] %vm957, %v1315
        %1335 = vst.msk [vmem:[#allocation2 + $0x8] sm:$0xff] %vm957, %v1316
        %1336 = vst.msk [vmem:[#allocation2 + $0x10] sm:$0xff] %vm957, %v1317
        %1337 = vst.msk [vmem:[#allocation2 + $0x18] sm:$0xff] %vm957, %v1318
        %1338 = vst.msk [vmem:[#allocation2 + $0x20] sm:$0xff] %vm957, %v1319
        %1339 = vst.msk [vmem:[#allocation2 + $0x28] sm:$0xff] %vm957, %v1320
        %1340 = vst.msk [vmem:[#allocation2 + $0x30] sm:$0xff] %vm957, %v1321
        %1341 = vst.msk [vmem:[#allocation2 + $0x38] sm:$0xff] %vm957, %v1322
        %1342 = vst.msk [vmem:[#allocation2 + $0x40] sm:$0xff] %vm957, %v1323
        %1343 = vst.msk [vmem:[#allocation2 + $0x48] sm:$0xff] %vm957, %v1324
        %1344 = vst.msk [vmem:[#allocation2 + $0x50] sm:$0xff] %vm957, %v1325
        %1345 = vst.msk [vmem:[#allocation2 + $0x58] sm:$0xff] %vm957, %v1326
        %1346 = vst.msk [vmem:[#allocation2 + $0x60] sm:$0xff] %vm957, %v1327
        %1347 = vst.msk [vmem:[#allocation2 + $0x68] sm:$0xff] %vm957, %v1328
        %1348 = vst.msk [vmem:[#allocation2 + $0x70] sm:$0xff] %vm957, %v1329
        %1349 = vst.msk [vmem:[#allocation2 + $0x78] sm:$0xff] %vm957, %v1330
        %1350 = vst.msk [vmem:[#allocation2 + $0x80] sm:$0xff] %vm957, %v1331
        %1351 = vst.msk [vmem:[#allocation2 + $0x88] sm:$0xff] %vm957, %v1332
        %1352 = vst.msk [vmem:[#allocation2 + $0x90] sm:$0xff] %vm957, %v1333
        %v1353 = vld [vmem:[#allocation2] sm:$0xff]
        %v1354 = vld [vmem:[#allocation2 + $0x8] sm:$0xff]
        %v1355 = vld [vmem:[#allocation2 + $0x10] sm:$0xff]
        %v1356 = vld [vmem:[#allocation2 + $0x18] sm:$0xff]
        %v1357 = vld [vmem:[#allocation2 + $0x20] sm:$0xff]
        %v1358 = vld [vmem:[#allocation2 + $0x28] sm:$0xff]
        %v1359 = vld [vmem:[#allocation2 + $0x30] sm:$0xff]
        %v1360 = vld [vmem:[#allocation2 + $0x38] sm:$0xff]
        %v1361 = vld [vmem:[#allocation2 + $0x40] sm:$0xff]
        %v1362 = vld [vmem:[#allocation2 + $0x48] sm:$0xff]
        %v1363 = vld [vmem:[#allocation2 + $0x50] sm:$0xff]
        %v1364 = vld [vmem:[#allocation2 + $0x58] sm:$0xff]
        %v1365 = vld [vmem:[#allocation2 + $0x60] sm:$0xff]
        %v1366 = vld [vmem:[#allocation2 + $0x68] sm:$0xff]
        %v1367 = vld [vmem:[#allocation2 + $0x70] sm:$0xff]
        %v1368 = vld [vmem:[#allocation2 + $0x78] sm:$0xff]
        %v1369 = vld [vmem:[#allocation2 + $0x80] sm:$0xff]
        %v1370 = vld [vmem:[#allocation2 + $0x88] sm:$0xff]
        %v1371 = vld [vmem:[#allocation2 + $0x90] sm:$0xff]
        %v1372 = vld [vmem:[%s6] sm:$0xf]
        %v1373 = vld [vmem:[%s6 + $0x4] sm:$0xf]
        %v1374 = vld [vmem:[%s6 + $0x8] sm:$0xf]
        %v1375 = vld [vmem:[%s6 + $0xc] sm:$0xf]
        %v1376 = vld [vmem:[%s6 + $0x10] sm:$0xf]
        %v1377 = vld [vmem:[%s6 + $0x14] sm:$0xf]
        %v1378 = vld [vmem:[%s6 + $0x18] sm:$0xf]
        %v1379 = vld [vmem:[%s6 + $0x1c] sm:$0xf]
        %v1380 = vld [vmem:[%s6 + $0x20] sm:$0xf]
        %v1381 = vld [vmem:[%s6 + $0x24] sm:$0xf]
        %v1382 = vld [vmem:[%s6 + $0x28] sm:$0xf]
        %v1383 = vld [vmem:[%s6 + $0x2c] sm:$0xf]
        %v1384 = vld [vmem:[%s7] sm:$0x1]
        %v1386 = vlaneseq
        %v1387 = vshrl.u32 %v1386, 7
        %v1388 = vsub.s32 0, %v1387
        %v1389 = vrot.slane %v1384, %v1388
        %v1403 = vunpack.c.l.b16 %v1372
        %v1404 = vunpack.c.l.b16 %v1373
        %v1405 = vunpack.c.l.b16 %v1374
        %v1406 = vunpack.c.l.b16 %v1375
        %v1407 = vunpack.c.l.b16 %v1376
        %v1408 = vunpack.c.l.b16 %v1377
        %v1409 = vunpack.c.l.b16 %v1378
        %v1410 = vunpack.c.l.b16 %v1379
        %v1411 = vunpack.c.l.b16 %v1380
        %v1412 = vunpack.c.l.b16 %v1381
        %v1413 = vunpack.c.l.b16 %v1382
        %v1414 = vunpack.c.l.b16 %v1383
        %v1415 = vpack.c.b16 %v1404, %v1403
        %v1416 = vpack.c.b16 %v1406, %v1405
        %v1417 = vpack.c.b16 %v1408, %v1407
        %v1418 = vpack.c.b16 %v1410, %v1409
        %v1419 = vpack.c.b16 %v1412, %v1411
        %v1420 = vpack.c.b16 %v1414, %v1413
        %vm1427 = vcmask 785408
        %v1429 = vsel %vm1427, %v1353, 0
        %v1432 = vsel %vm1427, %v1354, 0
        %v1435 = vsel %vm1427, %v1355, 0
        %v1438 = vsel %vm1427, %v1356, 0
        %v1441 = vsel %vm1427, %v1357, 0
        %v1444 = vsel %vm1427, %v1358, 0
        %v1447 = vsel %vm1427, %v1359, 0
        %v1450 = vsel %vm1427, %v1360, 0
        %v1453 = vsel %vm1427, %v1361, 0
        %v1456 = vsel %vm1427, %v1362, 0
        %v1459 = vsel %vm1427, %v1363, 0
        %v1462 = vsel %vm1427, %v1364, 0
        %v1465 = vsel %vm1427, %v1365, 0
        %v1468 = vsel %vm1427, %v1366, 0
        %v1471 = vsel %vm1427, %v1367, 0
        %v1474 = vsel %vm1427, %v1368, 0
        %v1477 = vsel %vm1427, %v1369, 0
        %v1480 = vsel %vm1427, %v1370, 0
        %v1483 = vsel %vm1427, %v1371, 0
        %1485 = vmatprep.subr.bf16.mxu0 0
        %1486 = vmatpush1.bf16.msra.mxu0 %v1415
        %1487 = vmatprep.subr.bf16.mxu0 0
        %1488 = vmatpush1.bf16.msra.mxu0 %v1416
        %1489 = vmatprep.subr.bf16.mxu0 0
        %1490 = vmatpush1.bf16.msra.mxu0 %v1417
        %1491 = vmatprep.subr.bf16.mxu0 0
        %1492 = vmatpush1.bf16.msra.mxu0 %v1418
        %1493 = vmatprep.subr.bf16.mxu0 0
        %1494 = vmatpush1.bf16.msra.mxu0 %v1419
        %1495 = vmatprep.subr.bf16.mxu0 0
        %1496 = vmatpush1.bf16.msra.mxu0 %v1420
        %1497 = vmatprep.subr.bf16.mxu0 0
        %1498 = vmatpush1.bf16.msra.mxu0 0
        %1499 = vmatprep.subr.bf16.mxu0 0
        %1500 = vmatpush1.bf16.msra.mxu0 0
        %1501 = vmatprep.subr.bf16.mxu0 0
        %1502 = vmatpush1.bf16.msra.mxu0 0
        %1503 = vmatprep.subr.bf16.mxu0 0
        %1504 = vmatpush1.bf16.msra.mxu0 0
        %1505 = vmatprep.subr.bf16.mxu0 0
        %1506 = vmatpush1.bf16.msra.mxu0 0
        %1507 = vmatprep.subr.bf16.mxu0 0
        %1508 = vmatpush1.bf16.msra.mxu0 0
        %1509 = vmatprep.subr.bf16.mxu0 0
        %1510 = vmatpush1.bf16.msra.mxu0 0
        %1511 = vmatprep.subr.bf16.mxu0 0
        %1512 = vmatpush1.bf16.msra.mxu0 0
        %1513 = vmatprep.subr.bf16.mxu0 0
        %1514 = vmatpush1.bf16.msra.mxu0 0
        %1515 = vmatprep.subr.bf16.mxu0 0
        %1516 = vmatpush1.bf16.msra.mxu0 0
        %1517 = vmatprep.mubr.bf16.mxu0 0
        %1518 = vmatmul.mubr.bf16.gmra.mrb[0].mxu0 %v1429
        %v1519 = vpop.f32.mrb[0].mxu0
        %v1520 = vadd.f32 %v1389, %v1519
        %v1521 = vpop.f32.mrb[0].mxu0
        %v1522 = vpop.f32.mrb[0].mxu0
        %v1523 = vadd.f32 %v1389, %v1522
        %v1524 = vpop.f32.mrb[0].mxu0
        %1525 = vmatprep.mubr.bf16.mxu0 0
        %1526 = vmatmul.mubr.bf16.gmra.mrb[0].mxu0 %v1432
        %v1527 = vpop.f32.mrb[0].mxu0
        %v1528 = vadd.f32 %v1389, %v1527
        %v1529 = vpop.f32.mrb[0].mxu0
        %v1530 = vpop.f32.mrb[0].mxu0
        %v1531 = vadd.f32 %v1389, %v1530
        %v1532 = vpop.f32.mrb[0].mxu0
        %1533 = vmatprep.mubr.bf16.mxu0 0
        %1534 = vmatmul.mubr.bf16.gmra.mrb[0].mxu0 %v1435
        %v1535 = vpop.f32.mrb[0].mxu0
        %v1536 = vadd.f32 %v1389, %v1535
        %v1537 = vpop.f32.mrb[0].mxu0
        %v1538 = vpop.f32.mrb[0].mxu0
        %v1539 = vadd.f32 %v1389, %v1538
        %v1540 = vpop.f32.mrb[0].mxu0
        %1541 = vmatprep.mubr.bf16.mxu0 0
        %1542 = vmatmul.mubr.bf16.gmra.mrb[0].mxu0 %v1438
        %v1543 = vpop.f32.mrb[0].mxu0
        %v1544 = vadd.f32 %v1389, %v1543
        %v1545 = vpop.f32.mrb[0].mxu0
        %v1546 = vpop.f32.mrb[0].mxu0
        %v1547 = vadd.f32 %v1389, %v1546
        %v1548 = vpop.f32.mrb[0].mxu0
        %1549 = vmatprep.mubr.bf16.mxu0 0
        %1550 = vmatmul.mubr.bf16.gmra.mrb[0].mxu0 %v1441
        %v1551 = vpop.f32.mrb[0].mxu0
        %v1552 = vadd.f32 %v1389, %v1551
        %v1553 = vpop.f32.mrb[0].mxu0
        %v1554 = vpop.f32.mrb[0].mxu0
        %v1555 = vadd.f32 %v1389, %v1554
        %v1556 = vpop.f32.mrb[0].mxu0
        %1557 = vmatprep.mubr.bf16.mxu0 0
        %1558 = vmatmul.mubr.bf16.gmra.mrb[0].mxu0 %v1444
        %v1559 = vpop.f32.mrb[0].mxu0
        %v1560 = vadd.f32 %v1389, %v1559
        %v1561 = vpop.f32.mrb[0].mxu0
        %v1562 = vpop.f32.mrb[0].mxu0
        %v1563 = vadd.f32 %v1389, %v1562
        %v1564 = vpop.f32.mrb[0].mxu0
        %1565 = vmatprep.mubr.bf16.mxu0 0
        %1566 = vmatmul.mubr.bf16.gmra.mrb[0].mxu0 %v1447
        %v1567 = vpop.f32.mrb[0].mxu0
        %v1568 = vadd.f32 %v1389, %v1567
        %v1569 = vpop.f32.mrb[0].mxu0
        %v1570 = vpop.f32.mrb[0].mxu0
        %v1571 = vadd.f32 %v1389, %v1570
        %v1572 = vpop.f32.mrb[0].mxu0
        %1573 = vmatprep.mubr.bf16.mxu0 0
        %1574 = vmatmul.mubr.bf16.gmra.mrb[0].mxu0 %v1450
        %v1575 = vpop.f32.mrb[0].mxu0
        %v1576 = vadd.f32 %v1389, %v1575
        %v1577 = vpop.f32.mrb[0].mxu0
        %v1578 = vpop.f32.mrb[0].mxu0
        %v1579 = vadd.f32 %v1389, %v1578
        %v1580 = vpop.f32.mrb[0].mxu0
        %1581 = vmatprep.mubr.bf16.mxu0 0
        %1582 = vmatmul.mubr.bf16.gmra.mrb[0].mxu0 %v1453
        %v1583 = vpop.f32.mrb[0].mxu0
        %v1584 = vadd.f32 %v1389, %v1583
        %v1585 = vpop.f32.mrb[0].mxu0
        %v1586 = vpop.f32.mrb[0].mxu0
        %v1587 = vadd.f32 %v1389, %v1586
        %v1588 = vpop.f32.mrb[0].mxu0
        %1589 = vmatprep.mubr.bf16.mxu0 0
        %1590 = vmatmul.mubr.bf16.gmra.mrb[0].mxu0 %v1456
        %v1591 = vpop.f32.mrb[0].mxu0
        %v1592 = vadd.f32 %v1389, %v1591
        %v1593 = vpop.f32.mrb[0].mxu0
        %v1594 = vpop.f32.mrb[0].mxu0
        %v1595 = vadd.f32 %v1389, %v1594
        %v1596 = vpop.f32.mrb[0].mxu0
        %1597 = vmatprep.mubr.bf16.mxu0 0
        %1598 = vmatmul.mubr.bf16.gmra.mrb[0].mxu0 %v1459
        %v1599 = vpop.f32.mrb[0].mxu0
        %v1600 = vadd.f32 %v1389, %v1599
        %v1601 = vpop.f32.mrb[0].mxu0
        %v1602 = vpop.f32.mrb[0].mxu0
        %v1603 = vadd.f32 %v1389, %v1602
        %v1604 = vpop.f32.mrb[0].mxu0
        %1605 = vmatprep.mubr.bf16.mxu0 0
        %1606 = vmatmul.mubr.bf16.gmra.mrb[0].mxu0 %v1462
        %v1607 = vpop.f32.mrb[0].mxu0
        %v1608 = vadd.f32 %v1389, %v1607
        %v1609 = vpop.f32.mrb[0].mxu0
        %v1610 = vpop.f32.mrb[0].mxu0
        %v1611 = vadd.f32 %v1389, %v1610
        %v1612 = vpop.f32.mrb[0].mxu0
        %1613 = vmatprep.mubr.bf16.mxu0 0
        %1614 = vmatmul.mubr.bf16.gmra.mrb[0].mxu0 %v1465
        %v1615 = vpop.f32.mrb[0].mxu0
        %v1616 = vadd.f32 %v1389, %v1615
        %v1617 = vpop.f32.mrb[0].mxu0
        %v1618 = vpop.f32.mrb[0].mxu0
        %v1619 = vadd.f32 %v1389, %v1618
        %v1620 = vpop.f32.mrb[0].mxu0
        %1621 = vmatprep.mubr.bf16.mxu0 0
        %1622 = vmatmul.mubr.bf16.gmra.mrb[0].mxu0 %v1468
        %v1623 = vpop.f32.mrb[0].mxu0
        %v1624 = vadd.f32 %v1389, %v1623
        %v1625 = vpop.f32.mrb[0].mxu0
        %v1626 = vpop.f32.mrb[0].mxu0
        %v1627 = vadd.f32 %v1389, %v1626
        %v1628 = vpop.f32.mrb[0].mxu0
        %1629 = vmatprep.mubr.bf16.mxu0 0
        %1630 = vmatmul.mubr.bf16.gmra.mrb[0].mxu0 %v1471
        %v1631 = vpop.f32.mrb[0].mxu0
        %v1632 = vadd.f32 %v1389, %v1631
        %v1633 = vpop.f32.mrb[0].mxu0
        %v1634 = vpop.f32.mrb[0].mxu0
        %v1635 = vadd.f32 %v1389, %v1634
        %v1636 = vpop.f32.mrb[0].mxu0
        %1637 = vmatprep.mubr.bf16.mxu0 0
        %1638 = vmatmul.mubr.bf16.gmra.mrb[0].mxu0 %v1474
        %v1639 = vpop.f32.mrb[0].mxu0
        %v1640 = vadd.f32 %v1389, %v1639
        %v1641 = vpop.f32.mrb[0].mxu0
        %v1642 = vpop.f32.mrb[0].mxu0
        %v1643 = vadd.f32 %v1389, %v1642
        %v1644 = vpop.f32.mrb[0].mxu0
        %1645 = vmatprep.mubr.bf16.mxu0 0
        %1646 = vmatmul.mubr.bf16.gmra.mrb[0].mxu0 %v1477
        %v1647 = vpop.f32.mrb[0].mxu0
        %v1648 = vadd.f32 %v1389, %v1647
        %v1649 = vpop.f32.mrb[0].mxu0
        %v1650 = vpop.f32.mrb[0].mxu0
        %v1651 = vadd.f32 %v1389, %v1650
        %v1652 = vpop.f32.mrb[0].mxu0
        %1653 = vmatprep.mubr.bf16.mxu0 0
        %1654 = vmatmul.mubr.bf16.gmra.mrb[0].mxu0 %v1480
        %v1655 = vpop.f32.mrb[0].mxu0
        %v1656 = vadd.f32 %v1389, %v1655
        %v1657 = vpop.f32.mrb[0].mxu0
        %v1658 = vpop.f32.mrb[0].mxu0
        %v1659 = vadd.f32 %v1389, %v1658
        %v1660 = vpop.f32.mrb[0].mxu0
        %1661 = vmatprep.mubr.bf16.mxu0 0
        %1662 = vmatmul.mubr.bf16.gmra.mrb[0].mxu0 %v1483
        %v1663 = vpop.f32.mrb[0].mxu0
        %v1664 = vadd.f32 %v1389, %v1663
        %v1665 = vpop.f32.mrb[0].mxu0
        %v1666 = vpop.f32.mrb[0].mxu0
        %v1667 = vadd.f32 %v1389, %v1666
        %v1668 = vpop.f32.mrb[0].mxu0
        %1669 = vdwg.mxu0
        %v1670 = vmax.f32 %v1520, 0.0
        %v1671 = vmax.f32 %v1523, 0.0
        %v1672 = vmax.f32 %v1528, 0.0
        %v1673 = vmax.f32 %v1531, 0.0
        %v1674 = vmax.f32 %v1536, 0.0
        %v1675 = vmax.f32 %v1539, 0.0
        %v1676 = vmax.f32 %v1544, 0.0
        %v1677 = vmax.f32 %v1547, 0.0
        %v1678 = vmax.f32 %v1552, 0.0
        %v1679 = vmax.f32 %v1555, 0.0
        %v1680 = vmax.f32 %v1560, 0.0
        %v1681 = vmax.f32 %v1563, 0.0
        %v1682 = vmax.f32 %v1568, 0.0
        %v1683 = vmax.f32 %v1571, 0.0
        %v1684 = vmax.f32 %v1576, 0.0
        %v1685 = vmax.f32 %v1579, 0.0
        %v1686 = vmax.f32 %v1584, 0.0
        %v1687 = vmax.f32 %v1587, 0.0
        %v1688 = vmax.f32 %v1592, 0.0
        %v1689 = vmax.f32 %v1595, 0.0
        %v1690 = vmax.f32 %v1600, 0.0
        %v1691 = vmax.f32 %v1603, 0.0
        %v1692 = vmax.f32 %v1608, 0.0
        %v1693 = vmax.f32 %v1611, 0.0
        %v1694 = vmax.f32 %v1616, 0.0
        %v1695 = vmax.f32 %v1619, 0.0
        %v1696 = vmax.f32 %v1624, 0.0
        %v1697 = vmax.f32 %v1627, 0.0
        %v1698 = vmax.f32 %v1632, 0.0
        %v1699 = vmax.f32 %v1635, 0.0
        %v1700 = vmax.f32 %v1640, 0.0
        %v1701 = vmax.f32 %v1643, 0.0
        %v1702 = vmax.f32 %v1648, 0.0
        %v1703 = vmax.f32 %v1651, 0.0
        %v1704 = vmax.f32 %v1656, 0.0
        %v1705 = vmax.f32 %v1659, 0.0
        %v1706 = vmax.f32 %v1664, 0.0
        %v1707 = vmax.f32 %v1667, 0.0
        %v1708 = vpack.c.bf16 %v1671, %v1670
        %v1709 = vpack.c.bf16 %v1673, %v1672
        %v1710 = vpack.c.bf16 %v1675, %v1674
        %v1711 = vpack.c.bf16 %v1677, %v1676
        %v1712 = vpack.c.bf16 %v1679, %v1678
        %v1713 = vpack.c.bf16 %v1681, %v1680
        %v1714 = vpack.c.bf16 %v1683, %v1682
        %v1715 = vpack.c.bf16 %v1685, %v1684
        %v1716 = vpack.c.bf16 %v1687, %v1686
        %v1717 = vpack.c.bf16 %v1689, %v1688
        %v1718 = vpack.c.bf16 %v1691, %v1690
        %v1719 = vpack.c.bf16 %v1693, %v1692
        %v1720 = vpack.c.bf16 %v1695, %v1694
        %v1721 = vpack.c.bf16 %v1697, %v1696
        %v1722 = vpack.c.bf16 %v1699, %v1698
        %v1723 = vpack.c.bf16 %v1701, %v1700
        %v1724 = vpack.c.bf16 %v1703, %v1702
        %v1725 = vpack.c.bf16 %v1705, %v1704
        %v1726 = vpack.c.bf16 %v1707, %v1706
        %1727 = vst.msk [vmem:[#allocation2] sm:$0xff] %vm957, %v1708
        %1728 = vst.msk [vmem:[#allocation2 + $0x8] sm:$0xff] %vm957, %v1709
        %1729 = vst.msk [vmem:[#allocation2 + $0x10] sm:$0xff] %vm957, %v1710
        %1730 = vst.msk [vmem:[#allocation2 + $0x18] sm:$0xff] %vm957, %v1711
        %1731 = vst.msk [vmem:[#allocation2 + $0x20] sm:$0xff] %vm957, %v1712
        %1732 = vst.msk [vmem:[#allocation2 + $0x28] sm:$0xff] %vm957, %v1713
        %1733 = vst.msk [vmem:[#allocation2 + $0x30] sm:$0xff] %vm957, %v1714
        %1734 = vst.msk [vmem:[#allocation2 + $0x38] sm:$0xff] %vm957, %v1715
        %1735 = vst.msk [vmem:[#allocation2 + $0x40] sm:$0xff] %vm957, %v1716
        %1736 = vst.msk [vmem:[#allocation2 + $0x48] sm:$0xff] %vm957, %v1717
        %1737 = vst.msk [vmem:[#allocation2 + $0x50] sm:$0xff] %vm957, %v1718
        %1738 = vst.msk [vmem:[#allocation2 + $0x58] sm:$0xff] %vm957, %v1719
        %1739 = vst.msk [vmem:[#allocation2 + $0x60] sm:$0xff] %vm957, %v1720
        %1740 = vst.msk [vmem:[#allocation2 + $0x68] sm:$0xff] %vm957, %v1721
        %1741 = vst.msk [vmem:[#allocation2 + $0x70] sm:$0xff] %vm957, %v1722
        %1742 = vst.msk [vmem:[#allocation2 + $0x78] sm:$0xff] %vm957, %v1723
        %1743 = vst.msk [vmem:[#allocation2 + $0x80] sm:$0xff] %vm957, %v1724
        %1744 = vst.msk [vmem:[#allocation2 + $0x88] sm:$0xff] %vm957, %v1725
        %1745 = vst.msk [vmem:[#allocation2 + $0x90] sm:$0xff] %vm957, %v1726
        %v1746 = vld [vmem:[#allocation2] sm:$0xff]
        %v1747 = vld [vmem:[#allocation2 + $0x8] sm:$0xff]
        %v1748 = vld [vmem:[#allocation2 + $0x10] sm:$0xff]
        %v1749 = vld [vmem:[#allocation2 + $0x18] sm:$0xff]
        %v1750 = vld [vmem:[#allocation2 + $0x20] sm:$0xff]
        %v1751 = vld [vmem:[#allocation2 + $0x28] sm:$0xff]
        %v1752 = vld [vmem:[#allocation2 + $0x30] sm:$0xff]
        %v1753 = vld [vmem:[#allocation2 + $0x38] sm:$0xff]
        %v1754 = vld [vmem:[#allocation2 + $0x40] sm:$0xff]
        %v1755 = vld [vmem:[#allocation2 + $0x48] sm:$0xff]
        %v1756 = vld [vmem:[#allocation2 + $0x50] sm:$0xff]
        %v1757 = vld [vmem:[#allocation2 + $0x58] sm:$0xff]
        %v1758 = vld [vmem:[#allocation2 + $0x60] sm:$0xff]
        %v1759 = vld [vmem:[#allocation2 + $0x68] sm:$0xff]
        %v1760 = vld [vmem:[#allocation2 + $0x70] sm:$0xff]
        %v1761 = vld [vmem:[#allocation2 + $0x78] sm:$0xff]
        %v1762 = vld [vmem:[#allocation2 + $0x80] sm:$0xff]
        %v1763 = vld [vmem:[#allocation2 + $0x88] sm:$0xff]
        %v1764 = vld [vmem:[#allocation2 + $0x90] sm:$0xff]
        %v1765 = vld [vmem:[%s8] sm:$0xf]
        %v1766 = vld [vmem:[%s8 + $0x4] sm:$0xf]
        %v1767 = vld [vmem:[%s8 + $0x8] sm:$0xf]
        %v1768 = vld [vmem:[%s8 + $0xc] sm:$0xf]
        %v1769 = vld [vmem:[%s8 + $0x10] sm:$0xf]
        %v1770 = vld [vmem:[%s8 + $0x14] sm:$0xf]
        %v1771 = vld [vmem:[%s8 + $0x18] sm:$0xf]
        %v1772 = vld [vmem:[%s8 + $0x1c] sm:$0xf]
        %v1773 = vld [vmem:[%s9] sm:$0x1]
        %v1775 = vlaneseq
        %v1776 = vshrl.u32 %v1775, 7
        %v1777 = vsub.s32 0, %v1776
        %v1778 = vrot.slane %v1773, %v1777
        %v1788 = vunpack.c.l.b16 %v1765
        %v1789 = vunpack.c.l.b16 %v1766
        %v1790 = vunpack.c.l.b16 %v1767
        %v1791 = vunpack.c.l.b16 %v1768
        %v1792 = vunpack.c.l.b16 %v1769
        %v1793 = vunpack.c.l.b16 %v1770
        %v1794 = vunpack.c.l.b16 %v1771
        %v1795 = vunpack.c.l.b16 %v1772
        %v1796 = vpack.c.b16 %v1789, %v1788
        %v1797 = vpack.c.b16 %v1791, %v1790
        %v1798 = vpack.c.b16 %v1793, %v1792
        %v1799 = vpack.c.b16 %v1795, %v1794
        %v1805 = vsel %vm957, %v1746, 0
        %v1808 = vsel %vm957, %v1747, 0
        %v1811 = vsel %vm957, %v1748, 0
        %v1814 = vsel %vm957, %v1749, 0
        %v1817 = vsel %vm957, %v1750, 0
        %v1820 = vsel %vm957, %v1751, 0
        %v1823 = vsel %vm957, %v1752, 0
        %v1826 = vsel %vm957, %v1753, 0
        %v1829 = vsel %vm957, %v1754, 0
        %v1832 = vsel %vm957, %v1755, 0
        %v1835 = vsel %vm957, %v1756, 0
        %v1838 = vsel %vm957, %v1757, 0
        %v1841 = vsel %vm957, %v1758, 0
        %v1844 = vsel %vm957, %v1759, 0
        %v1847 = vsel %vm957, %v1760, 0
        %v1850 = vsel %vm957, %v1761, 0
        %v1853 = vsel %vm957, %v1762, 0
        %v1856 = vsel %vm957, %v1763, 0
        %v1859 = vsel %vm957, %v1764, 0
        %1861 = vmatprep.subr.bf16.mxu0 0
        %1862 = vmatpush1.bf16.msra.mxu0 %v1796
        %1863 = vmatprep.subr.bf16.mxu0 0
        %1864 = vmatpush1.bf16.msra.mxu0 %v1797
        %1865 = vmatprep.subr.bf16.mxu0 0
        %1866 = vmatpush1.bf16.msra.mxu0 %v1798
        %1867 = vmatprep.subr.bf16.mxu0 0
        %1868 = vmatpush1.bf16.msra.mxu0 %v1799
        %1869 = vmatprep.subr.bf16.mxu0 0
        %1870 = vmatpush1.bf16.msra.mxu0 0
        %1871 = vmatprep.subr.bf16.mxu0 0
        %1872 = vmatpush1.bf16.msra.mxu0 0
        %1873 = vmatprep.subr.bf16.mxu0 0
        %1874 = vmatpush1.bf16.msra.mxu0 0
        %1875 = vmatprep.subr.bf16.mxu0 0
        %1876 = vmatpush1.bf16.msra.mxu0 0
        %1877 = vmatprep.subr.bf16.mxu0 0
        %1878 = vmatpush1.bf16.msra.mxu0 0
        %1879 = vmatprep.subr.bf16.mxu0 0
        %1880 = vmatpush1.bf16.msra.mxu0 0
        %1881 = vmatprep.subr.bf16.mxu0 0
        %1882 = vmatpush1.bf16.msra.mxu0 0
        %1883 = vmatprep.subr.bf16.mxu0 0
        %1884 = vmatpush1.bf16.msra.mxu0 0
        %1885 = vmatprep.subr.bf16.mxu0 0
        %1886 = vmatpush1.bf16.msra.mxu0 0
        %1887 = vmatprep.subr.bf16.mxu0 0
        %1888 = vmatpush1.bf16.msra.mxu0 0
        %1889 = vmatprep.subr.bf16.mxu0 0
        %1890 = vmatpush1.bf16.msra.mxu0 0
        %1891 = vmatprep.subr.bf16.mxu0 0
        %1892 = vmatpush1.bf16.msra.mxu0 0
        %1893 = vmatprep.mubr.bf16.mxu0 0
        %1894 = vmatmul.mubr.bf16.gmra.mrb[0].mxu0 %v1805
        %v1895 = vpop.f32.mrb[0].mxu0
        %v1896 = vadd.f32 %v1778, %v1895
        %v1897 = vpop.f32.mrb[0].mxu0
        %v1898 = vpop.f32.mrb[0].mxu0
        %v1899 = vadd.f32 %v1778, %v1898
        %v1900 = vpop.f32.mrb[0].mxu0
        %1901 = vmatprep.mubr.bf16.mxu0 0
        %1902 = vmatmul.mubr.bf16.gmra.mrb[0].mxu0 %v1808
        %v1903 = vpop.f32.mrb[0].mxu0
        %v1904 = vadd.f32 %v1778, %v1903
        %v1905 = vpop.f32.mrb[0].mxu0
        %v1906 = vpop.f32.mrb[0].mxu0
        %v1907 = vadd.f32 %v1778, %v1906
        %v1908 = vpop.f32.mrb[0].mxu0
        %1909 = vmatprep.mubr.bf16.mxu0 0
        %1910 = vmatmul.mubr.bf16.gmra.mrb[0].mxu0 %v1811
        %v1911 = vpop.f32.mrb[0].mxu0
        %v1912 = vadd.f32 %v1778, %v1911
        %v1913 = vpop.f32.mrb[0].mxu0
        %v1914 = vpop.f32.mrb[0].mxu0
        %v1915 = vadd.f32 %v1778, %v1914
        %v1916 = vpop.f32.mrb[0].mxu0
        %1917 = vmatprep.mubr.bf16.mxu0 0
        %1918 = vmatmul.mubr.bf16.gmra.mrb[0].mxu0 %v1814
        %v1919 = vpop.f32.mrb[0].mxu0
        %v1920 = vadd.f32 %v1778, %v1919
        %v1921 = vpop.f32.mrb[0].mxu0
        %v1922 = vpop.f32.mrb[0].mxu0
        %v1923 = vadd.f32 %v1778, %v1922
        %v1924 = vpop.f32.mrb[0].mxu0
        %1925 = vmatprep.mubr.bf16.mxu0 0
        %1926 = vmatmul.mubr.bf16.gmra.mrb[0].mxu0 %v1817
        %v1927 = vpop.f32.mrb[0].mxu0
        %v1928 = vadd.f32 %v1778, %v1927
        %v1929 = vpop.f32.mrb[0].mxu0
        %v1930 = vpop.f32.mrb[0].mxu0
        %v1931 = vadd.f32 %v1778, %v1930
        %v1932 = vpop.f32.mrb[0].mxu0
        %1933 = vmatprep.mubr.bf16.mxu0 0
        %1934 = vmatmul.mubr.bf16.gmra.mrb[0].mxu0 %v1820
        %v1935 = vpop.f32.mrb[0].mxu0
        %v1936 = vadd.f32 %v1778, %v1935
        %v1937 = vpop.f32.mrb[0].mxu0
        %v1938 = vpop.f32.mrb[0].mxu0
        %v1939 = vadd.f32 %v1778, %v1938
        %v1940 = vpop.f32.mrb[0].mxu0
        %1941 = vmatprep.mubr.bf16.mxu0 0
        %1942 = vmatmul.mubr.bf16.gmra.mrb[0].mxu0 %v1823
        %v1943 = vpop.f32.mrb[0].mxu0
        %v1944 = vadd.f32 %v1778, %v1943
        %v1945 = vpop.f32.mrb[0].mxu0
        %v1946 = vpop.f32.mrb[0].mxu0
        %v1947 = vadd.f32 %v1778, %v1946
        %v1948 = vpop.f32.mrb[0].mxu0
        %1949 = vmatprep.mubr.bf16.mxu0 0
        %1950 = vmatmul.mubr.bf16.gmra.mrb[0].mxu0 %v1826
        %v1951 = vpop.f32.mrb[0].mxu0
        %v1952 = vadd.f32 %v1778, %v1951
        %v1953 = vpop.f32.mrb[0].mxu0
        %v1954 = vpop.f32.mrb[0].mxu0
        %v1955 = vadd.f32 %v1778, %v1954
        %v1956 = vpop.f32.mrb[0].mxu0
        %1957 = vmatprep.mubr.bf16.mxu0 0
        %1958 = vmatmul.mubr.bf16.gmra.mrb[0].mxu0 %v1829
        %v1959 = vpop.f32.mrb[0].mxu0
        %v1960 = vadd.f32 %v1778, %v1959
        %v1961 = vpop.f32.mrb[0].mxu0
        %v1962 = vpop.f32.mrb[0].mxu0
        %v1963 = vadd.f32 %v1778, %v1962
        %v1964 = vpop.f32.mrb[0].mxu0
        %1965 = vmatprep.mubr.bf16.mxu0 0
        %1966 = vmatmul.mubr.bf16.gmra.mrb[0].mxu0 %v1832
        %v1967 = vpop.f32.mrb[0].mxu0
        %v1968 = vadd.f32 %v1778, %v1967
        %v1969 = vpop.f32.mrb[0].mxu0
        %v1970 = vpop.f32.mrb[0].mxu0
        %v1971 = vadd.f32 %v1778, %v1970
        %v1972 = vpop.f32.mrb[0].mxu0
        %1973 = vmatprep.mubr.bf16.mxu0 0
        %1974 = vmatmul.mubr.bf16.gmra.mrb[0].mxu0 %v1835
        %v1975 = vpop.f32.mrb[0].mxu0
        %v1976 = vadd.f32 %v1778, %v1975
        %v1977 = vpop.f32.mrb[0].mxu0
        %v1978 = vpop.f32.mrb[0].mxu0
        %v1979 = vadd.f32 %v1778, %v1978
        %v1980 = vpop.f32.mrb[0].mxu0
        %1981 = vmatprep.mubr.bf16.mxu0 0
        %1982 = vmatmul.mubr.bf16.gmra.mrb[0].mxu0 %v1838
        %v1983 = vpop.f32.mrb[0].mxu0
        %v1984 = vadd.f32 %v1778, %v1983
        %v1985 = vpop.f32.mrb[0].mxu0
        %v1986 = vpop.f32.mrb[0].mxu0
        %v1987 = vadd.f32 %v1778, %v1986
        %v1988 = vpop.f32.mrb[0].mxu0
        %1989 = vmatprep.mubr.bf16.mxu0 0
        %1990 = vmatmul.mubr.bf16.gmra.mrb[0].mxu0 %v1841
        %v1991 = vpop.f32.mrb[0].mxu0
        %v1992 = vadd.f32 %v1778, %v1991
        %v1993 = vpop.f32.mrb[0].mxu0
        %v1994 = vpop.f32.mrb[0].mxu0
        %v1995 = vadd.f32 %v1778, %v1994
        %v1996 = vpop.f32.mrb[0].mxu0
        %1997 = vmatprep.mubr.bf16.mxu0 0
        %1998 = vmatmul.mubr.bf16.gmra.mrb[0].mxu0 %v1844
        %v1999 = vpop.f32.mrb[0].mxu0
        %v2000 = vadd.f32 %v1778, %v1999
        %v2001 = vpop.f32.mrb[0].mxu0
        %v2002 = vpop.f32.mrb[0].mxu0
        %v2003 = vadd.f32 %v1778, %v2002
        %v2004 = vpop.f32.mrb[0].mxu0
        %2005 = vmatprep.mubr.bf16.mxu0 0
        %2006 = vmatmul.mubr.bf16.gmra.mrb[0].mxu0 %v1847
        %v2007 = vpop.f32.mrb[0].mxu0
        %v2008 = vadd.f32 %v1778, %v2007
        %v2009 = vpop.f32.mrb[0].mxu0
        %v2010 = vpop.f32.mrb[0].mxu0
        %v2011 = vadd.f32 %v1778, %v2010
        %v2012 = vpop.f32.mrb[0].mxu0
        %2013 = vmatprep.mubr.bf16.mxu0 0
        %2014 = vmatmul.mubr.bf16.gmra.mrb[0].mxu0 %v1850
        %v2015 = vpop.f32.mrb[0].mxu0
        %v2016 = vadd.f32 %v1778, %v2015
        %v2017 = vpop.f32.mrb[0].mxu0
        %v2018 = vpop.f32.mrb[0].mxu0
        %v2019 = vadd.f32 %v1778, %v2018
        %v2020 = vpop.f32.mrb[0].mxu0
        %2021 = vmatprep.mubr.bf16.mxu0 0
        %2022 = vmatmul.mubr.bf16.gmra.mrb[0].mxu0 %v1853
        %v2023 = vpop.f32.mrb[0].mxu0
        %v2024 = vadd.f32 %v1778, %v2023
        %v2025 = vpop.f32.mrb[0].mxu0
        %v2026 = vpop.f32.mrb[0].mxu0
        %v2027 = vadd.f32 %v1778, %v2026
        %v2028 = vpop.f32.mrb[0].mxu0
        %2029 = vmatprep.mubr.bf16.mxu0 0
        %2030 = vmatmul.mubr.bf16.gmra.mrb[0].mxu0 %v1856
        %v2031 = vpop.f32.mrb[0].mxu0
        %v2032 = vadd.f32 %v1778, %v2031
        %v2033 = vpop.f32.mrb[0].mxu0
        %v2034 = vpop.f32.mrb[0].mxu0
        %v2035 = vadd.f32 %v1778, %v2034
        %v2036 = vpop.f32.mrb[0].mxu0
        %2037 = vmatprep.mubr.bf16.mxu0 0
        %2038 = vmatmul.mubr.bf16.gmra.mrb[0].mxu0 %v1859
        %v2039 = vpop.f32.mrb[0].mxu0
        %v2040 = vadd.f32 %v1778, %v2039
        %v2041 = vpop.f32.mrb[0].mxu0
        %v2042 = vpop.f32.mrb[0].mxu0
        %v2043 = vadd.f32 %v1778, %v2042
        %v2044 = vpop.f32.mrb[0].mxu0
        %2045 = vdwg.mxu0
        %v2046 = vmax.f32 %v1896, 0.0
        %v2047 = vmax.f32 %v1899, 0.0
        %v2048 = vmax.f32 %v1904, 0.0
        %v2049 = vmax.f32 %v1907, 0.0
        %v2050 = vmax.f32 %v1912, 0.0
        %v2051 = vmax.f32 %v1915, 0.0
        %v2052 = vmax.f32 %v1920, 0.0
        %v2053 = vmax.f32 %v1923, 0.0
        %v2054 = vmax.f32 %v1928, 0.0
        %v2055 = vmax.f32 %v1931, 0.0
        %v2056 = vmax.f32 %v1936, 0.0
        %v2057 = vmax.f32 %v1939, 0.0
        %v2058 = vmax.f32 %v1944, 0.0
        %v2059 = vmax.f32 %v1947, 0.0
        %v2060 = vmax.f32 %v1952, 0.0
        %v2061 = vmax.f32 %v1955, 0.0
        %v2062 = vmax.f32 %v1960, 0.0
        %v2063 = vmax.f32 %v1963, 0.0
        %v2064 = vmax.f32 %v1968, 0.0
        %v2065 = vmax.f32 %v1971, 0.0
        %v2066 = vmax.f32 %v1976, 0.0
        %v2067 = vmax.f32 %v1979, 0.0
        %v2068 = vmax.f32 %v1984, 0.0
        %v2069 = vmax.f32 %v1987, 0.0
        %v2070 = vmax.f32 %v1992, 0.0
        %v2071 = vmax.f32 %v1995, 0.0
        %v2072 = vmax.f32 %v2000, 0.0
        %v2073 = vmax.f32 %v2003, 0.0
        %v2074 = vmax.f32 %v2008, 0.0
        %v2075 = vmax.f32 %v2011, 0.0
        %v2076 = vmax.f32 %v2016, 0.0
        %v2077 = vmax.f32 %v2019, 0.0
        %v2078 = vmax.f32 %v2024, 0.0
        %v2079 = vmax.f32 %v2027, 0.0
        %v2080 = vmax.f32 %v2032, 0.0
        %v2081 = vmax.f32 %v2035, 0.0
        %v2082 = vmax.f32 %v2040, 0.0
        %v2083 = vmax.f32 %v2043, 0.0
        %2084 = vst.msk [vmem:[%s389] sm:$0xff] %vm957, %v2046
        %2085 = vst.msk [vmem:[%s389 + $0x8] sm:$0xff] %vm957, %v2047
        %2086 = vst.msk [vmem:[%s389 + $0x10] sm:$0xff] %vm957, %v2048
        %2087 = vst.msk [vmem:[%s389 + $0x18] sm:$0xff] %vm957, %v2049
        %2088 = vst.msk [vmem:[%s389 + $0x20] sm:$0xff] %vm957, %v2050
        %2089 = vst.msk [vmem:[%s389 + $0x28] sm:$0xff] %vm957, %v2051
        %2090 = vst.msk [vmem:[%s389 + $0x30] sm:$0xff] %vm957, %v2052
        %2091 = vst.msk [vmem:[%s389 + $0x38] sm:$0xff] %vm957, %v2053
        %2092 = vst.msk [vmem:[%s389 + $0x40] sm:$0xff] %vm957, %v2054
        %2093 = vst.msk [vmem:[%s389 + $0x48] sm:$0xff] %vm957, %v2055
        %2094 = vst.msk [vmem:[%s389 + $0x50] sm:$0xff] %vm957, %v2056
        %2095 = vst.msk [vmem:[%s389 + $0x58] sm:$0xff] %vm957, %v2057
        %2096 = vst.msk [vmem:[%s389 + $0x60] sm:$0xff] %vm957, %v2058
        %2097 = vst.msk [vmem:[%s389 + $0x68] sm:$0xff] %vm957, %v2059
        %2098 = vst.msk [vmem:[%s389 + $0x70] sm:$0xff] %vm957, %v2060
        %2099 = vst.msk [vmem:[%s389 + $0x78] sm:$0xff] %vm957, %v2061
        %2100 = vst.msk [vmem:[%s389 + $0x80] sm:$0xff] %vm957, %v2062
        %2101 = vst.msk [vmem:[%s389 + $0x88] sm:$0xff] %vm957, %v2063
        %2102 = vst.msk [vmem:[%s389 + $0x90] sm:$0xff] %vm957, %v2064
        %2103 = vst.msk [vmem:[%s389 + $0x98] sm:$0xff] %vm957, %v2065
        %2104 = vst.msk [vmem:[%s389 + $0xa0] sm:$0xff] %vm957, %v2066
        %2105 = vst.msk [vmem:[%s389 + $0xa8] sm:$0xff] %vm957, %v2067
        %2106 = vst.msk [vmem:[%s389 + $0xb0] sm:$0xff] %vm957, %v2068
        %2107 = vst.msk [vmem:[%s389 + $0xb8] sm:$0xff] %vm957, %v2069
        %2108 = vst.msk [vmem:[%s389 + $0xc0] sm:$0xff] %vm957, %v2070
        %2109 = vst.msk [vmem:[%s389 + $0xc8] sm:$0xff] %vm957, %v2071
        %2110 = vst.msk [vmem:[%s389 + $0xd0] sm:$0xff] %vm957, %v2072
        %2111 = vst.msk [vmem:[%s389 + $0xd8] sm:$0xff] %vm957, %v2073
        %2112 = vst.msk [vmem:[%s389 + $0xe0] sm:$0xff] %vm957, %v2074
        %2113 = vst.msk [vmem:[%s389 + $0xe8] sm:$0xff] %vm957, %v2075
        %2114 = vst.msk [vmem:[%s389 + $0xf0] sm:$0xff] %vm957, %v2076
        %2115 = vst.msk [vmem:[%s389 + $0xf8] sm:$0xff] %vm957, %v2077
        %2116 = vst.msk [vmem:[%s389 + $0x100] sm:$0xff] %vm957, %v2078
        %2117 = vst.msk [vmem:[%s389 + $0x108] sm:$0xff] %vm957, %v2079
        %2118 = vst.msk [vmem:[%s389 + $0x110] sm:$0xff] %vm957, %v2080
        %2119 = vst.msk [vmem:[%s389 + $0x118] sm:$0xff] %vm957, %v2081
        %2120 = vst.msk [vmem:[%s389 + $0x120] sm:$0xff] %vm957, %v2082
        %2121 = vst.msk [vmem:[%s389 + $0x128] sm:$0xff] %vm957, %v2083
        %s2122 = sand.u32 %s249, 1
        %s2123 = sand.u32 %s249, 1
        %s2124 = smul.addr %s2123, 304
        %s2125 = scalar_lea.vmem [#allocation3], %s2124
        // Predicated region
        $region61: #{tpu_custom_call.1} parent=59 // pred_check
          %p2126 = pneg %p259
        $region62: #{tpu_custom_call.1} parent=59 // pred_check_branch
          %2128 = sbr.rel (%p2126) target = $region64
        $region63: #{tpu_custom_call.1} parent=59 // pred_region
          %s2129 = smul.u32 38, %s21
          %s2130 = ssub.s32 75, %s2129
          %p2131 = scmp.lt.s32.totalorder %s2130, 38
          %s2132 = scalar_select %p2131, %s2130, 38
          %s2133 = smul.u32 128, %s2132
          %p2134 = scmp.ne.s32.totalorder 0, %s2133
          %s2135 = smul.addr %s2129, 8
          %s2136 = scalar_lea.vmem %s10, %s2135
          // Predicated region
          $region65: #{tpu_custom_call.1} parent=63 // pred_check
            %p2137 = pneg %p2134
          $region66: #{tpu_custom_call.1} parent=63 // pred_check_branch
            %2139 = sbr.rel (%p2137) target = $region68
          $region67: #{tpu_custom_call.1} parent=63 // pred_region
            // Predicated region
            $region69: #{tpu_custom_call.1} parent=67 // pred_check
              _
            $region70: #{tpu_custom_call.1} parent=67 // pred_check_branch
              %2141 = sbr.rel (0) target = $region72
            $region71: #{tpu_custom_call.1} parent=67 // pred_region
              // Predicated region
              $region91: #{tpu_custom_call.1} parent=71 // pred_check
                _
              $region92: #{tpu_custom_call.1} parent=71 // pred_check_branch
                %2265 = sbr.rel (0) target = $region94
              $region93: #{tpu_custom_call.1} parent=71 // pred_region
                %s2266 = sdiv.u32.pop %s2132, 38
                %s2267 = srem.u32.pop %s2132, 38
                // While loop
                $region95: #{tpu_custom_call.1} parent=93 // loop_pre_header
                  _
                $region96: #{tpu_custom_call.1} parent=93 // loop_header
                  %s2269 = sphi 0, %s2271
                  %p2270 = scmp.ge.s32.totalorder %s2269, %s2266
                  %s2274 = sphi 0, %s2355
                  %s2275 = sphi %s2125, %s2358
                  %s2276 = sphi %s2136, %s2359
                $region97: #{tpu_custom_call.1} parent=93 // loop_header_branch
                  %2273 = sbr.rel (%p2270) target = $region101
                $region98: #{tpu_custom_call.1} parent=93 // loop_body
                  %v2277 = vld [vmem:[%s2275] sm:$0xff]
                  %2278 = vst [vmem:[%s2276] sm:$0xff] %v2277
                  %v2279 = vld [vmem:[%s2275 + $0x8] sm:$0xff]
                  %2280 = vst [vmem:[%s2276 + $0x8] sm:$0xff] %v2279
                  %v2281 = vld [vmem:[%s2275 + $0x10] sm:$0xff]
                  %2282 = vst [vmem:[%s2276 + $0x10] sm:$0xff] %v2281
                  %v2283 = vld [vmem:[%s2275 + $0x18] sm:$0xff]
                  %2284 = vst [vmem:[%s2276 + $0x18] sm:$0xff] %v2283
                  %v2285 = vld [vmem:[%s2275 + $0x20] sm:$0xff]
                  %2286 = vst [vmem:[%s2276 + $0x20] sm:$0xff] %v2285
                  %v2287 = vld [vmem:[%s2275 + $0x28] sm:$0xff]
                  %2288 = vst [vmem:[%s2276 + $0x28] sm:$0xff] %v2287
                  %v2289 = vld [vmem:[%s2275 + $0x30] sm:$0xff]
                  %2290 = vst [vmem:[%s2276 + $0x30] sm:$0xff] %v2289
                  %v2291 = vld [vmem:[%s2275 + $0x38] sm:$0xff]
                  %2292 = vst [vmem:[%s2276 + $0x38] sm:$0xff] %v2291
                  %v2293 = vld [vmem:[%s2275 + $0x40] sm:$0xff]
                  %2294 = vst [vmem:[%s2276 + $0x40] sm:$0xff] %v2293
                  %v2295 = vld [vmem:[%s2275 + $0x48] sm:$0xff]
                  %2296 = vst [vmem:[%s2276 + $0x48] sm:$0xff] %v2295
                  %v2297 = vld [vmem:[%s2275 + $0x50] sm:$0xff]
                  %2298 = vst [vmem:[%s2276 + $0x50] sm:$0xff] %v2297
                  %v2299 = vld [vmem:[%s2275 + $0x58] sm:$0xff]
                  %2300 = vst [vmem:[%s2276 + $0x58] sm:$0xff] %v2299
                  %v2301 = vld [vmem:[%s2275 + $0x60] sm:$0xff]
                  %2302 = vst [vmem:[%s2276 + $0x60] sm:$0xff] %v2301
                  %v2303 = vld [vmem:[%s2275 + $0x68] sm:$0xff]
                  %2304 = vst [vmem:[%s2276 + $0x68] sm:$0xff] %v2303
                  %v2305 = vld [vmem:[%s2275 + $0x70] sm:$0xff]
                  %2306 = vst [vmem:[%s2276 + $0x70] sm:$0xff] %v2305
                  %v2307 = vld [vmem:[%s2275 + $0x78] sm:$0xff]
                  %2308 = vst [vmem:[%s2276 + $0x78] sm:$0xff] %v2307
                  %v2309 = vld [vmem:[%s2275 + $0x80] sm:$0xff]
                  %2310 = vst [vmem:[%s2276 + $0x80] sm:$0xff] %v2309
                  %v2311 = vld [vmem:[%s2275 + $0x88] sm:$0xff]
                  %2312 = vst [vmem:[%s2276 + $0x88] sm:$0xff] %v2311
                  %v2313 = vld [vmem:[%s2275 + $0x90] sm:$0xff]
                  %2314 = vst [vmem:[%s2276 + $0x90] sm:$0xff] %v2313
                  %v2315 = vld [vmem:[%s2275 + $0x98] sm:$0xff]
                  %2316 = vst [vmem:[%s2276 + $0x98] sm:$0xff] %v2315
                  %v2317 = vld [vmem:[%s2275 + $0xa0] sm:$0xff]
                  %2318 = vst [vmem:[%s2276 + $0xa0] sm:$0xff] %v2317
                  %v2319 = vld [vmem:[%s2275 + $0xa8] sm:$0xff]
                  %2320 = vst [vmem:[%s2276 + $0xa8] sm:$0xff] %v2319
                  %v2321 = vld [vmem:[%s2275 + $0xb0] sm:$0xff]
                  %2322 = vst [vmem:[%s2276 + $0xb0] sm:$0xff] %v2321
                  %v2323 = vld [vmem:[%s2275 + $0xb8] sm:$0xff]
                  %2324 = vst [vmem:[%s2276 + $0xb8] sm:$0xff] %v2323
                  %v2325 = vld [vmem:[%s2275 + $0xc0] sm:$0xff]
                  %2326 = vst [vmem:[%s2276 + $0xc0] sm:$0xff] %v2325
                  %v2327 = vld [vmem:[%s2275 + $0xc8] sm:$0xff]
                  %2328 = vst [vmem:[%s2276 + $0xc8] sm:$0xff] %v2327
                  %v2329 = vld [vmem:[%s2275 + $0xd0] sm:$0xff]
                  %2330 = vst [vmem:[%s2276 + $0xd0] sm:$0xff] %v2329
                  %v2331 = vld [vmem:[%s2275 + $0xd8] sm:$0xff]
                  %2332 = vst [vmem:[%s2276 + $0xd8] sm:$0xff] %v2331
                  %v2333 = vld [vmem:[%s2275 + $0xe0] sm:$0xff]
                  %2334 = vst [vmem:[%s2276 + $0xe0] sm:$0xff] %v2333
                  %v2335 = vld [vmem:[%s2275 + $0xe8] sm:$0xff]
                  %2336 = vst [vmem:[%s2276 + $0xe8] sm:$0xff] %v2335
                  %v2337 = vld [vmem:[%s2275 + $0xf0] sm:$0xff]
                  %2338 = vst [vmem:[%s2276 + $0xf0] sm:$0xff] %v2337
                  %v2339 = vld [vmem:[%s2275 + $0xf8] sm:$0xff]
                  %2340 = vst [vmem:[%s2276 + $0xf8] sm:$0xff] %v2339
                  %v2341 = vld [vmem:[%s2275 + $0x100] sm:$0xff]
                  %2342 = vst [vmem:[%s2276 + $0x100] sm:$0xff] %v2341
                  %v2343 = vld [vmem:[%s2275 + $0x108] sm:$0xff]
                  %2344 = vst [vmem:[%s2276 + $0x108] sm:$0xff] %v2343
                  %v2345 = vld [vmem:[%s2275 + $0x110] sm:$0xff]
                  %2346 = vst [vmem:[%s2276 + $0x110] sm:$0xff] %v2345
                  %v2347 = vld [vmem:[%s2275 + $0x118] sm:$0xff]
                  %2348 = vst [vmem:[%s2276 + $0x118] sm:$0xff] %v2347
                  %v2349 = vld [vmem:[%s2275 + $0x120] sm:$0xff]
                  %2350 = vst [vmem:[%s2276 + $0x120] sm:$0xff] %v2349
                  %v2351 = vld [vmem:[%s2275 + $0x128] sm:$0xff]
                  %2352 = vst [vmem:[%s2276 + $0x128] sm:$0xff] %v2351
                  %s2353 = sadd.s32 1, %s2274
                  %p2354 = scmp.ge.s32.totalorder %s2353, %s2266
                  %s2355 = scalar_select %p2354, 0, %s2353
                  %s2356 = smul.u32 %s2355, 304
                  %s2357 = smul.u32 %s2355, 304
                  %s2358 = scalar_lea.vmem %s2125, %s2356 [#allocation3]
                  %s2359 = scalar_lea.vmem %s2136, %s2357
                $region99: #{tpu_custom_call.1} parent=93 // loop_footer
                  %s2271 = sadd.s32 %s2269, 1
                $region100: #{tpu_custom_call.1} parent=93 // loop_footer_branch
                  %2268 = sbr.rel target = $region96
                $region101: #{tpu_custom_call.1} parent=93 // loop_exit
                  _
                %s2360 = sdiv.u32.pop %s2132, 38
                %s2361 = srem.u32.pop %s2132, 38
                %s2362 = smul.u32 %s2360, 38
                %s2363 = smul.u32 8, %s2362
                %s2364 = scalar_lea.vmem %s2125, %s2363 [#allocation3]
                %s2365 = smul.u32 8, %s2362
                %s2366 = scalar_lea.vmem %s2136, %s2365
                // While loop
                $region102: #{tpu_custom_call.1} parent=93 // loop_pre_header
                  _
                $region103: #{tpu_custom_call.1} parent=93 // loop_header
                  %s2368 = sphi 0, %s2370
                  %p2369 = scmp.ge.s32.totalorder %s2368, %s2361
                  %s2373 = sphi 0, %s2380
                  %s2374 = sphi %s2364, %s2383
                  %s2375 = sphi %s2366, %s2384
                $region104: #{tpu_custom_call.1} parent=93 // loop_header_branch
                  %2372 = sbr.rel (%p2369) target = $region108
                $region105: #{tpu_custom_call.1} parent=93 // loop_body
                  %v2376 = vld [vmem:[%s2374] sm:$0xff]
                  %2377 = vst [vmem:[%s2375] sm:$0xff] %v2376
                  %s2378 = sadd.s32 1, %s2373
                  %p2379 = scmp.ge.s32.totalorder %s2378, %s2361
                  %s2380 = scalar_select %p2379, 0, %s2378
                  %s2381 = smul.u32 %s2380, 8
                  %s2382 = smul.u32 %s2380, 8
                  %s2383 = scalar_lea.vmem %s2364, %s2381 [#allocation3]
                  %s2384 = scalar_lea.vmem %s2366, %s2382
                $region106: #{tpu_custom_call.1} parent=93 // loop_footer
                  %s2370 = sadd.s32 %s2368, 1
                $region107: #{tpu_custom_call.1} parent=93 // loop_footer_branch
                  %2367 = sbr.rel target = $region103
                $region108: #{tpu_custom_call.1} parent=93 // loop_exit
                  _
              $region94: #{tpu_custom_call.1} parent=71 // pred_fallthru
                _
              // Predicated region
              $region109: #{tpu_custom_call.1} parent=71 // pred_check
                _
              $region110: #{tpu_custom_call.1} parent=71 // pred_check_branch
                %2386 = sbr.rel target = $region112
              $region111: #{tpu_custom_call.1} parent=71 // pred_region
                _
              $region112: #{tpu_custom_call.1} parent=71 // pred_fallthru
                _
            $region72: #{tpu_custom_call.1} parent=67 // pred_fallthru
              _
            // Predicated region
            $region73: #{tpu_custom_call.1} parent=67 // pred_check
              _
            $region74: #{tpu_custom_call.1} parent=67 // pred_check_branch
              %2143 = sbr.rel target = $region76
            $region75: #{tpu_custom_call.1} parent=67 // pred_region
              %s2145 = sdiv.u32.pop %s2132, 38
              %s2146 = srem.u32.pop %s2132, 38
              // While loop
              $region77: #{tpu_custom_call.1} parent=75 // loop_pre_header
                _
              $region78: #{tpu_custom_call.1} parent=75 // loop_header
                %s2148 = sphi 0, %s2150
                %p2149 = scmp.ge.s32.totalorder %s2148, %s2145
                %s2153 = sphi 0, %s2234
                %s2154 = sphi %s2125, %s2237
                %s2155 = sphi %s2136, %s2238
              $region79: #{tpu_custom_call.1} parent=75 // loop_header_branch
                %2152 = sbr.rel (%p2149) target = $region83
              $region80: #{tpu_custom_call.1} parent=75 // loop_body
                %v2156 = vld [vmem:[%s2154] sm:$0xff]
                %2157 = vst [vmem:[%s2155] sm:$0xff] %v2156
                %v2158 = vld [vmem:[%s2154 + $0x8] sm:$0xff]
                %2159 = vst [vmem:[%s2155 + $0x8] sm:$0xff] %v2158
                %v2160 = vld [vmem:[%s2154 + $0x10] sm:$0xff]
                %2161 = vst [vmem:[%s2155 + $0x10] sm:$0xff] %v2160
                %v2162 = vld [vmem:[%s2154 + $0x18] sm:$0xff]
                %2163 = vst [vmem:[%s2155 + $0x18] sm:$0xff] %v2162
                %v2164 = vld [vmem:[%s2154 + $0x20] sm:$0xff]
                %2165 = vst [vmem:[%s2155 + $0x20] sm:$0xff] %v2164
                %v2166 = vld [vmem:[%s2154 + $0x28] sm:$0xff]
                %2167 = vst [vmem:[%s2155 + $0x28] sm:$0xff] %v2166
                %v2168 = vld [vmem:[%s2154 + $0x30] sm:$0xff]
                %2169 = vst [vmem:[%s2155 + $0x30] sm:$0xff] %v2168
                %v2170 = vld [vmem:[%s2154 + $0x38] sm:$0xff]
                %2171 = vst [vmem:[%s2155 + $0x38] sm:$0xff] %v2170
                %v2172 = vld [vmem:[%s2154 + $0x40] sm:$0xff]
                %2173 = vst [vmem:[%s2155 + $0x40] sm:$0xff] %v2172
                %v2174 = vld [vmem:[%s2154 + $0x48] sm:$0xff]
                %2175 = vst [vmem:[%s2155 + $0x48] sm:$0xff] %v2174
                %v2176 = vld [vmem:[%s2154 + $0x50] sm:$0xff]
                %2177 = vst [vmem:[%s2155 + $0x50] sm:$0xff] %v2176
                %v2178 = vld [vmem:[%s2154 + $0x58] sm:$0xff]
                %2179 = vst [vmem:[%s2155 + $0x58] sm:$0xff] %v2178
                %v2180 = vld [vmem:[%s2154 + $0x60] sm:$0xff]
                %2181 = vst [vmem:[%s2155 + $0x60] sm:$0xff] %v2180
                %v2182 = vld [vmem:[%s2154 + $0x68] sm:$0xff]
                %2183 = vst [vmem:[%s2155 + $0x68] sm:$0xff] %v2182
                %v2184 = vld [vmem:[%s2154 + $0x70] sm:$0xff]
                %2185 = vst [vmem:[%s2155 + $0x70] sm:$0xff] %v2184
                %v2186 = vld [vmem:[%s2154 + $0x78] sm:$0xff]
                %2187 = vst [vmem:[%s2155 + $0x78] sm:$0xff] %v2186
                %v2188 = vld [vmem:[%s2154 + $0x80] sm:$0xff]
                %2189 = vst [vmem:[%s2155 + $0x80] sm:$0xff] %v2188
                %v2190 = vld [vmem:[%s2154 + $0x88] sm:$0xff]
                %2191 = vst [vmem:[%s2155 + $0x88] sm:$0xff] %v2190
                %v2192 = vld [vmem:[%s2154 + $0x90] sm:$0xff]
                %2193 = vst [vmem:[%s2155 + $0x90] sm:$0xff] %v2192
                %v2194 = vld [vmem:[%s2154 + $0x98] sm:$0xff]
                %2195 = vst [vmem:[%s2155 + $0x98] sm:$0xff] %v2194
                %v2196 = vld [vmem:[%s2154 + $0xa0] sm:$0xff]
                %2197 = vst [vmem:[%s2155 + $0xa0] sm:$0xff] %v2196
                %v2198 = vld [vmem:[%s2154 + $0xa8] sm:$0xff]
                %2199 = vst [vmem:[%s2155 + $0xa8] sm:$0xff] %v2198
                %v2200 = vld [vmem:[%s2154 + $0xb0] sm:$0xff]
                %2201 = vst [vmem:[%s2155 + $0xb0] sm:$0xff] %v2200
                %v2202 = vld [vmem:[%s2154 + $0xb8] sm:$0xff]
                %2203 = vst [vmem:[%s2155 + $0xb8] sm:$0xff] %v2202
                %v2204 = vld [vmem:[%s2154 + $0xc0] sm:$0xff]
                %2205 = vst [vmem:[%s2155 + $0xc0] sm:$0xff] %v2204
                %v2206 = vld [vmem:[%s2154 + $0xc8] sm:$0xff]
                %2207 = vst [vmem:[%s2155 + $0xc8] sm:$0xff] %v2206
                %v2208 = vld [vmem:[%s2154 + $0xd0] sm:$0xff]
                %2209 = vst [vmem:[%s2155 + $0xd0] sm:$0xff] %v2208
                %v2210 = vld [vmem:[%s2154 + $0xd8] sm:$0xff]
                %2211 = vst [vmem:[%s2155 + $0xd8] sm:$0xff] %v2210
                %v2212 = vld [vmem:[%s2154 + $0xe0] sm:$0xff]
                %2213 = vst [vmem:[%s2155 + $0xe0] sm:$0xff] %v2212
                %v2214 = vld [vmem:[%s2154 + $0xe8] sm:$0xff]
                %2215 = vst [vmem:[%s2155 + $0xe8] sm:$0xff] %v2214
                %v2216 = vld [vmem:[%s2154 + $0xf0] sm:$0xff]
                %2217 = vst [vmem:[%s2155 + $0xf0] sm:$0xff] %v2216
                %v2218 = vld [vmem:[%s2154 + $0xf8] sm:$0xff]
                %2219 = vst [vmem:[%s2155 + $0xf8] sm:$0xff] %v2218
                %v2220 = vld [vmem:[%s2154 + $0x100] sm:$0xff]
                %2221 = vst [vmem:[%s2155 + $0x100] sm:$0xff] %v2220
                %v2222 = vld [vmem:[%s2154 + $0x108] sm:$0xff]
                %2223 = vst [vmem:[%s2155 + $0x108] sm:$0xff] %v2222
                %v2224 = vld [vmem:[%s2154 + $0x110] sm:$0xff]
                %2225 = vst [vmem:[%s2155 + $0x110] sm:$0xff] %v2224
                %v2226 = vld [vmem:[%s2154 + $0x118] sm:$0xff]
                %2227 = vst [vmem:[%s2155 + $0x118] sm:$0xff] %v2226
                %v2228 = vld [vmem:[%s2154 + $0x120] sm:$0xff]
                %2229 = vst [vmem:[%s2155 + $0x120] sm:$0xff] %v2228
                %v2230 = vld [vmem:[%s2154 + $0x128] sm:$0xff]
                %2231 = vst [vmem:[%s2155 + $0x128] sm:$0xff] %v2230
                %s2232 = sadd.s32 1, %s2153
                %p2233 = scmp.ge.s32.totalorder %s2232, %s2145
                %s2234 = scalar_select %p2233, 0, %s2232
                %s2235 = smul.u32 %s2234, 304
                %s2236 = smul.u32 %s2234, 304
                %s2237 = scalar_lea.vmem %s2125, %s2235 [#allocation3]
                %s2238 = scalar_lea.vmem %s2136, %s2236
              $region81: #{tpu_custom_call.1} parent=75 // loop_footer
                %s2150 = sadd.s32 %s2148, 1
              $region82: #{tpu_custom_call.1} parent=75 // loop_footer_branch
                %2147 = sbr.rel target = $region78
              $region83: #{tpu_custom_call.1} parent=75 // loop_exit
                _
              %s2239 = sdiv.u32.pop %s2132, 38
              %s2240 = srem.u32.pop %s2132, 38
              %s2241 = smul.u32 %s2239, 38
              %s2242 = smul.u32 8, %s2241
              %s2243 = scalar_lea.vmem %s2125, %s2242 [#allocation3]
              %s2244 = smul.u32 8, %s2241
              %s2245 = scalar_lea.vmem %s2136, %s2244
              // While loop
              $region84: #{tpu_custom_call.1} parent=75 // loop_pre_header
                _
              $region85: #{tpu_custom_call.1} parent=75 // loop_header
                %s2247 = sphi 0, %s2249
                %p2248 = scmp.ge.s32.totalorder %s2247, %s2240
                %s2252 = sphi 0, %s2259
                %s2253 = sphi %s2243, %s2262
                %s2254 = sphi %s2245, %s2263
              $region86: #{tpu_custom_call.1} parent=75 // loop_header_branch
                %2251 = sbr.rel (%p2248) target = $region90
              $region87: #{tpu_custom_call.1} parent=75 // loop_body
                %v2255 = vld [vmem:[%s2253] sm:$0xff]
                %2256 = vst [vmem:[%s2254] sm:$0xff] %v2255
                %s2257 = sadd.s32 1, %s2252
                %p2258 = scmp.ge.s32.totalorder %s2257, %s2240
                %s2259 = scalar_select %p2258, 0, %s2257
                %s2260 = smul.u32 %s2259, 8
                %s2261 = smul.u32 %s2259, 8
                %s2262 = scalar_lea.vmem %s2243, %s2260 [#allocation3]
                %s2263 = scalar_lea.vmem %s2245, %s2261
              $region88: #{tpu_custom_call.1} parent=75 // loop_footer
                %s2249 = sadd.s32 %s2247, 1
              $region89: #{tpu_custom_call.1} parent=75 // loop_footer_branch
                %2246 = sbr.rel target = $region85
              $region90: #{tpu_custom_call.1} parent=75 // loop_exit
                _
            $region76: #{tpu_custom_call.1} parent=67 // pred_fallthru
              _
          $region68: #{tpu_custom_call.1} parent=63 // pred_fallthru
            _
          %2387 = vnop
        $region64: #{tpu_custom_call.1} parent=59 // pred_fallthru
          _
      $region60: #{tpu_custom_call.1} parent=5 // pred_fallthru
        _
      %p2388 = scmp.le.s32.totalorder 2, %s16
      // Predicated region
      $region113: #{tpu_custom_call.1} parent=5 // pred_check
        %p2389 = pneg %p2388
      $region114: #{tpu_custom_call.1} parent=5 // pred_check_branch
        %2391 = sbr.rel (%p2389) target = $region116
      $region115: #{tpu_custom_call.1} parent=5 // pred_region
        %s2392 = ssub.s32 %s16, 2
        // Predicated region
        $region117: #{tpu_custom_call.1} parent=115 // pred_check
          %p2393 = pneg %p265
        $region118: #{tpu_custom_call.1} parent=115 // pred_check_branch
          %2395 = sbr.rel (%p2393) target = $region120
        $region119: #{tpu_custom_call.1} parent=115 // pred_region
          %s2396 = sand.u32 %s250, 1
          %s2397 = sand.u32 %s250, 1
          %s2398 = smul.addr %s2397, 304
          %s2399 = scalar_lea.vmem [#allocation3], %s2398
        $region120: #{tpu_custom_call.1} parent=115 // pred_fallthru
          _
      $region116: #{tpu_custom_call.1} parent=5 // pred_fallthru
        _
    $region6: #{tpu_custom_call.1} parent=1 // loop_footer
      %s20 = sadd.s32 1, %s16
    $region7: #{tpu_custom_call.1} parent=1 // loop_footer_branch
      %15 = sbr.rel target = $region3
    $region8: #{tpu_custom_call.1} parent=1 // loop_exit
      _

// kernel: tpu_custom_call.1
$region0: #{tpu_custom_call.1}
  #allocation0 [shape = 'u32[]', space=smem, size = 0x4, offset = 0x4, fixed_abs, tag = 'smem constant byte address 0x4 - core index']
  #allocation1 [shape = 'u32[144,128]{1,0:T(1,128)}', space=vmem, size = 0x12000, scoped, tag = 'internal scratch']
  #allocation2 [shape = 'bf16[304,96]{1,0:T(16,128)(2,1)}', space=vmem, size = 0x13000, scoped, tag = 'scratch operand']
  %s0 = inlined_call_operand.vmem [shape: f32[600,32], index: 0, kind: input, shape index: {}]
  %s1 = inlined_call_operand.vmem [shape: f32[600,32], index: 1, kind: input, shape index: {}]
  %s2 = inlined_call_operand.vmem [shape: bf16[32,64], index: 2, kind: input, shape index: {}]
  %s3 = inlined_call_operand.vmem [shape: f32[1,64], index: 3, kind: input, shape index: {}]
  %s4 = inlined_call_operand.vmem [shape: bf16[64,64], index: 4, kind: input, shape index: {}]
  %s5 = inlined_call_operand.vmem [shape: f32[1,64], index: 5, kind: input, shape index: {}]
  %s6 = inlined_call_operand.vmem [shape: bf16[96,64], index: 6, kind: input, shape index: {}]
  %s7 = inlined_call_operand.vmem [shape: f32[1,64], index: 7, kind: input, shape index: {}]
  %s8 = inlined_call_operand.vmem [shape: bf16[64,64], index: 8, kind: input, shape index: {}]
  %s9 = inlined_call_operand.vmem [shape: f32[1,64], index: 9, kind: input, shape index: {}]
  %s10 = inlined_call_operand.vmem [shape: f32[600,64], index: 10, kind: output, shape index: {}]
  %s11 = sld [smem:[#allocation0]]
  $region121: #{tpu_custom_call.1} parent=0
    _
  %s13 = ssub.s32 1, %s11
  %s14 = scalar_select 0, %s13, %s11
  $region1: #{tpu_custom_call.1} parent=0
    #allocation3 [shape = 'u8[311296]{0}', space=vmem, size = 0x4c000, scoped, tag = 'output window, operand 0']
    loop: start=0, step=1, limit=4
    $region2: #{tpu_custom_call.1} parent=1 // loop_pre_header
      _
    $region3: #{tpu_custom_call.1} parent=1 // loop_header
      %s16 = sphi 0, %s20
      %p17 = scmp.ge.s32.totalorder %s16, 4
      %s26 = sphi 0, %s28
      %s29 = sphi 0, %s26
      %s30 = sphi 0, %s29
      %s46 = sphi 0, %s30
      %s52 = sphi 0, %s54
      %s55 = sphi 0, %s52
      %s56 = sphi 0, %s55
      %s72 = sphi 0, %s56
      %s76 = sphi 0, %s76
      %s78 = sphi 0, %s76
      %s79 = sphi 0, %s78
      %s93 = sphi 0, %s79
      %s97 = sphi 0, %s97
      %s99 = sphi 0, %s97
      %s100 = sphi 0, %s99
      %s114 = sphi 0, %s100
      %s118 = sphi 0, %s118
      %s120 = sphi 0, %s118
      %s121 = sphi 0, %s120
      %s135 = sphi 0, %s121
      %s139 = sphi 0, %s139
      %s141 = sphi 0, %s139
      %s142 = sphi 0, %s141
      %s156 = sphi 0, %s142
      %s160 = sphi 0, %s160
      %s162 = sphi 0, %s160
      %s163 = sphi 0, %s162
      %s177 = sphi 0, %s163
      %s181 = sphi 0, %s181
      %s183 = sphi 0, %s181
      %s184 = sphi 0, %s183
      %s198 = sphi 0, %s184
      %s202 = sphi 0, %s202
      %s204 = sphi 0, %s202
      %s205 = sphi 0, %s204
      %s219 = sphi 0, %s205
      %s223 = sphi 0, %s223
      %s225 = sphi 0, %s223
      %s226 = sphi 0, %s225
      %s240 = sphi 0, %s226
      %s246 = sphi 0, %s248
      %s249 = sphi 0, %s246
      %s250 = sphi 0, %s249
      %s266 = sphi 0, %s250
    $region4: #{tpu_custom_call.1} parent=1 // loop_header_branch
      %19 = sbr.rel (%p17) target = $region8
    $region5: #{tpu_custom_call.1} parent=1 // loop_body
      %s21 = ssub.s32 %s16, 1
      %s22 = ssub.s32 %s16, 2
      %s23 = sadd.s32 %s16, 1
      %s24 = ssub.s32 %s16, %s23
      %p25 = scmp.eq.s32.totalorder %s24, 0
      %s27 = sadd.s32 %s26, 1
      %s28 = scalar_select %p25, %s26, %s27
      %p31 = pneg %p25
      %p32 = scmp.eq.s32.totalorder %s16, 1
      %p33 = por %p31, %p32
      %p34 = scmp.ne.s32.totalorder %s26, %s29
      %p35 = scmp.eq.s32.totalorder %s16, 0
      %p36 = por %p34, %p35
      %p37 = scmp.ne.s32.totalorder %s26, %s29
      %p38 = scmp.eq.s32.totalorder %s21, 1
      %p39 = por %p37, %p38
      %p40 = scmp.ne.s32.totalorder %s29, %s30
      %p41 = scmp.eq.s32.totalorder %s21, 0
      %p42 = por %p40, %p41
      %p43 = scmp.ne.s32.totalorder %s29, %s30
      %p44 = scmp.eq.s32.totalorder %s22, 1
      %p45 = por %p43, %p44
      %p47 = scmp.ne.s32.totalorder %s30, %s46
      %p48 = scmp.eq.s32.totalorder %s22, 0
      %p49 = por %p47, %p48
      %s50 = ssub.s32 %s16, %s23
      %p51 = scmp.eq.s32.totalorder %s50, 0
      %s53 = sadd.s32 %s52, 1
      %s54 = scalar_select %p51, %s52, %s53
      %p57 = pneg %p51
      %p58 = scmp.eq.s32.totalorder %s16, 1
      %p59 = por %p57, %p58
      %p60 = scmp.ne.s32.totalorder %s52, %s55
      %p61 = scmp.eq.s32.totalorder %s16, 0
      %p62 = por %p60, %p61
      %p63 = scmp.ne.s32.totalorder %s52, %s55
      %p64 = scmp.eq.s32.totalorder %s21, 1
      %p65 = por %p63, %p64
      %p66 = scmp.ne.s32.totalorder %s55, %s56
      %p67 = scmp.eq.s32.totalorder %s21, 0
      %p68 = por %p66, %p67
      %p69 = scmp.ne.s32.totalorder %s55, %s56
      %p70 = scmp.eq.s32.totalorder %s22, 1
      %p71 = por %p69, %p70
      %p73 = scmp.ne.s32.totalorder %s56, %s72
      %p74 = scmp.eq.s32.totalorder %s22, 0
      %p75 = por %p73, %p74
      %s77 = sadd.s32 %s76, 1
      %p80 = scmp.eq.s32.totalorder %s16, 1
      %p81 = scmp.ne.s32.totalorder %s76, %s78
      %p82 = scmp.eq.s32.totalorder %s16, 0
      %p83 = por %p81, %p82
      %p84 = scmp.ne.s32.totalorder %s76, %s78
      %p85 = scmp.eq.s32.totalorder %s21, 1
      %p86 = por %p84, %p85
      %p87 = scmp.ne.s32.totalorder %s78, %s79
      %p88 = scmp.eq.s32.totalorder %s21, 0
      %p89 = por %p87, %p88
      %p90 = scmp.ne.s32.totalorder %s78, %s79
      %p91 = scmp.eq.s32.totalorder %s22, 1
      %p92 = por %p90, %p91
      %p94 = scmp.ne.s32.totalorder %s79, %s93
      %p95 = scmp.eq.s32.totalorder %s22, 0
      %p96 = por %p94, %p95
      %s98 = sadd.s32 %s97, 1
      %p101 = scmp.eq.s32.totalorder %s16, 1
      %p102 = scmp.ne.s32.totalorder %s97, %s99
      %p103 = scmp.eq.s32.totalorder %s16, 0
      %p104 = por %p102, %p103
      %p105 = scmp.ne.s32.totalorder %s97, %s99
      %p106 = scmp.eq.s32.totalorder %s21, 1
      %p107 = por %p105, %p106
      %p108 = scmp.ne.s32.totalorder %s99, %s100
      %p109 = scmp.eq.s32.totalorder %s21, 0
      %p110 = por %p108, %p109
      %p111 = scmp.ne.s32.totalorder %s99, %s100
      %p112 = scmp.eq.s32.totalorder %s22, 1
      %p113 = por %p111, %p112
      %p115 = scmp.ne.s32.totalorder %s100, %s114
      %p116 = scmp.eq.s32.totalorder %s22, 0
      %p117 = por %p115, %p116
      %s119 = sadd.s32 %s118, 1
      %p122 = scmp.eq.s32.totalorder %s16, 1
      %p123 = scmp.ne.s32.totalorder %s118, %s120
      %p124 = scmp.eq.s32.totalorder %s16, 0
      %p125 = por %p123, %p124
      %p126 = scmp.ne.s32.totalorder %s118, %s120
      %p127 = scmp.eq.s32.totalorder %s21, 1
      %p128 = por %p126, %p127
      %p129 = scmp.ne.s32.totalorder %s120, %s121
      %p130 = scmp.eq.s32.totalorder %s21, 0
      %p131 = por %p129, %p130
      %p132 = scmp.ne.s32.totalorder %s120, %s121
      %p133 = scmp.eq.s32.totalorder %s22, 1
      %p134 = por %p132, %p133
      %p136 = scmp.ne.s32.totalorder %s121, %s135
      %p137 = scmp.eq.s32.totalorder %s22, 0
      %p138 = por %p136, %p137
      %s140 = sadd.s32 %s139, 1
      %p143 = scmp.eq.s32.totalorder %s16, 1
      %p144 = scmp.ne.s32.totalorder %s139, %s141
      %p145 = scmp.eq.s32.totalorder %s16, 0
      %p146 = por %p144, %p145
      %p147 = scmp.ne.s32.totalorder %s139, %s141
      %p148 = scmp.eq.s32.totalorder %s21, 1
      %p149 = por %p147, %p148
      %p150 = scmp.ne.s32.totalorder %s141, %s142
      %p151 = scmp.eq.s32.totalorder %s21, 0
      %p152 = por %p150, %p151
      %p153 = scmp.ne.s32.totalorder %s141, %s142
      %p154 = scmp.eq.s32.totalorder %s22, 1
      %p155 = por %p153, %p154
      %p157 = scmp.ne.s32.totalorder %s142, %s156
      %p158 = scmp.eq.s32.totalorder %s22, 0
      %p159 = por %p157, %p158
      %s161 = sadd.s32 %s160, 1
      %p164 = scmp.eq.s32.totalorder %s16, 1
      %p165 = scmp.ne.s32.totalorder %s160, %s162
      %p166 = scmp.eq.s32.totalorder %s16, 0
      %p167 = por %p165, %p166
      %p168 = scmp.ne.s32.totalorder %s160, %s162
      %p169 = scmp.eq.s32.totalorder %s21, 1
      %p170 = por %p168, %p169
      %p171 = scmp.ne.s32.totalorder %s162, %s163
      %p172 = scmp.eq.s32.totalorder %s21, 0
      %p173 = por %p171, %p172
      %p174 = scmp.ne.s32.totalorder %s162, %s163
      %p175 = scmp.eq.s32.totalorder %s22, 1
      %p176 = por %p174, %p175
      %p178 = scmp.ne.s32.totalorder %s163, %s177
      %p179 = scmp.eq.s32.totalorder %s22, 0
      %p180 = por %p178, %p179
      %s182 = sadd.s32 %s181, 1
      %p185 = scmp.eq.s32.totalorder %s16, 1
      %p186 = scmp.ne.s32.totalorder %s181, %s183
      %p187 = scmp.eq.s32.totalorder %s16, 0
      %p188 = por %p186, %p187
      %p189 = scmp.ne.s32.totalorder %s181, %s183
      %p190 = scmp.eq.s32.totalorder %s21, 1
      %p191 = por %p189, %p190
      %p192 = scmp.ne.s32.totalorder %s183, %s184
      %p193 = scmp.eq.s32.totalorder %s21, 0
      %p194 = por %p192, %p193
      %p195 = scmp.ne.s32.totalorder %s183, %s184
      %p196 = scmp.eq.s32.totalorder %s22, 1
      %p197 = por %p195, %p196
      %p199 = scmp.ne.s32.totalorder %s184, %s198
      %p200 = scmp.eq.s32.totalorder %s22, 0
      %p201 = por %p199, %p200
      %s203 = sadd.s32 %s202, 1
      %p206 = scmp.eq.s32.totalorder %s16, 1
      %p207 = scmp.ne.s32.totalorder %s202, %s204
      %p208 = scmp.eq.s32.totalorder %s16, 0
      %p209 = por %p207, %p208
      %p210 = scmp.ne.s32.totalorder %s202, %s204
      %p211 = scmp.eq.s32.totalorder %s21, 1
      %p212 = por %p210, %p211
      %p213 = scmp.ne.s32.totalorder %s204, %s205
      %p214 = scmp.eq.s32.totalorder %s21, 0
      %p215 = por %p213, %p214
      %p216 = scmp.ne.s32.totalorder %s204, %s205
      %p217 = scmp.eq.s32.totalorder %s22, 1
      %p218 = por %p216, %p217
      %p220 = scmp.ne.s32.totalorder %s205, %s219
      %p221 = scmp.eq.s32.totalorder %s22, 0
      %p222 = por %p220, %p221
      %s224 = sadd.s32 %s223, 1
      %p227 = scmp.eq.s32.totalorder %s16, 1
      %p228 = scmp.ne.s32.totalorder %s223, %s225
      %p229 = scmp.eq.s32.totalorder %s16, 0
      %p230 = por %p228, %p229
      %p231 = scmp.ne.s32.totalorder %s223, %s225
      %p232 = scmp.eq.s32.totalorder %s21, 1
      %p233 = por %p231, %p232
      %p234 = scmp.ne.s32.totalorder %s225, %s226
      %p235 = scmp.eq.s32.totalorder %s21, 0
      %p236 = por %p234, %p235
      %p237 = scmp.ne.s32.totalorder %s225, %s226
      %p238 = scmp.eq.s32.totalorder %s22, 1
      %p239 = por %p237, %p238
      %p241 = scmp.ne.s32.totalorder %s226, %s240
      %p242 = scmp.eq.s32.totalorder %s22, 0
      %p243 = por %p241, %p242
      %s244 = ssub.s32 %s16, %s23
      %p245 = scmp.eq.s32.totalorder %s244, 0
      %s247 = sadd.s32 %s246, 1
      %s248 = scalar_select %p245, %s246, %s247
      %p251 = pneg %p245
      %p252 = scmp.eq.s32.totalorder %s16, 1
      %p253 = por %p251, %p252
      %p254 = scmp.ne.s32.totalorder %s246, %s249
      %p255 = scmp.eq.s32.totalorder %s16, 0
      %p256 = por %p254, %p255
      %p257 = scmp.ne.s32.totalorder %s246, %s249
      %p258 = scmp.eq.s32.totalorder %s21, 1
      %p259 = por %p257, %p258
      %p260 = scmp.ne.s32.totalorder %s249, %s250
      %p261 = scmp.eq.s32.totalorder %s21, 0
      %p262 = por %p260, %p261
      %p263 = scmp.ne.s32.totalorder %s249, %s250
      %p264 = scmp.eq.s32.totalorder %s22, 1
      %p265 = por %p263, %p264
      %p267 = scmp.ne.s32.totalorder %s250, %s266
      %p268 = scmp.eq.s32.totalorder %s22, 0
      %p269 = por %p267, %p268
      %p270 = scmp.le.s32.totalorder 1, %s16
      %p271 = scmp.lt.s32.totalorder %s16, 3
      %p272 = pnand %p270, %p271
      %p273 = pneg %p272
      // Predicated region
      $region9: #{tpu_custom_call.1} parent=5 // pred_check
        _
      $region10: #{tpu_custom_call.1} parent=5 // pred_check_branch
        %275 = sbr.rel (%p272) target = $region12
      $region11: #{tpu_custom_call.1} parent=5 // pred_region
        %s276 = ssub.s32 %s16, 1
        // Predicated region
        $region13: #{tpu_custom_call.1} parent=11 // pred_check
          %p277 = pneg %p89
        $region14: #{tpu_custom_call.1} parent=11 // pred_check_branch
          %279 = sbr.rel (%p277) target = $region16
        $region15: #{tpu_custom_call.1} parent=11 // pred_region
          _
        $region16: #{tpu_custom_call.1} parent=11 // pred_fallthru
          _
        // Predicated region
        $region17: #{tpu_custom_call.1} parent=11 // pred_check
          %p280 = pneg %p110
        $region18: #{tpu_custom_call.1} parent=11 // pred_check_branch
          %282 = sbr.rel (%p280) target = $region20
        $region19: #{tpu_custom_call.1} parent=11 // pred_region
          _
        $region20: #{tpu_custom_call.1} parent=11 // pred_fallthru
          _
        // Predicated region
        $region21: #{tpu_custom_call.1} parent=11 // pred_check
          %p283 = pneg %p131
        $region22: #{tpu_custom_call.1} parent=11 // pred_check_branch
          %285 = sbr.rel (%p283) target = $region24
        $region23: #{tpu_custom_call.1} parent=11 // pred_region
          _
        $region24: #{tpu_custom_call.1} parent=11 // pred_fallthru
          _
        // Predicated region
        $region25: #{tpu_custom_call.1} parent=11 // pred_check
          %p286 = pneg %p152
        $region26: #{tpu_custom_call.1} parent=11 // pred_check_branch
          %288 = sbr.rel (%p286) target = $region28
        $region27: #{tpu_custom_call.1} parent=11 // pred_region
          _
        $region28: #{tpu_custom_call.1} parent=11 // pred_fallthru
          _
        // Predicated region
        $region29: #{tpu_custom_call.1} parent=11 // pred_check
          %p289 = pneg %p173
        $region30: #{tpu_custom_call.1} parent=11 // pred_check_branch
          %291 = sbr.rel (%p289) target = $region32
        $region31: #{tpu_custom_call.1} parent=11 // pred_region
          _
        $region32: #{tpu_custom_call.1} parent=11 // pred_fallthru
          _
        // Predicated region
        $region33: #{tpu_custom_call.1} parent=11 // pred_check
          %p292 = pneg %p194
        $region34: #{tpu_custom_call.1} parent=11 // pred_check_branch
          %294 = sbr.rel (%p292) target = $region36
        $region35: #{tpu_custom_call.1} parent=11 // pred_region
          _
        $region36: #{tpu_custom_call.1} parent=11 // pred_fallthru
          _
        // Predicated region
        $region37: #{tpu_custom_call.1} parent=11 // pred_check
          %p295 = pneg %p215
        $region38: #{tpu_custom_call.1} parent=11 // pred_check_branch
          %297 = sbr.rel (%p295) target = $region40
        $region39: #{tpu_custom_call.1} parent=11 // pred_region
          _
        $region40: #{tpu_custom_call.1} parent=11 // pred_fallthru
          _
        // Predicated region
        $region41: #{tpu_custom_call.1} parent=11 // pred_check
          %p298 = pneg %p236
        $region42: #{tpu_custom_call.1} parent=11 // pred_check_branch
          %300 = sbr.rel (%p298) target = $region44
        $region43: #{tpu_custom_call.1} parent=11 // pred_region
          _
        $region44: #{tpu_custom_call.1} parent=11 // pred_fallthru
          _
      $region12: #{tpu_custom_call.1} parent=5 // pred_fallthru
        _
      %p301 = scmp.lt.s32.totalorder %s16, 2
      // Predicated region
      $region45: #{tpu_custom_call.1} parent=5 // pred_check
        %p302 = pneg %p301
      $region46: #{tpu_custom_call.1} parent=5 // pred_check_branch
        %304 = sbr.rel (%p302) target = $region48
      $region47: #{tpu_custom_call.1} parent=5 // pred_region
        // Predicated region
        $region49: #{tpu_custom_call.1} parent=47 // pred_check
          %p305 = pneg %p36
        $region50: #{tpu_custom_call.1} parent=47 // pred_check_branch
          %307 = sbr.rel (%p305) target = $region52
        $region51: #{tpu_custom_call.1} parent=47 // pred_region
          %s308 = smul.u32 38, %s16
          %s309 = ssub.s32 75, %s308
          %p310 = scmp.lt.s32.totalorder %s309, 38
          %s311 = scalar_select %p310, %s309, 38
          %s312 = smul.u32 128, %s311
          %p313 = scmp.lt.s32.totalorder %s308, 74
          %s314 = scalar_select %p313, %s308, 74
          %s315 = smul.addr %s314, 8
          %s316 = scalar_lea.vmem %s0, %s315
          %s317 = smul.u32 38, %s16
          %s318 = ssub.s32 75, %s317
          %p319 = scmp.lt.s32.totalorder %s318, 38
          %s320 = scalar_select %p319, %s318, 38
          %s321 = smul.u32 128, %s320
        $region52: #{tpu_custom_call.1} parent=47 // pred_fallthru
          _
        // Predicated region
        $region53: #{tpu_custom_call.1} parent=47 // pred_check
          %p322 = pneg %p62
        $region54: #{tpu_custom_call.1} parent=47 // pred_check_branch
          %324 = sbr.rel (%p322) target = $region56
        $region55: #{tpu_custom_call.1} parent=47 // pred_region
          %s325 = smul.u32 38, %s16
          %s326 = ssub.s32 75, %s325
          %p327 = scmp.lt.s32.totalorder %s326, 38
          %s328 = scalar_select %p327, %s326, 38
          %s329 = smul.u32 128, %s328
          %p330 = scmp.lt.s32.totalorder %s325, 74
          %s331 = scalar_select %p330, %s325, 74
          %s332 = smul.addr %s331, 8
          %s333 = scalar_lea.vmem %s1, %s332
          %s334 = smul.u32 38, %s16
          %s335 = ssub.s32 75, %s334
          %p336 = scmp.lt.s32.totalorder %s335, 38
          %s337 = scalar_select %p336, %s335, 38
          %s338 = smul.u32 128, %s337
        $region56: #{tpu_custom_call.1} parent=47 // pred_fallthru
          _
      $region48: #{tpu_custom_call.1} parent=5 // pred_fallthru
        _
      %p339 = scmp.le.s32.totalorder 1, %s16
      %p340 = scmp.lt.s32.totalorder %s16, 3
      %p341 = pnand %p339, %p340
      %p342 = pneg %p341
      // Predicated region
      $region57: #{tpu_custom_call.1} parent=5 // pred_check
        _
      $region58: #{tpu_custom_call.1} parent=5 // pred_check_branch
        %344 = sbr.rel (%p341) target = $region60
      $region59: #{tpu_custom_call.1} parent=5 // pred_region
        %s345 = ssub.s32 %s16, 1
        %s346 = smul.u32 38, %s21
        %s347 = ssub.s32 75, %s346
        %p348 = scmp.lt.s32.totalorder %s347, 38
        %s349 = scalar_select %p348, %s347, 38
        %s350 = smul.u32 128, %s349
        %p351 = scmp.lt.s32.totalorder %s346, 74
        %s352 = scalar_select %p351, %s346, 74
        %s353 = smul.addr %s352, 8
        %s354 = scalar_lea.vmem %s0, %s353
        %p355 = pneg %p42
        %p356 = pneg %p39
        %s357 = smul.u32 38, %s21
        %s358 = ssub.s32 75, %s357
        %p359 = scmp.lt.s32.totalorder %s358, 38
        %s360 = scalar_select %p359, %s358, 38
        %s361 = smul.u32 128, %s360
        %p362 = scmp.lt.s32.totalorder %s357, 74
        %s363 = scalar_select %p362, %s357, 74
        %s364 = smul.addr %s363, 8
        %s365 = scalar_lea.vmem %s1, %s364
        %p366 = pneg %p68
        %p367 = pneg %p65
        %p368 = pneg %p89
        %p369 = pneg %p86
        %p370 = pneg %p110
        %p371 = pneg %p107
        %p372 = pneg %p131
        %p373 = pneg %p128
        %p374 = pneg %p152
        %p375 = pneg %p149
        %p376 = pneg %p173
        %p377 = pneg %p170
        %p378 = pneg %p194
        %p379 = pneg %p191
        %p380 = pneg %p215
        %p381 = pneg %p212
        %p382 = pneg %p236
        %p383 = pneg %p233
        %p384 = pneg %p262
        %p385 = pneg %p259
        %s386 = sand.u32 %s249, 1
        %s387 = sand.u32 %s249, 1
        %s388 = smul.addr %s387, 304
        %s389 = scalar_lea.vmem [#allocation3], %s388
        %s390 = smul.u32 38, %s21
        %s391 = ssub.s32 75, %s390
        %p392 = scmp.lt.s32.totalorder %s391, 38
        %s393 = scalar_select %p392, %s391, 38
        %s394 = smul.u32 128, %s393
        %p395 = scmp.lt.s32.totalorder %s390, 74
        %s396 = scalar_select %p395, %s390, 74
        %s397 = smul.addr %s396, 8
        %s398 = scalar_lea.vmem %s0, %s397
        %s399 = smul.u32 38, %s21
        %s400 = ssub.s32 75, %s399
        %p401 = scmp.lt.s32.totalorder %s400, 38
        %s402 = scalar_select %p401, %s400, 38
        %s403 = smul.u32 128, %s402
        %s404 = smul.u32 38, %s21
        %s405 = ssub.s32 75, %s404
        %p406 = scmp.lt.s32.totalorder %s405, 38
        %s407 = scalar_select %p406, %s405, 38
        %s408 = smul.u32 128, %s407
        %p409 = scmp.lt.s32.totalorder %s404, 74
        %s410 = scalar_select %p409, %s404, 74
        %s411 = smul.addr %s410, 8
        %s412 = scalar_lea.vmem %s1, %s411
        %s413 = smul.u32 38, %s21
        %s414 = ssub.s32 75, %s413
        %p415 = scmp.lt.s32.totalorder %s414, 38
        %s416 = scalar_select %p415, %s414, 38
        %s417 = smul.u32 128, %s416
        %s418 = smul.u32 38, %s21
        %s419 = ssub.s32 75, %s418
        %p420 = scmp.lt.s32.totalorder %s419, 38
        %s421 = scalar_select %p420, %s419, 38
        %s422 = smul.u32 128, %s421
        %v424 = vld [vmem:[%s412] sm:$0xff]
        %v425 = vld [vmem:[%s412 + $0x8] sm:$0xff]
        %v426 = vld [vmem:[%s412 + $0x10] sm:$0xff]
        %v427 = vld [vmem:[%s412 + $0x18] sm:$0xff]
        %v428 = vld [vmem:[%s412 + $0x20] sm:$0xff]
        %v429 = vld [vmem:[%s412 + $0x28] sm:$0xff]
        %v430 = vld [vmem:[%s412 + $0x30] sm:$0xff]
        %v431 = vld [vmem:[%s412 + $0x38] sm:$0xff]
        %v432 = vld [vmem:[%s412 + $0x40] sm:$0xff]
        %v433 = vld [vmem:[%s412 + $0x48] sm:$0xff]
        %v434 = vld [vmem:[%s412 + $0x50] sm:$0xff]
        %v435 = vld [vmem:[%s412 + $0x58] sm:$0xff]
        %v436 = vld [vmem:[%s412 + $0x60] sm:$0xff]
        %v437 = vld [vmem:[%s412 + $0x68] sm:$0xff]
        %v438 = vld [vmem:[%s412 + $0x70] sm:$0xff]
        %v439 = vld [vmem:[%s412 + $0x78] sm:$0xff]
        %v440 = vld [vmem:[%s412 + $0x80] sm:$0xff]
        %v441 = vld [vmem:[%s412 + $0x88] sm:$0xff]
        %v442 = vld [vmem:[%s412 + $0x90] sm:$0xff]
        %v443 = vld [vmem:[%s412 + $0x98] sm:$0xff]
        %v444 = vld [vmem:[%s412 + $0xa0] sm:$0xff]
        %v445 = vld [vmem:[%s412 + $0xa8] sm:$0xff]
        %v446 = vld [vmem:[%s412 + $0xb0] sm:$0xff]
        %v447 = vld [vmem:[%s412 + $0xb8] sm:$0xff]
        %v448 = vld [vmem:[%s412 + $0xc0] sm:$0xff]
        %v449 = vld [vmem:[%s412 + $0xc8] sm:$0xff]
        %v450 = vld [vmem:[%s412 + $0xd0] sm:$0xff]
        %v451 = vld [vmem:[%s412 + $0xd8] sm:$0xff]
        %v452 = vld [vmem:[%s412 + $0xe0] sm:$0xff]
        %v453 = vld [vmem:[%s412 + $0xe8] sm:$0xff]
        %v454 = vld [vmem:[%s412 + $0xf0] sm:$0xff]
        %v455 = vld [vmem:[%s412 + $0xf8] sm:$0xff]
        %v456 = vld [vmem:[%s412 + $0x100] sm:$0xff]
        %v457 = vld [vmem:[%s412 + $0x108] sm:$0xff]
        %v458 = vld [vmem:[%s412 + $0x110] sm:$0xff]
        %v459 = vld [vmem:[%s412 + $0x118] sm:$0xff]
        %v460 = vld [vmem:[%s412 + $0x120] sm:$0xff]
        %v461 = vld [vmem:[%s412 + $0x128] sm:$0xff]
        %v462 = vpack.c.bf16 %v425, %v424
        %v463 = vpack.c.bf16 %v427, %v426
        %v464 = vpack.c.bf16 %v429, %v428
        %v465 = vpack.c.bf16 %v431, %v430
        %v466 = vpack.c.bf16 %v433, %v432
        %v467 = vpack.c.bf16 %v435, %v434
        %v468 = vpack.c.bf16 %v437, %v436
        %v469 = vpack.c.bf16 %v439, %v438
        %v470 = vpack.c.bf16 %v441, %v440
        %v471 = vpack.c.bf16 %v443, %v442
        %v472 = vpack.c.bf16 %v445, %v444
        %v473 = vpack.c.bf16 %v447, %v446
        %v474 = vpack.c.bf16 %v449, %v448
        %v475 = vpack.c.bf16 %v451, %v450
        %v476 = vpack.c.bf16 %v453, %v452
        %v477 = vpack.c.bf16 %v455, %v454
        %v478 = vpack.c.bf16 %v457, %v456
        %v479 = vpack.c.bf16 %v459, %v458
        %v480 = vpack.c.bf16 %v461, %v460
        %500 = vrot.lane.b32.xlu0 %v462, 64
        %v501 = vpop.permute.xlu0 %500
        %502 = vrot.lane.b32.xlu0 %v463, 64
        %v503 = vpop.permute.xlu0 %502
        %504 = vrot.lane.b32.xlu0 %v464, 64
        %v505 = vpop.permute.xlu0 %504
        %506 = vrot.lane.b32.xlu0 %v465, 64
        %v507 = vpop.permute.xlu0 %506
        %508 = vrot.lane.b32.xlu0 %v466, 64
        %v509 = vpop.permute.xlu0 %508
        %510 = vrot.lane.b32.xlu0 %v467, 64
        %v511 = vpop.permute.xlu0 %510
        %512 = vrot.lane.b32.xlu0 %v468, 64
        %v513 = vpop.permute.xlu0 %512
        %514 = vrot.lane.b32.xlu0 %v469, 64
        %v515 = vpop.permute.xlu0 %514
        %516 = vrot.lane.b32.xlu0 %v470, 64
        %v517 = vpop.permute.xlu0 %516
        %518 = vrot.lane.b32.xlu0 %v471, 64
        %v519 = vpop.permute.xlu0 %518
        %520 = vrot.lane.b32.xlu0 %v472, 64
        %v521 = vpop.permute.xlu0 %520
        %522 = vrot.lane.b32.xlu0 %v473, 64
        %v523 = vpop.permute.xlu0 %522
        %524 = vrot.lane.b32.xlu0 %v474, 64
        %v525 = vpop.permute.xlu0 %524
        %526 = vrot.lane.b32.xlu0 %v475, 64
        %v527 = vpop.permute.xlu0 %526
        %528 = vrot.lane.b32.xlu0 %v476, 64
        %v529 = vpop.permute.xlu0 %528
        %530 = vrot.lane.b32.xlu0 %v477, 64
        %v531 = vpop.permute.xlu0 %530
        %532 = vrot.lane.b32.xlu0 %v478, 64
        %v533 = vpop.permute.xlu0 %532
        %534 = vrot.lane.b32.xlu0 %v479, 64
        %v535 = vpop.permute.xlu0 %534
        %536 = vrot.lane.b32.xlu0 %v480, 64
        %v537 = vpop.permute.xlu0 %536
        %vm557 = vcmask 785920
        %558 = vst.msk [vmem:[#allocation2] sm:$0xff] %vm557, %v501
        %559 = vst.msk [vmem:[#allocation2 + $0x8] sm:$0xff] %vm557, %v503
        %560 = vst.msk [vmem:[#allocation2 + $0x10] sm:$0xff] %vm557, %v505
        %561 = vst.msk [vmem:[#allocation2 + $0x18] sm:$0xff] %vm557, %v507
        %562 = vst.msk [vmem:[#allocation2 + $0x20] sm:$0xff] %vm557, %v509
        %563 = vst.msk [vmem:[#allocation2 + $0x28] sm:$0xff] %vm557, %v511
        %564 = vst.msk [vmem:[#allocation2 + $0x30] sm:$0xff] %vm557, %v513
        %565 = vst.msk [vmem:[#allocation2 + $0x38] sm:$0xff] %vm557, %v515
        %566 = vst.msk [vmem:[#allocation2 + $0x40] sm:$0xff] %vm557, %v517
        %567 = vst.msk [vmem:[#allocation2 + $0x48] sm:$0xff] %vm557, %v519
        %568 = vst.msk [vmem:[#allocation2 + $0x50] sm:$0xff] %vm557, %v521
        %569 = vst.msk [vmem:[#allocation2 + $0x58] sm:$0xff] %vm557, %v523
        %570 = vst.msk [vmem:[#allocation2 + $0x60] sm:$0xff] %vm557, %v525
        %571 = vst.msk [vmem:[#allocation2 + $0x68] sm:$0xff] %vm557, %v527
        %572 = vst.msk [vmem:[#allocation2 + $0x70] sm:$0xff] %vm557, %v529
        %573 = vst.msk [vmem:[#allocation2 + $0x78] sm:$0xff] %vm557, %v531
        %574 = vst.msk [vmem:[#allocation2 + $0x80] sm:$0xff] %vm557, %v533
        %575 = vst.msk [vmem:[#allocation2 + $0x88] sm:$0xff] %vm557, %v535
        %576 = vst.msk [vmem:[#allocation2 + $0x90] sm:$0xff] %vm557, %v537
        %v577 = vld [vmem:[%s398] sm:$0xff]
        %v578 = vld [vmem:[%s398 + $0x8] sm:$0xff]
        %v579 = vld [vmem:[%s398 + $0x10] sm:$0xff]
        %v580 = vld [vmem:[%s398 + $0x18] sm:$0xff]
        %v581 = vld [vmem:[%s398 + $0x20] sm:$0xff]
        %v582 = vld [vmem:[%s398 + $0x28] sm:$0xff]
        %v583 = vld [vmem:[%s398 + $0x30] sm:$0xff]
        %v584 = vld [vmem:[%s398 + $0x38] sm:$0xff]
        %v585 = vld [vmem:[%s398 + $0x40] sm:$0xff]
        %v586 = vld [vmem:[%s398 + $0x48] sm:$0xff]
        %v587 = vld [vmem:[%s398 + $0x50] sm:$0xff]
        %v588 = vld [vmem:[%s398 + $0x58] sm:$0xff]
        %v589 = vld [vmem:[%s398 + $0x60] sm:$0xff]
        %v590 = vld [vmem:[%s398 + $0x68] sm:$0xff]
        %v591 = vld [vmem:[%s398 + $0x70] sm:$0xff]
        %v592 = vld [vmem:[%s398 + $0x78] sm:$0xff]
        %v593 = vld [vmem:[%s398 + $0x80] sm:$0xff]
        %v594 = vld [vmem:[%s398 + $0x88] sm:$0xff]
        %v595 = vld [vmem:[%s398 + $0x90] sm:$0xff]
        %v596 = vld [vmem:[%s398 + $0x98] sm:$0xff]
        %v597 = vld [vmem:[%s398 + $0xa0] sm:$0xff]
        %v598 = vld [vmem:[%s398 + $0xa8] sm:$0xff]
        %v599 = vld [vmem:[%s398 + $0xb0] sm:$0xff]
        %v600 = vld [vmem:[%s398 + $0xb8] sm:$0xff]
        %v601 = vld [vmem:[%s398 + $0xc0] sm:$0xff]
        %v602 = vld [vmem:[%s398 + $0xc8] sm:$0xff]
        %v603 = vld [vmem:[%s398 + $0xd0] sm:$0xff]
        %v604 = vld [vmem:[%s398 + $0xd8] sm:$0xff]
        %v605 = vld [vmem:[%s398 + $0xe0] sm:$0xff]
        %v606 = vld [vmem:[%s398 + $0xe8] sm:$0xff]
        %v607 = vld [vmem:[%s398 + $0xf0] sm:$0xff]
        %v608 = vld [vmem:[%s398 + $0xf8] sm:$0xff]
        %v609 = vld [vmem:[%s398 + $0x100] sm:$0xff]
        %v610 = vld [vmem:[%s398 + $0x108] sm:$0xff]
        %v611 = vld [vmem:[%s398 + $0x110] sm:$0xff]
        %v612 = vld [vmem:[%s398 + $0x118] sm:$0xff]
        %v613 = vld [vmem:[%s398 + $0x120] sm:$0xff]
        %v614 = vld [vmem:[%s398 + $0x128] sm:$0xff]
        %v615 = vpack.c.bf16 %v578, %v577
        %v616 = vpack.c.bf16 %v580, %v579
        %v617 = vpack.c.bf16 %v582, %v581
        %v618 = vpack.c.bf16 %v584, %v583
        %v619 = vpack.c.bf16 %v586, %v585
        %v620 = vpack.c.bf16 %v588, %v587
        %v621 = vpack.c.bf16 %v590, %v589
        %v622 = vpack.c.bf16 %v592, %v591
        %v623 = vpack.c.bf16 %v594, %v593
        %v624 = vpack.c.bf16 %v596, %v595
        %v625 = vpack.c.bf16 %v598, %v597
        %v626 = vpack.c.bf16 %v600, %v599
        %v627 = vpack.c.bf16 %v602, %v601
        %v628 = vpack.c.bf16 %v604, %v603
        %v629 = vpack.c.bf16 %v606, %v605
        %v630 = vpack.c.bf16 %v608, %v607
        %v631 = vpack.c.bf16 %v610, %v609
        %v632 = vpack.c.bf16 %v612, %v611
        %v633 = vpack.c.bf16 %v614, %v613
        %v634 = vld [vmem:[%s2] sm:$0xf]
        %v635 = vld [vmem:[%s2 + $0x4] sm:$0xf]
        %v636 = vld [vmem:[%s2 + $0x8] sm:$0xf]
        %v637 = vld [vmem:[%s2 + $0xc] sm:$0xf]
        %v638 = vld [vmem:[%s3] sm:$0x1]
        %v640 = vlaneseq
        %v641 = vshrl.u32 %v640, 7
        %v642 = vsub.s32 0, %v641
        %v643 = vrot.slane %v638, %v642
        %v649 = vunpack.c.l.b16 %v634
        %v650 = vunpack.c.l.b16 %v635
        %v651 = vunpack.c.l.b16 %v636
        %v652 = vunpack.c.l.b16 %v637
        %v653 = vpack.c.b16 %v650, %v649
        %v654 = vpack.c.b16 %v652, %v651
        %vm657 = vcmask 261120
        %v659 = vsel %vm657, %v615, 0
        %v662 = vsel %vm657, %v616, 0
        %v665 = vsel %vm657, %v617, 0
        %v668 = vsel %vm657, %v618, 0
        %v671 = vsel %vm657, %v619, 0
        %v674 = vsel %vm657, %v620, 0
        %v677 = vsel %vm657, %v621, 0
        %v680 = vsel %vm657, %v622, 0
        %v683 = vsel %vm657, %v623, 0
        %v686 = vsel %vm657, %v624, 0
        %v689 = vsel %vm657, %v625, 0
        %v692 = vsel %vm657, %v626, 0
        %v695 = vsel %vm657, %v627, 0
        %v698 = vsel %vm657, %v628, 0
        %v701 = vsel %vm657, %v629, 0
        %v704 = vsel %vm657, %v630, 0
        %v707 = vsel %vm657, %v631, 0
        %v710 = vsel %vm657, %v632, 0
        %v713 = vsel %vm657, %v633, 0
        %715 = vmatprep.subr.bf16.mxu0 0
        %716 = vmatpush1.bf16.msra.mxu0 %v653
        %717 = vmatprep.subr.bf16.mxu0 0
        %718 = vmatpush1.bf16.msra.mxu0 %v654
        %719 = vmatprep.subr.bf16.mxu0 0
        %720 = vmatpush1.bf16.msra.mxu0 0
        %721 = vmatprep.subr.bf16.mxu0 0
        %722 = vmatpush1.bf16.msra.mxu0 0
        %723 = vmatprep.subr.bf16.mxu0 0
        %724 = vmatpush1.bf16.msra.mxu0 0
        %725 = vmatprep.subr.bf16.mxu0 0
        %726 = vmatpush1.bf16.msra.mxu0 0
        %727 = vmatprep.subr.bf16.mxu0 0
        %728 = vmatpush1.bf16.msra.mxu0 0
        %729 = vmatprep.subr.bf16.mxu0 0
        %730 = vmatpush1.bf16.msra.mxu0 0
        %731 = vmatprep.subr.bf16.mxu0 0
        %732 = vmatpush1.bf16.msra.mxu0 0
        %733 = vmatprep.subr.bf16.mxu0 0
        %734 = vmatpush1.bf16.msra.mxu0 0
        %735 = vmatprep.subr.bf16.mxu0 0
        %736 = vmatpush1.bf16.msra.mxu0 0
        %737 = vmatprep.subr.bf16.mxu0 0
        %738 = vmatpush1.bf16.msra.mxu0 0
        %739 = vmatprep.subr.bf16.mxu0 0
        %740 = vmatpush1.bf16.msra.mxu0 0
        %741 = vmatprep.subr.bf16.mxu0 0
        %742 = vmatpush1.bf16.msra.mxu0 0
        %743 = vmatprep.subr.bf16.mxu0 0
        %744 = vmatpush1.bf16.msra.mxu0 0
        %745 = vmatprep.subr.bf16.mxu0 0
        %746 = vmatpush1.bf16.msra.mxu0 0
        %747 = vmatprep.mubr.bf16.mxu0 0
        %748 = vmatmul.mubr.bf16.gmra.mrb[0].mxu0 %v659
        %v749 = vpop.f32.mrb[0].mxu0
        %v750 = vadd.f32 %v643, %v749
        %v751 = vpop.f32.mrb[0].mxu0
        %v752 = vpop.f32.mrb[0].mxu0
        %v753 = vadd.f32 %v643, %v752
        %v754 = vpop.f32.mrb[0].mxu0
        %755 = vmatprep.mubr.bf16.mxu0 0
        %756 = vmatmul.mubr.bf16.gmra.mrb[0].mxu0 %v662
        %v757 = vpop.f32.mrb[0].mxu0
        %v758 = vadd.f32 %v643, %v757
        %v759 = vpop.f32.mrb[0].mxu0
        %v760 = vpop.f32.mrb[0].mxu0
        %v761 = vadd.f32 %v643, %v760
        %v762 = vpop.f32.mrb[0].mxu0
        %763 = vmatprep.mubr.bf16.mxu0 0
        %764 = vmatmul.mubr.bf16.gmra.mrb[0].mxu0 %v665
        %v765 = vpop.f32.mrb[0].mxu0
        %v766 = vadd.f32 %v643, %v765
        %v767 = vpop.f32.mrb[0].mxu0
        %v768 = vpop.f32.mrb[0].mxu0
        %v769 = vadd.f32 %v643, %v768
        %v770 = vpop.f32.mrb[0].mxu0
        %771 = vmatprep.mubr.bf16.mxu0 0
        %772 = vmatmul.mubr.bf16.gmra.mrb[0].mxu0 %v668
        %v773 = vpop.f32.mrb[0].mxu0
        %v774 = vadd.f32 %v643, %v773
        %v775 = vpop.f32.mrb[0].mxu0
        %v776 = vpop.f32.mrb[0].mxu0
        %v777 = vadd.f32 %v643, %v776
        %v778 = vpop.f32.mrb[0].mxu0
        %779 = vmatprep.mubr.bf16.mxu0 0
        %780 = vmatmul.mubr.bf16.gmra.mrb[0].mxu0 %v671
        %v781 = vpop.f32.mrb[0].mxu0
        %v782 = vadd.f32 %v643, %v781
        %v783 = vpop.f32.mrb[0].mxu0
        %v784 = vpop.f32.mrb[0].mxu0
        %v785 = vadd.f32 %v643, %v784
        %v786 = vpop.f32.mrb[0].mxu0
        %787 = vmatprep.mubr.bf16.mxu0 0
        %788 = vmatmul.mubr.bf16.gmra.mrb[0].mxu0 %v674
        %v789 = vpop.f32.mrb[0].mxu0
        %v790 = vadd.f32 %v643, %v789
        %v791 = vpop.f32.mrb[0].mxu0
        %v792 = vpop.f32.mrb[0].mxu0
        %v793 = vadd.f32 %v643, %v792
        %v794 = vpop.f32.mrb[0].mxu0
        %795 = vmatprep.mubr.bf16.mxu0 0
        %796 = vmatmul.mubr.bf16.gmra.mrb[0].mxu0 %v677
        %v797 = vpop.f32.mrb[0].mxu0
        %v798 = vadd.f32 %v643, %v797
        %v799 = vpop.f32.mrb[0].mxu0
        %v800 = vpop.f32.mrb[0].mxu0
        %v801 = vadd.f32 %v643, %v800
        %v802 = vpop.f32.mrb[0].mxu0
        %803 = vmatprep.mubr.bf16.mxu0 0
        %804 = vmatmul.mubr.bf16.gmra.mrb[0].mxu0 %v680
        %v805 = vpop.f32.mrb[0].mxu0
        %v806 = vadd.f32 %v643, %v805
        %v807 = vpop.f32.mrb[0].mxu0
        %v808 = vpop.f32.mrb[0].mxu0
        %v809 = vadd.f32 %v643, %v808
        %v810 = vpop.f32.mrb[0].mxu0
        %811 = vmatprep.mubr.bf16.mxu0 0
        %812 = vmatmul.mubr.bf16.gmra.mrb[0].mxu0 %v683
        %v813 = vpop.f32.mrb[0].mxu0
        %v814 = vadd.f32 %v643, %v813
        %v815 = vpop.f32.mrb[0].mxu0
        %v816 = vpop.f32.mrb[0].mxu0
        %v817 = vadd.f32 %v643, %v816
        %v818 = vpop.f32.mrb[0].mxu0
        %819 = vmatprep.mubr.bf16.mxu0 0
        %820 = vmatmul.mubr.bf16.gmra.mrb[0].mxu0 %v686
        %v821 = vpop.f32.mrb[0].mxu0
        %v822 = vadd.f32 %v643, %v821
        %v823 = vpop.f32.mrb[0].mxu0
        %v824 = vpop.f32.mrb[0].mxu0
        %v825 = vadd.f32 %v643, %v824
        %v826 = vpop.f32.mrb[0].mxu0
        %827 = vmatprep.mubr.bf16.mxu0 0
        %828 = vmatmul.mubr.bf16.gmra.mrb[0].mxu0 %v689
        %v829 = vpop.f32.mrb[0].mxu0
        %v830 = vadd.f32 %v643, %v829
        %v831 = vpop.f32.mrb[0].mxu0
        %v832 = vpop.f32.mrb[0].mxu0
        %v833 = vadd.f32 %v643, %v832
        %v834 = vpop.f32.mrb[0].mxu0
        %835 = vmatprep.mubr.bf16.mxu0 0
        %836 = vmatmul.mubr.bf16.gmra.mrb[0].mxu0 %v692
        %v837 = vpop.f32.mrb[0].mxu0
        %v838 = vadd.f32 %v643, %v837
        %v839 = vpop.f32.mrb[0].mxu0
        %v840 = vpop.f32.mrb[0].mxu0
        %v841 = vadd.f32 %v643, %v840
        %v842 = vpop.f32.mrb[0].mxu0
        %843 = vmatprep.mubr.bf16.mxu0 0
        %844 = vmatmul.mubr.bf16.gmra.mrb[0].mxu0 %v695
        %v845 = vpop.f32.mrb[0].mxu0
        %v846 = vadd.f32 %v643, %v845
        %v847 = vpop.f32.mrb[0].mxu0
        %v848 = vpop.f32.mrb[0].mxu0
        %v849 = vadd.f32 %v643, %v848
        %v850 = vpop.f32.mrb[0].mxu0
        %851 = vmatprep.mubr.bf16.mxu0 0
        %852 = vmatmul.mubr.bf16.gmra.mrb[0].mxu0 %v698
        %v853 = vpop.f32.mrb[0].mxu0
        %v854 = vadd.f32 %v643, %v853
        %v855 = vpop.f32.mrb[0].mxu0
        %v856 = vpop.f32.mrb[0].mxu0
        %v857 = vadd.f32 %v643, %v856
        %v858 = vpop.f32.mrb[0].mxu0
        %859 = vmatprep.mubr.bf16.mxu0 0
        %860 = vmatmul.mubr.bf16.gmra.mrb[0].mxu0 %v701
        %v861 = vpop.f32.mrb[0].mxu0
        %v862 = vadd.f32 %v643, %v861
        %v863 = vpop.f32.mrb[0].mxu0
        %v864 = vpop.f32.mrb[0].mxu0
        %v865 = vadd.f32 %v643, %v864
        %v866 = vpop.f32.mrb[0].mxu0
        %867 = vmatprep.mubr.bf16.mxu0 0
        %868 = vmatmul.mubr.bf16.gmra.mrb[0].mxu0 %v704
        %v869 = vpop.f32.mrb[0].mxu0
        %v870 = vadd.f32 %v643, %v869
        %v871 = vpop.f32.mrb[0].mxu0
        %v872 = vpop.f32.mrb[0].mxu0
        %v873 = vadd.f32 %v643, %v872
        %v874 = vpop.f32.mrb[0].mxu0
        %875 = vmatprep.mubr.bf16.mxu0 0
        %876 = vmatmul.mubr.bf16.gmra.mrb[0].mxu0 %v707
        %v877 = vpop.f32.mrb[0].mxu0
        %v878 = vadd.f32 %v643, %v877
        %v879 = vpop.f32.mrb[0].mxu0
        %v880 = vpop.f32.mrb[0].mxu0
        %v881 = vadd.f32 %v643, %v880
        %v882 = vpop.f32.mrb[0].mxu0
        %883 = vmatprep.mubr.bf16.mxu0 0
        %884 = vmatmul.mubr.bf16.gmra.mrb[0].mxu0 %v710
        %v885 = vpop.f32.mrb[0].mxu0
        %v886 = vadd.f32 %v643, %v885
        %v887 = vpop.f32.mrb[0].mxu0
        %v888 = vpop.f32.mrb[0].mxu0
        %v889 = vadd.f32 %v643, %v888
        %v890 = vpop.f32.mrb[0].mxu0
        %891 = vmatprep.mubr.bf16.mxu0 0
        %892 = vmatmul.mubr.bf16.gmra.mrb[0].mxu0 %v713
        %v893 = vpop.f32.mrb[0].mxu0
        %v894 = vadd.f32 %v643, %v893
        %v895 = vpop.f32.mrb[0].mxu0
        %v896 = vpop.f32.mrb[0].mxu0
        %v897 = vadd.f32 %v643, %v896
        %v898 = vpop.f32.mrb[0].mxu0
        %899 = vdwg.mxu0
        %v900 = vmax.f32 %v750, 0.0
        %v901 = vmax.f32 %v753, 0.0
        %v902 = vmax.f32 %v758, 0.0
        %v903 = vmax.f32 %v761, 0.0
        %v904 = vmax.f32 %v766, 0.0
        %v905 = vmax.f32 %v769, 0.0
        %v906 = vmax.f32 %v774, 0.0
        %v907 = vmax.f32 %v777, 0.0
        %v908 = vmax.f32 %v782, 0.0
        %v909 = vmax.f32 %v785, 0.0
        %v910 = vmax.f32 %v790, 0.0
        %v911 = vmax.f32 %v793, 0.0
        %v912 = vmax.f32 %v798, 0.0
        %v913 = vmax.f32 %v801, 0.0
        %v914 = vmax.f32 %v806, 0.0
        %v915 = vmax.f32 %v809, 0.0
        %v916 = vmax.f32 %v814, 0.0
        %v917 = vmax.f32 %v817, 0.0
        %v918 = vmax.f32 %v822, 0.0
        %v919 = vmax.f32 %v825, 0.0
        %v920 = vmax.f32 %v830, 0.0
        %v921 = vmax.f32 %v833, 0.0
        %v922 = vmax.f32 %v838, 0.0
        %v923 = vmax.f32 %v841, 0.0
        %v924 = vmax.f32 %v846, 0.0
        %v925 = vmax.f32 %v849, 0.0
        %v926 = vmax.f32 %v854, 0.0
        %v927 = vmax.f32 %v857, 0.0
        %v928 = vmax.f32 %v862, 0.0
        %v929 = vmax.f32 %v865, 0.0
        %v930 = vmax.f32 %v870, 0.0
        %v931 = vmax.f32 %v873, 0.0
        %v932 = vmax.f32 %v878, 0.0
        %v933 = vmax.f32 %v881, 0.0
        %v934 = vmax.f32 %v886, 0.0
        %v935 = vmax.f32 %v889, 0.0
        %v936 = vmax.f32 %v894, 0.0
        %v937 = vmax.f32 %v897, 0.0
        %v938 = vpack.c.bf16 %v901, %v900
        %v939 = vpack.c.bf16 %v903, %v902
        %v940 = vpack.c.bf16 %v905, %v904
        %v941 = vpack.c.bf16 %v907, %v906
        %v942 = vpack.c.bf16 %v909, %v908
        %v943 = vpack.c.bf16 %v911, %v910
        %v944 = vpack.c.bf16 %v913, %v912
        %v945 = vpack.c.bf16 %v915, %v914
        %v946 = vpack.c.bf16 %v917, %v916
        %v947 = vpack.c.bf16 %v919, %v918
        %v948 = vpack.c.bf16 %v921, %v920
        %v949 = vpack.c.bf16 %v923, %v922
        %v950 = vpack.c.bf16 %v925, %v924
        %v951 = vpack.c.bf16 %v927, %v926
        %v952 = vpack.c.bf16 %v929, %v928
        %v953 = vpack.c.bf16 %v931, %v930
        %v954 = vpack.c.bf16 %v933, %v932
        %v955 = vpack.c.bf16 %v935, %v934
        %v956 = vpack.c.bf16 %v937, %v936
        %vm957 = vcmask 523264
        %958 = vst.msk [vmem:[#allocation2] sm:$0xff] %vm957, %v938
        %959 = vst.msk [vmem:[#allocation2 + $0x8] sm:$0xff] %vm957, %v939
        %960 = vst.msk [vmem:[#allocation2 + $0x10] sm:$0xff] %vm957, %v940
        %961 = vst.msk [vmem:[#allocation2 + $0x18] sm:$0xff] %vm957, %v941
        %962 = vst.msk [vmem:[#allocation2 + $0x20] sm:$0xff] %vm957, %v942
        %963 = vst.msk [vmem:[#allocation2 + $0x28] sm:$0xff] %vm957, %v943
        %964 = vst.msk [vmem:[#allocation2 + $0x30] sm:$0xff] %vm957, %v944
        %965 = vst.msk [vmem:[#allocation2 + $0x38] sm:$0xff] %vm957, %v945
        %966 = vst.msk [vmem:[#allocation2 + $0x40] sm:$0xff] %vm957, %v946
        %967 = vst.msk [vmem:[#allocation2 + $0x48] sm:$0xff] %vm957, %v947
        %968 = vst.msk [vmem:[#allocation2 + $0x50] sm:$0xff] %vm957, %v948
        %969 = vst.msk [vmem:[#allocation2 + $0x58] sm:$0xff] %vm957, %v949
        %970 = vst.msk [vmem:[#allocation2 + $0x60] sm:$0xff] %vm957, %v950
        %971 = vst.msk [vmem:[#allocation2 + $0x68] sm:$0xff] %vm957, %v951
        %972 = vst.msk [vmem:[#allocation2 + $0x70] sm:$0xff] %vm957, %v952
        %973 = vst.msk [vmem:[#allocation2 + $0x78] sm:$0xff] %vm957, %v953
        %974 = vst.msk [vmem:[#allocation2 + $0x80] sm:$0xff] %vm957, %v954
        %975 = vst.msk [vmem:[#allocation2 + $0x88] sm:$0xff] %vm957, %v955
        %976 = vst.msk [vmem:[#allocation2 + $0x90] sm:$0xff] %vm957, %v956
        %v977 = vld [vmem:[#allocation2] sm:$0xff]
        %v978 = vld [vmem:[#allocation2 + $0x8] sm:$0xff]
        %v979 = vld [vmem:[#allocation2 + $0x10] sm:$0xff]
        %v980 = vld [vmem:[#allocation2 + $0x18] sm:$0xff]
        %v981 = vld [vmem:[#allocation2 + $0x20] sm:$0xff]
        %v982 = vld [vmem:[#allocation2 + $0x28] sm:$0xff]
        %v983 = vld [vmem:[#allocation2 + $0x30] sm:$0xff]
        %v984 = vld [vmem:[#allocation2 + $0x38] sm:$0xff]
        %v985 = vld [vmem:[#allocation2 + $0x40] sm:$0xff]
        %v986 = vld [vmem:[#allocation2 + $0x48] sm:$0xff]
        %v987 = vld [vmem:[#allocation2 + $0x50] sm:$0xff]
        %v988 = vld [vmem:[#allocation2 + $0x58] sm:$0xff]
        %v989 = vld [vmem:[#allocation2 + $0x60] sm:$0xff]
        %v990 = vld [vmem:[#allocation2 + $0x68] sm:$0xff]
        %v991 = vld [vmem:[#allocation2 + $0x70] sm:$0xff]
        %v992 = vld [vmem:[#allocation2 + $0x78] sm:$0xff]
        %v993 = vld [vmem:[#allocation2 + $0x80] sm:$0xff]
        %v994 = vld [vmem:[#allocation2 + $0x88] sm:$0xff]
        %v995 = vld [vmem:[#allocation2 + $0x90] sm:$0xff]
        %v996 = vld [vmem:[%s4] sm:$0xf]
        %v997 = vld [vmem:[%s4 + $0x4] sm:$0xf]
        %v998 = vld [vmem:[%s4 + $0x8] sm:$0xf]
        %v999 = vld [vmem:[%s4 + $0xc] sm:$0xf]
        %v1000 = vld [vmem:[%s4 + $0x10] sm:$0xf]
        %v1001 = vld [vmem:[%s4 + $0x14] sm:$0xf]
        %v1002 = vld [vmem:[%s4 + $0x18] sm:$0xf]
        %v1003 = vld [vmem:[%s4 + $0x1c] sm:$0xf]
        %v1004 = vld [vmem:[%s5] sm:$0x1]
        %v1006 = vlaneseq
        %v1007 = vshrl.u32 %v1006, 7
        %v1008 = vsub.s32 0, %v1007
        %v1009 = vrot.slane %v1004, %v1008
        %v1019 = vunpack.c.l.b16 %v996
        %v1020 = vunpack.c.l.b16 %v997
        %v1021 = vunpack.c.l.b16 %v998
        %v1022 = vunpack.c.l.b16 %v999
        %v1023 = vunpack.c.l.b16 %v1000
        %v1024 = vunpack.c.l.b16 %v1001
        %v1025 = vunpack.c.l.b16 %v1002
        %v1026 = vunpack.c.l.b16 %v1003
        %v1027 = vpack.c.b16 %v1020, %v1019
        %v1028 = vpack.c.b16 %v1022, %v1021
        %v1029 = vpack.c.b16 %v1024, %v1023
        %v1030 = vpack.c.b16 %v1026, %v1025
        %v1036 = vsel %vm957, %v977, 0
        %v1039 = vsel %vm957, %v978, 0
        %v1042 = vsel %vm957, %v979, 0
        %v1045 = vsel %vm957, %v980, 0
        %v1048 = vsel %vm957, %v981, 0
        %v1051 = vsel %vm957, %v982, 0
        %v1054 = vsel %vm957, %v983, 0
        %v1057 = vsel %vm957, %v984, 0
        %v1060 = vsel %vm957, %v985, 0
        %v1063 = vsel %vm957, %v986, 0
        %v1066 = vsel %vm957, %v987, 0
        %v1069 = vsel %vm957, %v988, 0
        %v1072 = vsel %vm957, %v989, 0
        %v1075 = vsel %vm957, %v990, 0
        %v1078 = vsel %vm957, %v991, 0
        %v1081 = vsel %vm957, %v992, 0
        %v1084 = vsel %vm957, %v993, 0
        %v1087 = vsel %vm957, %v994, 0
        %v1090 = vsel %vm957, %v995, 0
        %1092 = vmatprep.subr.bf16.mxu0 0
        %1093 = vmatpush1.bf16.msra.mxu0 %v1027
        %1094 = vmatprep.subr.bf16.mxu0 0
        %1095 = vmatpush1.bf16.msra.mxu0 %v1028
        %1096 = vmatprep.subr.bf16.mxu0 0
        %1097 = vmatpush1.bf16.msra.mxu0 %v1029
        %1098 = vmatprep.subr.bf16.mxu0 0
        %1099 = vmatpush1.bf16.msra.mxu0 %v1030
        %1100 = vmatprep.subr.bf16.mxu0 0
        %1101 = vmatpush1.bf16.msra.mxu0 0
        %1102 = vmatprep.subr.bf16.mxu0 0
        %1103 = vmatpush1.bf16.msra.mxu0 0
        %1104 = vmatprep.subr.bf16.mxu0 0
        %1105 = vmatpush1.bf16.msra.mxu0 0
        %1106 = vmatprep.subr.bf16.mxu0 0
        %1107 = vmatpush1.bf16.msra.mxu0 0
        %1108 = vmatprep.subr.bf16.mxu0 0
        %1109 = vmatpush1.bf16.msra.mxu0 0
        %1110 = vmatprep.subr.bf16.mxu0 0
        %1111 = vmatpush1.bf16.msra.mxu0 0
        %1112 = vmatprep.subr.bf16.mxu0 0
        %1113 = vmatpush1.bf16.msra.mxu0 0
        %1114 = vmatprep.subr.bf16.mxu0 0
        %1115 = vmatpush1.bf16.msra.mxu0 0
        %1116 = vmatprep.subr.bf16.mxu0 0
        %1117 = vmatpush1.bf16.msra.mxu0 0
        %1118 = vmatprep.subr.bf16.mxu0 0
        %1119 = vmatpush1.bf16.msra.mxu0 0
        %1120 = vmatprep.subr.bf16.mxu0 0
        %1121 = vmatpush1.bf16.msra.mxu0 0
        %1122 = vmatprep.subr.bf16.mxu0 0
        %1123 = vmatpush1.bf16.msra.mxu0 0
        %1124 = vmatprep.mubr.bf16.mxu0 0
        %1125 = vmatmul.mubr.bf16.gmra.mrb[0].mxu0 %v1036
        %v1126 = vpop.f32.mrb[0].mxu0
        %v1127 = vadd.f32 %v1009, %v1126
        %v1128 = vpop.f32.mrb[0].mxu0
        %v1129 = vpop.f32.mrb[0].mxu0
        %v1130 = vadd.f32 %v1009, %v1129
        %v1131 = vpop.f32.mrb[0].mxu0
        %1132 = vmatprep.mubr.bf16.mxu0 0
        %1133 = vmatmul.mubr.bf16.gmra.mrb[0].mxu0 %v1039
        %v1134 = vpop.f32.mrb[0].mxu0
        %v1135 = vadd.f32 %v1009, %v1134
        %v1136 = vpop.f32.mrb[0].mxu0
        %v1137 = vpop.f32.mrb[0].mxu0
        %v1138 = vadd.f32 %v1009, %v1137
        %v1139 = vpop.f32.mrb[0].mxu0
        %1140 = vmatprep.mubr.bf16.mxu0 0
        %1141 = vmatmul.mubr.bf16.gmra.mrb[0].mxu0 %v1042
        %v1142 = vpop.f32.mrb[0].mxu0
        %v1143 = vadd.f32 %v1009, %v1142
        %v1144 = vpop.f32.mrb[0].mxu0
        %v1145 = vpop.f32.mrb[0].mxu0
        %v1146 = vadd.f32 %v1009, %v1145
        %v1147 = vpop.f32.mrb[0].mxu0
        %1148 = vmatprep.mubr.bf16.mxu0 0
        %1149 = vmatmul.mubr.bf16.gmra.mrb[0].mxu0 %v1045
        %v1150 = vpop.f32.mrb[0].mxu0
        %v1151 = vadd.f32 %v1009, %v1150
        %v1152 = vpop.f32.mrb[0].mxu0
        %v1153 = vpop.f32.mrb[0].mxu0
        %v1154 = vadd.f32 %v1009, %v1153
        %v1155 = vpop.f32.mrb[0].mxu0
        %1156 = vmatprep.mubr.bf16.mxu0 0
        %1157 = vmatmul.mubr.bf16.gmra.mrb[0].mxu0 %v1048
        %v1158 = vpop.f32.mrb[0].mxu0
        %v1159 = vadd.f32 %v1009, %v1158
        %v1160 = vpop.f32.mrb[0].mxu0
        %v1161 = vpop.f32.mrb[0].mxu0
        %v1162 = vadd.f32 %v1009, %v1161
        %v1163 = vpop.f32.mrb[0].mxu0
        %1164 = vmatprep.mubr.bf16.mxu0 0
        %1165 = vmatmul.mubr.bf16.gmra.mrb[0].mxu0 %v1051
        %v1166 = vpop.f32.mrb[0].mxu0
        %v1167 = vadd.f32 %v1009, %v1166
        %v1168 = vpop.f32.mrb[0].mxu0
        %v1169 = vpop.f32.mrb[0].mxu0
        %v1170 = vadd.f32 %v1009, %v1169
        %v1171 = vpop.f32.mrb[0].mxu0
        %1172 = vmatprep.mubr.bf16.mxu0 0
        %1173 = vmatmul.mubr.bf16.gmra.mrb[0].mxu0 %v1054
        %v1174 = vpop.f32.mrb[0].mxu0
        %v1175 = vadd.f32 %v1009, %v1174
        %v1176 = vpop.f32.mrb[0].mxu0
        %v1177 = vpop.f32.mrb[0].mxu0
        %v1178 = vadd.f32 %v1009, %v1177
        %v1179 = vpop.f32.mrb[0].mxu0
        %1180 = vmatprep.mubr.bf16.mxu0 0
        %1181 = vmatmul.mubr.bf16.gmra.mrb[0].mxu0 %v1057
        %v1182 = vpop.f32.mrb[0].mxu0
        %v1183 = vadd.f32 %v1009, %v1182
        %v1184 = vpop.f32.mrb[0].mxu0
        %v1185 = vpop.f32.mrb[0].mxu0
        %v1186 = vadd.f32 %v1009, %v1185
        %v1187 = vpop.f32.mrb[0].mxu0
        %1188 = vmatprep.mubr.bf16.mxu0 0
        %1189 = vmatmul.mubr.bf16.gmra.mrb[0].mxu0 %v1060
        %v1190 = vpop.f32.mrb[0].mxu0
        %v1191 = vadd.f32 %v1009, %v1190
        %v1192 = vpop.f32.mrb[0].mxu0
        %v1193 = vpop.f32.mrb[0].mxu0
        %v1194 = vadd.f32 %v1009, %v1193
        %v1195 = vpop.f32.mrb[0].mxu0
        %1196 = vmatprep.mubr.bf16.mxu0 0
        %1197 = vmatmul.mubr.bf16.gmra.mrb[0].mxu0 %v1063
        %v1198 = vpop.f32.mrb[0].mxu0
        %v1199 = vadd.f32 %v1009, %v1198
        %v1200 = vpop.f32.mrb[0].mxu0
        %v1201 = vpop.f32.mrb[0].mxu0
        %v1202 = vadd.f32 %v1009, %v1201
        %v1203 = vpop.f32.mrb[0].mxu0
        %1204 = vmatprep.mubr.bf16.mxu0 0
        %1205 = vmatmul.mubr.bf16.gmra.mrb[0].mxu0 %v1066
        %v1206 = vpop.f32.mrb[0].mxu0
        %v1207 = vadd.f32 %v1009, %v1206
        %v1208 = vpop.f32.mrb[0].mxu0
        %v1209 = vpop.f32.mrb[0].mxu0
        %v1210 = vadd.f32 %v1009, %v1209
        %v1211 = vpop.f32.mrb[0].mxu0
        %1212 = vmatprep.mubr.bf16.mxu0 0
        %1213 = vmatmul.mubr.bf16.gmra.mrb[0].mxu0 %v1069
        %v1214 = vpop.f32.mrb[0].mxu0
        %v1215 = vadd.f32 %v1009, %v1214
        %v1216 = vpop.f32.mrb[0].mxu0
        %v1217 = vpop.f32.mrb[0].mxu0
        %v1218 = vadd.f32 %v1009, %v1217
        %v1219 = vpop.f32.mrb[0].mxu0
        %1220 = vmatprep.mubr.bf16.mxu0 0
        %1221 = vmatmul.mubr.bf16.gmra.mrb[0].mxu0 %v1072
        %v1222 = vpop.f32.mrb[0].mxu0
        %v1223 = vadd.f32 %v1009, %v1222
        %v1224 = vpop.f32.mrb[0].mxu0
        %v1225 = vpop.f32.mrb[0].mxu0
        %v1226 = vadd.f32 %v1009, %v1225
        %v1227 = vpop.f32.mrb[0].mxu0
        %1228 = vmatprep.mubr.bf16.mxu0 0
        %1229 = vmatmul.mubr.bf16.gmra.mrb[0].mxu0 %v1075
        %v1230 = vpop.f32.mrb[0].mxu0
        %v1231 = vadd.f32 %v1009, %v1230
        %v1232 = vpop.f32.mrb[0].mxu0
        %v1233 = vpop.f32.mrb[0].mxu0
        %v1234 = vadd.f32 %v1009, %v1233
        %v1235 = vpop.f32.mrb[0].mxu0
        %1236 = vmatprep.mubr.bf16.mxu0 0
        %1237 = vmatmul.mubr.bf16.gmra.mrb[0].mxu0 %v1078
        %v1238 = vpop.f32.mrb[0].mxu0
        %v1239 = vadd.f32 %v1009, %v1238
        %v1240 = vpop.f32.mrb[0].mxu0
        %v1241 = vpop.f32.mrb[0].mxu0
        %v1242 = vadd.f32 %v1009, %v1241
        %v1243 = vpop.f32.mrb[0].mxu0
        %1244 = vmatprep.mubr.bf16.mxu0 0
        %1245 = vmatmul.mubr.bf16.gmra.mrb[0].mxu0 %v1081
        %v1246 = vpop.f32.mrb[0].mxu0
        %v1247 = vadd.f32 %v1009, %v1246
        %v1248 = vpop.f32.mrb[0].mxu0
        %v1249 = vpop.f32.mrb[0].mxu0
        %v1250 = vadd.f32 %v1009, %v1249
        %v1251 = vpop.f32.mrb[0].mxu0
        %1252 = vmatprep.mubr.bf16.mxu0 0
        %1253 = vmatmul.mubr.bf16.gmra.mrb[0].mxu0 %v1084
        %v1254 = vpop.f32.mrb[0].mxu0
        %v1255 = vadd.f32 %v1009, %v1254
        %v1256 = vpop.f32.mrb[0].mxu0
        %v1257 = vpop.f32.mrb[0].mxu0
        %v1258 = vadd.f32 %v1009, %v1257
        %v1259 = vpop.f32.mrb[0].mxu0
        %1260 = vmatprep.mubr.bf16.mxu0 0
        %1261 = vmatmul.mubr.bf16.gmra.mrb[0].mxu0 %v1087
        %v1262 = vpop.f32.mrb[0].mxu0
        %v1263 = vadd.f32 %v1009, %v1262
        %v1264 = vpop.f32.mrb[0].mxu0
        %v1265 = vpop.f32.mrb[0].mxu0
        %v1266 = vadd.f32 %v1009, %v1265
        %v1267 = vpop.f32.mrb[0].mxu0
        %1268 = vmatprep.mubr.bf16.mxu0 0
        %1269 = vmatmul.mubr.bf16.gmra.mrb[0].mxu0 %v1090
        %v1270 = vpop.f32.mrb[0].mxu0
        %v1271 = vadd.f32 %v1009, %v1270
        %v1272 = vpop.f32.mrb[0].mxu0
        %v1273 = vpop.f32.mrb[0].mxu0
        %v1274 = vadd.f32 %v1009, %v1273
        %v1275 = vpop.f32.mrb[0].mxu0
        %1276 = vdwg.mxu0
        %v1277 = vmax.f32 %v1127, 0.0
        %v1278 = vmax.f32 %v1130, 0.0
        %v1279 = vmax.f32 %v1135, 0.0
        %v1280 = vmax.f32 %v1138, 0.0
        %v1281 = vmax.f32 %v1143, 0.0
        %v1282 = vmax.f32 %v1146, 0.0
        %v1283 = vmax.f32 %v1151, 0.0
        %v1284 = vmax.f32 %v1154, 0.0
        %v1285 = vmax.f32 %v1159, 0.0
        %v1286 = vmax.f32 %v1162, 0.0
        %v1287 = vmax.f32 %v1167, 0.0
        %v1288 = vmax.f32 %v1170, 0.0
        %v1289 = vmax.f32 %v1175, 0.0
        %v1290 = vmax.f32 %v1178, 0.0
        %v1291 = vmax.f32 %v1183, 0.0
        %v1292 = vmax.f32 %v1186, 0.0
        %v1293 = vmax.f32 %v1191, 0.0
        %v1294 = vmax.f32 %v1194, 0.0
        %v1295 = vmax.f32 %v1199, 0.0
        %v1296 = vmax.f32 %v1202, 0.0
        %v1297 = vmax.f32 %v1207, 0.0
        %v1298 = vmax.f32 %v1210, 0.0
        %v1299 = vmax.f32 %v1215, 0.0
        %v1300 = vmax.f32 %v1218, 0.0
        %v1301 = vmax.f32 %v1223, 0.0
        %v1302 = vmax.f32 %v1226, 0.0
        %v1303 = vmax.f32 %v1231, 0.0
        %v1304 = vmax.f32 %v1234, 0.0
        %v1305 = vmax.f32 %v1239, 0.0
        %v1306 = vmax.f32 %v1242, 0.0
        %v1307 = vmax.f32 %v1247, 0.0
        %v1308 = vmax.f32 %v1250, 0.0
        %v1309 = vmax.f32 %v1255, 0.0
        %v1310 = vmax.f32 %v1258, 0.0
        %v1311 = vmax.f32 %v1263, 0.0
        %v1312 = vmax.f32 %v1266, 0.0
        %v1313 = vmax.f32 %v1271, 0.0
        %v1314 = vmax.f32 %v1274, 0.0
        %v1315 = vpack.c.bf16 %v1278, %v1277
        %v1316 = vpack.c.bf16 %v1280, %v1279
        %v1317 = vpack.c.bf16 %v1282, %v1281
        %v1318 = vpack.c.bf16 %v1284, %v1283
        %v1319 = vpack.c.bf16 %v1286, %v1285
        %v1320 = vpack.c.bf16 %v1288, %v1287
        %v1321 = vpack.c.bf16 %v1290, %v1289
        %v1322 = vpack.c.bf16 %v1292, %v1291
        %v1323 = vpack.c.bf16 %v1294, %v1293
        %v1324 = vpack.c.bf16 %v1296, %v1295
        %v1325 = vpack.c.bf16 %v1298, %v1297
        %v1326 = vpack.c.bf16 %v1300, %v1299
        %v1327 = vpack.c.bf16 %v1302, %v1301
        %v1328 = vpack.c.bf16 %v1304, %v1303
        %v1329 = vpack.c.bf16 %v1306, %v1305
        %v1330 = vpack.c.bf16 %v1308, %v1307
        %v1331 = vpack.c.bf16 %v1310, %v1309
        %v1332 = vpack.c.bf16 %v1312, %v1311
        %v1333 = vpack.c.bf16 %v1314, %v1313
        %1334 = vst.msk [vmem:[#allocation2] sm:$0xff] %vm957, %v1315
        %1335 = vst.msk [vmem:[#allocation2 + $0x8] sm:$0xff] %vm957, %v1316
        %1336 = vst.msk [vmem:[#allocation2 + $0x10] sm:$0xff] %vm957, %v1317
        %1337 = vst.msk [vmem:[#allocation2 + $0x18] sm:$0xff] %vm957, %v1318
        %1338 = vst.msk [vmem:[#allocation2 + $0x20] sm:$0xff] %vm957, %v1319
        %1339 = vst.msk [vmem:[#allocation2 + $0x28] sm:$0xff] %vm957, %v1320
        %1340 = vst.msk [vmem:[#allocation2 + $0x30] sm:$0xff] %vm957, %v1321
        %1341 = vst.msk [vmem:[#allocation2 + $0x38] sm:$0xff] %vm957, %v1322
        %1342 = vst.msk [vmem:[#allocation2 + $0x40] sm:$0xff] %vm957, %v1323
        %1343 = vst.msk [vmem:[#allocation2 + $0x48] sm:$0xff] %vm957, %v1324
        %1344 = vst.msk [vmem:[#allocation2 + $0x50] sm:$0xff] %vm957, %v1325
        %1345 = vst.msk [vmem:[#allocation2 + $0x58] sm:$0xff] %vm957, %v1326
        %1346 = vst.msk [vmem:[#allocation2 + $0x60] sm:$0xff] %vm957, %v1327
        %1347 = vst.msk [vmem:[#allocation2 + $0x68] sm:$0xff] %vm957, %v1328
        %1348 = vst.msk [vmem:[#allocation2 + $0x70] sm:$0xff] %vm957, %v1329
        %1349 = vst.msk [vmem:[#allocation2 + $0x78] sm:$0xff] %vm957, %v1330
        %1350 = vst.msk [vmem:[#allocation2 + $0x80] sm:$0xff] %vm957, %v1331
        %1351 = vst.msk [vmem:[#allocation2 + $0x88] sm:$0xff] %vm957, %v1332
        %1352 = vst.msk [vmem:[#allocation2 + $0x90] sm:$0xff] %vm957, %v1333
        %v1353 = vld [vmem:[#allocation2] sm:$0xff]
        %v1354 = vld [vmem:[#allocation2 + $0x8] sm:$0xff]
        %v1355 = vld [vmem:[#allocation2 + $0x10] sm:$0xff]
        %v1356 = vld [vmem:[#allocation2 + $0x18] sm:$0xff]
        %v1357 = vld [vmem:[#allocation2 + $0x20] sm:$0xff]
        %v1358 = vld [vmem:[#allocation2 + $0x28] sm:$0xff]
        %v1359 = vld [vmem:[#allocation2 + $0x30] sm:$0xff]
        %v1360 = vld [vmem:[#allocation2 + $0x38] sm:$0xff]
        %v1361 = vld [vmem:[#allocation2 + $0x40] sm:$0xff]
        %v1362 = vld [vmem:[#allocation2 + $0x48] sm:$0xff]
        %v1363 = vld [vmem:[#allocation2 + $0x50] sm:$0xff]
        %v1364 = vld [vmem:[#allocation2 + $0x58] sm:$0xff]
        %v1365 = vld [vmem:[#allocation2 + $0x60] sm:$0xff]
        %v1366 = vld [vmem:[#allocation2 + $0x68] sm:$0xff]
        %v1367 = vld [vmem:[#allocation2 + $0x70] sm:$0xff]
        %v1368 = vld [vmem:[#allocation2 + $0x78] sm:$0xff]
        %v1369 = vld [vmem:[#allocation2 + $0x80] sm:$0xff]
        %v1370 = vld [vmem:[#allocation2 + $0x88] sm:$0xff]
        %v1371 = vld [vmem:[#allocation2 + $0x90] sm:$0xff]
        %v1372 = vld [vmem:[%s6] sm:$0xf]
        %v1373 = vld [vmem:[%s6 + $0x4] sm:$0xf]
        %v1374 = vld [vmem:[%s6 + $0x8] sm:$0xf]
        %v1375 = vld [vmem:[%s6 + $0xc] sm:$0xf]
        %v1376 = vld [vmem:[%s6 + $0x10] sm:$0xf]
        %v1377 = vld [vmem:[%s6 + $0x14] sm:$0xf]
        %v1378 = vld [vmem:[%s6 + $0x18] sm:$0xf]
        %v1379 = vld [vmem:[%s6 + $0x1c] sm:$0xf]
        %v1380 = vld [vmem:[%s6 + $0x20] sm:$0xf]
        %v1381 = vld [vmem:[%s6 + $0x24] sm:$0xf]
        %v1382 = vld [vmem:[%s6 + $0x28] sm:$0xf]
        %v1383 = vld [vmem:[%s6 + $0x2c] sm:$0xf]
        %v1384 = vld [vmem:[%s7] sm:$0x1]
        %v1386 = vlaneseq
        %v1387 = vshrl.u32 %v1386, 7
        %v1388 = vsub.s32 0, %v1387
        %v1389 = vrot.slane %v1384, %v1388
        %v1403 = vunpack.c.l.b16 %v1372
        %v1404 = vunpack.c.l.b16 %v1373
        %v1405 = vunpack.c.l.b16 %v1374
        %v1406 = vunpack.c.l.b16 %v1375
        %v1407 = vunpack.c.l.b16 %v1376
        %v1408 = vunpack.c.l.b16 %v1377
        %v1409 = vunpack.c.l.b16 %v1378
        %v1410 = vunpack.c.l.b16 %v1379
        %v1411 = vunpack.c.l.b16 %v1380
        %v1412 = vunpack.c.l.b16 %v1381
        %v1413 = vunpack.c.l.b16 %v1382
        %v1414 = vunpack.c.l.b16 %v1383
        %v1415 = vpack.c.b16 %v1404, %v1403
        %v1416 = vpack.c.b16 %v1406, %v1405
        %v1417 = vpack.c.b16 %v1408, %v1407
        %v1418 = vpack.c.b16 %v1410, %v1409
        %v1419 = vpack.c.b16 %v1412, %v1411
        %v1420 = vpack.c.b16 %v1414, %v1413
        %vm1427 = vcmask 785408
        %v1429 = vsel %vm1427, %v1353, 0
        %v1432 = vsel %vm1427, %v1354, 0
        %v1435 = vsel %vm1427, %v1355, 0
        %v1438 = vsel %vm1427, %v1356, 0
        %v1441 = vsel %vm1427, %v1357, 0
        %v1444 = vsel %vm1427, %v1358, 0
        %v1447 = vsel %vm1427, %v1359, 0
        %v1450 = vsel %vm1427, %v1360, 0
        %v1453 = vsel %vm1427, %v1361, 0
        %v1456 = vsel %vm1427, %v1362, 0
        %v1459 = vsel %vm1427, %v1363, 0
        %v1462 = vsel %vm1427, %v1364, 0
        %v1465 = vsel %vm1427, %v1365, 0
        %v1468 = vsel %vm1427, %v1366, 0
        %v1471 = vsel %vm1427, %v1367, 0
        %v1474 = vsel %vm1427, %v1368, 0
        %v1477 = vsel %vm1427, %v1369, 0
        %v1480 = vsel %vm1427, %v1370, 0
        %v1483 = vsel %vm1427, %v1371, 0
        %1485 = vmatprep.subr.bf16.mxu0 0
        %1486 = vmatpush1.bf16.msra.mxu0 %v1415
        %1487 = vmatprep.subr.bf16.mxu0 0
        %1488 = vmatpush1.bf16.msra.mxu0 %v1416
        %1489 = vmatprep.subr.bf16.mxu0 0
        %1490 = vmatpush1.bf16.msra.mxu0 %v1417
        %1491 = vmatprep.subr.bf16.mxu0 0
        %1492 = vmatpush1.bf16.msra.mxu0 %v1418
        %1493 = vmatprep.subr.bf16.mxu0 0
        %1494 = vmatpush1.bf16.msra.mxu0 %v1419
        %1495 = vmatprep.subr.bf16.mxu0 0
        %1496 = vmatpush1.bf16.msra.mxu0 %v1420
        %1497 = vmatprep.subr.bf16.mxu0 0
        %1498 = vmatpush1.bf16.msra.mxu0 0
        %1499 = vmatprep.subr.bf16.mxu0 0
        %1500 = vmatpush1.bf16.msra.mxu0 0
        %1501 = vmatprep.subr.bf16.mxu0 0
        %1502 = vmatpush1.bf16.msra.mxu0 0
        %1503 = vmatprep.subr.bf16.mxu0 0
        %1504 = vmatpush1.bf16.msra.mxu0 0
        %1505 = vmatprep.subr.bf16.mxu0 0
        %1506 = vmatpush1.bf16.msra.mxu0 0
        %1507 = vmatprep.subr.bf16.mxu0 0
        %1508 = vmatpush1.bf16.msra.mxu0 0
        %1509 = vmatprep.subr.bf16.mxu0 0
        %1510 = vmatpush1.bf16.msra.mxu0 0
        %1511 = vmatprep.subr.bf16.mxu0 0
        %1512 = vmatpush1.bf16.msra.mxu0 0
        %1513 = vmatprep.subr.bf16.mxu0 0
        %1514 = vmatpush1.bf16.msra.mxu0 0
        %1515 = vmatprep.subr.bf16.mxu0 0
        %1516 = vmatpush1.bf16.msra.mxu0 0
        %1517 = vmatprep.mubr.bf16.mxu0 0
        %1518 = vmatmul.mubr.bf16.gmra.mrb[0].mxu0 %v1429
        %v1519 = vpop.f32.mrb[0].mxu0
        %v1520 = vadd.f32 %v1389, %v1519
        %v1521 = vpop.f32.mrb[0].mxu0
        %v1522 = vpop.f32.mrb[0].mxu0
        %v1523 = vadd.f32 %v1389, %v1522
        %v1524 = vpop.f32.mrb[0].mxu0
        %1525 = vmatprep.mubr.bf16.mxu0 0
        %1526 = vmatmul.mubr.bf16.gmra.mrb[0].mxu0 %v1432
        %v1527 = vpop.f32.mrb[0].mxu0
        %v1528 = vadd.f32 %v1389, %v1527
        %v1529 = vpop.f32.mrb[0].mxu0
        %v1530 = vpop.f32.mrb[0].mxu0
        %v1531 = vadd.f32 %v1389, %v1530
        %v1532 = vpop.f32.mrb[0].mxu0
        %1533 = vmatprep.mubr.bf16.mxu0 0
        %1534 = vmatmul.mubr.bf16.gmra.mrb[0].mxu0 %v1435
        %v1535 = vpop.f32.mrb[0].mxu0
        %v1536 = vadd.f32 %v1389, %v1535
        %v1537 = vpop.f32.mrb[0].mxu0
        %v1538 = vpop.f32.mrb[0].mxu0
        %v1539 = vadd.f32 %v1389, %v1538
        %v1540 = vpop.f32.mrb[0].mxu0
        %1541 = vmatprep.mubr.bf16.mxu0 0
        %1542 = vmatmul.mubr.bf16.gmra.mrb[0].mxu0 %v1438
        %v1543 = vpop.f32.mrb[0].mxu0
        %v1544 = vadd.f32 %v1389, %v1543
        %v1545 = vpop.f32.mrb[0].mxu0
        %v1546 = vpop.f32.mrb[0].mxu0
        %v1547 = vadd.f32 %v1389, %v1546
        %v1548 = vpop.f32.mrb[0].mxu0
        %1549 = vmatprep.mubr.bf16.mxu0 0
        %1550 = vmatmul.mubr.bf16.gmra.mrb[0].mxu0 %v1441
        %v1551 = vpop.f32.mrb[0].mxu0
        %v1552 = vadd.f32 %v1389, %v1551
        %v1553 = vpop.f32.mrb[0].mxu0
        %v1554 = vpop.f32.mrb[0].mxu0
        %v1555 = vadd.f32 %v1389, %v1554
        %v1556 = vpop.f32.mrb[0].mxu0
        %1557 = vmatprep.mubr.bf16.mxu0 0
        %1558 = vmatmul.mubr.bf16.gmra.mrb[0].mxu0 %v1444
        %v1559 = vpop.f32.mrb[0].mxu0
        %v1560 = vadd.f32 %v1389, %v1559
        %v1561 = vpop.f32.mrb[0].mxu0
        %v1562 = vpop.f32.mrb[0].mxu0
        %v1563 = vadd.f32 %v1389, %v1562
        %v1564 = vpop.f32.mrb[0].mxu0
        %1565 = vmatprep.mubr.bf16.mxu0 0
        %1566 = vmatmul.mubr.bf16.gmra.mrb[0].mxu0 %v1447
        %v1567 = vpop.f32.mrb[0].mxu0
        %v1568 = vadd.f32 %v1389, %v1567
        %v1569 = vpop.f32.mrb[0].mxu0
        %v1570 = vpop.f32.mrb[0].mxu0
        %v1571 = vadd.f32 %v1389, %v1570
        %v1572 = vpop.f32.mrb[0].mxu0
        %1573 = vmatprep.mubr.bf16.mxu0 0
        %1574 = vmatmul.mubr.bf16.gmra.mrb[0].mxu0 %v1450
        %v1575 = vpop.f32.mrb[0].mxu0
        %v1576 = vadd.f32 %v1389, %v1575
        %v1577 = vpop.f32.mrb[0].mxu0
        %v1578 = vpop.f32.mrb[0].mxu0
        %v1579 = vadd.f32 %v1389, %v1578
        %v1580 = vpop.f32.mrb[0].mxu0
        %1581 = vmatprep.mubr.bf16.mxu0 0
        %1582 = vmatmul.mubr.bf16.gmra.mrb[0].mxu0 %v1453
        %v1583 = vpop.f32.mrb[0].mxu0
        %v1584 = vadd.f32 %v1389, %v1583
        %v1585 = vpop.f32.mrb[0].mxu0
        %v1586 = vpop.f32.mrb[0].mxu0
        %v1587 = vadd.f32 %v1389, %v1586
        %v1588 = vpop.f32.mrb[0].mxu0
        %1589 = vmatprep.mubr.bf16.mxu0 0
        %1590 = vmatmul.mubr.bf16.gmra.mrb[0].mxu0 %v1456
        %v1591 = vpop.f32.mrb[0].mxu0
        %v1592 = vadd.f32 %v1389, %v1591
        %v1593 = vpop.f32.mrb[0].mxu0
        %v1594 = vpop.f32.mrb[0].mxu0
        %v1595 = vadd.f32 %v1389, %v1594
        %v1596 = vpop.f32.mrb[0].mxu0
        %1597 = vmatprep.mubr.bf16.mxu0 0
        %1598 = vmatmul.mubr.bf16.gmra.mrb[0].mxu0 %v1459
        %v1599 = vpop.f32.mrb[0].mxu0
        %v1600 = vadd.f32 %v1389, %v1599
        %v1601 = vpop.f32.mrb[0].mxu0
        %v1602 = vpop.f32.mrb[0].mxu0
        %v1603 = vadd.f32 %v1389, %v1602
        %v1604 = vpop.f32.mrb[0].mxu0
        %1605 = vmatprep.mubr.bf16.mxu0 0
        %1606 = vmatmul.mubr.bf16.gmra.mrb[0].mxu0 %v1462
        %v1607 = vpop.f32.mrb[0].mxu0
        %v1608 = vadd.f32 %v1389, %v1607
        %v1609 = vpop.f32.mrb[0].mxu0
        %v1610 = vpop.f32.mrb[0].mxu0
        %v1611 = vadd.f32 %v1389, %v1610
        %v1612 = vpop.f32.mrb[0].mxu0
        %1613 = vmatprep.mubr.bf16.mxu0 0
        %1614 = vmatmul.mubr.bf16.gmra.mrb[0].mxu0 %v1465
        %v1615 = vpop.f32.mrb[0].mxu0
        %v1616 = vadd.f32 %v1389, %v1615
        %v1617 = vpop.f32.mrb[0].mxu0
        %v1618 = vpop.f32.mrb[0].mxu0
        %v1619 = vadd.f32 %v1389, %v1618
        %v1620 = vpop.f32.mrb[0].mxu0
        %1621 = vmatprep.mubr.bf16.mxu0 0
        %1622 = vmatmul.mubr.bf16.gmra.mrb[0].mxu0 %v1468
        %v1623 = vpop.f32.mrb[0].mxu0
        %v1624 = vadd.f32 %v1389, %v1623
        %v1625 = vpop.f32.mrb[0].mxu0
        %v1626 = vpop.f32.mrb[0].mxu0
        %v1627 = vadd.f32 %v1389, %v1626
        %v1628 = vpop.f32.mrb[0].mxu0
        %1629 = vmatprep.mubr.bf16.mxu0 0
        %1630 = vmatmul.mubr.bf16.gmra.mrb[0].mxu0 %v1471
        %v1631 = vpop.f32.mrb[0].mxu0
        %v1632 = vadd.f32 %v1389, %v1631
        %v1633 = vpop.f32.mrb[0].mxu0
        %v1634 = vpop.f32.mrb[0].mxu0
        %v1635 = vadd.f32 %v1389, %v1634
        %v1636 = vpop.f32.mrb[0].mxu0
        %1637 = vmatprep.mubr.bf16.mxu0 0
        %1638 = vmatmul.mubr.bf16.gmra.mrb[0].mxu0 %v1474
        %v1639 = vpop.f32.mrb[0].mxu0
        %v1640 = vadd.f32 %v1389, %v1639
        %v1641 = vpop.f32.mrb[0].mxu0
        %v1642 = vpop.f32.mrb[0].mxu0
        %v1643 = vadd.f32 %v1389, %v1642
        %v1644 = vpop.f32.mrb[0].mxu0
        %1645 = vmatprep.mubr.bf16.mxu0 0
        %1646 = vmatmul.mubr.bf16.gmra.mrb[0].mxu0 %v1477
        %v1647 = vpop.f32.mrb[0].mxu0
        %v1648 = vadd.f32 %v1389, %v1647
        %v1649 = vpop.f32.mrb[0].mxu0
        %v1650 = vpop.f32.mrb[0].mxu0
        %v1651 = vadd.f32 %v1389, %v1650
        %v1652 = vpop.f32.mrb[0].mxu0
        %1653 = vmatprep.mubr.bf16.mxu0 0
        %1654 = vmatmul.mubr.bf16.gmra.mrb[0].mxu0 %v1480
        %v1655 = vpop.f32.mrb[0].mxu0
        %v1656 = vadd.f32 %v1389, %v1655
        %v1657 = vpop.f32.mrb[0].mxu0
        %v1658 = vpop.f32.mrb[0].mxu0
        %v1659 = vadd.f32 %v1389, %v1658
        %v1660 = vpop.f32.mrb[0].mxu0
        %1661 = vmatprep.mubr.bf16.mxu0 0
        %1662 = vmatmul.mubr.bf16.gmra.mrb[0].mxu0 %v1483
        %v1663 = vpop.f32.mrb[0].mxu0
        %v1664 = vadd.f32 %v1389, %v1663
        %v1665 = vpop.f32.mrb[0].mxu0
        %v1666 = vpop.f32.mrb[0].mxu0
        %v1667 = vadd.f32 %v1389, %v1666
        %v1668 = vpop.f32.mrb[0].mxu0
        %1669 = vdwg.mxu0
        %v1670 = vmax.f32 %v1520, 0.0
        %v1671 = vmax.f32 %v1523, 0.0
        %v1672 = vmax.f32 %v1528, 0.0
        %v1673 = vmax.f32 %v1531, 0.0
        %v1674 = vmax.f32 %v1536, 0.0
        %v1675 = vmax.f32 %v1539, 0.0
        %v1676 = vmax.f32 %v1544, 0.0
        %v1677 = vmax.f32 %v1547, 0.0
        %v1678 = vmax.f32 %v1552, 0.0
        %v1679 = vmax.f32 %v1555, 0.0
        %v1680 = vmax.f32 %v1560, 0.0
        %v1681 = vmax.f32 %v1563, 0.0
        %v1682 = vmax.f32 %v1568, 0.0
        %v1683 = vmax.f32 %v1571, 0.0
        %v1684 = vmax.f32 %v1576, 0.0
        %v1685 = vmax.f32 %v1579, 0.0
        %v1686 = vmax.f32 %v1584, 0.0
        %v1687 = vmax.f32 %v1587, 0.0
        %v1688 = vmax.f32 %v1592, 0.0
        %v1689 = vmax.f32 %v1595, 0.0
        %v1690 = vmax.f32 %v1600, 0.0
        %v1691 = vmax.f32 %v1603, 0.0
        %v1692 = vmax.f32 %v1608, 0.0
        %v1693 = vmax.f32 %v1611, 0.0
        %v1694 = vmax.f32 %v1616, 0.0
        %v1695 = vmax.f32 %v1619, 0.0
        %v1696 = vmax.f32 %v1624, 0.0
        %v1697 = vmax.f32 %v1627, 0.0
        %v1698 = vmax.f32 %v1632, 0.0
        %v1699 = vmax.f32 %v1635, 0.0
        %v1700 = vmax.f32 %v1640, 0.0
        %v1701 = vmax.f32 %v1643, 0.0
        %v1702 = vmax.f32 %v1648, 0.0
        %v1703 = vmax.f32 %v1651, 0.0
        %v1704 = vmax.f32 %v1656, 0.0
        %v1705 = vmax.f32 %v1659, 0.0
        %v1706 = vmax.f32 %v1664, 0.0
        %v1707 = vmax.f32 %v1667, 0.0
        %v1708 = vpack.c.bf16 %v1671, %v1670
        %v1709 = vpack.c.bf16 %v1673, %v1672
        %v1710 = vpack.c.bf16 %v1675, %v1674
        %v1711 = vpack.c.bf16 %v1677, %v1676
        %v1712 = vpack.c.bf16 %v1679, %v1678
        %v1713 = vpack.c.bf16 %v1681, %v1680
        %v1714 = vpack.c.bf16 %v1683, %v1682
        %v1715 = vpack.c.bf16 %v1685, %v1684
        %v1716 = vpack.c.bf16 %v1687, %v1686
        %v1717 = vpack.c.bf16 %v1689, %v1688
        %v1718 = vpack.c.bf16 %v1691, %v1690
        %v1719 = vpack.c.bf16 %v1693, %v1692
        %v1720 = vpack.c.bf16 %v1695, %v1694
        %v1721 = vpack.c.bf16 %v1697, %v1696
        %v1722 = vpack.c.bf16 %v1699, %v1698
        %v1723 = vpack.c.bf16 %v1701, %v1700
        %v1724 = vpack.c.bf16 %v1703, %v1702
        %v1725 = vpack.c.bf16 %v1705, %v1704
        %v1726 = vpack.c.bf16 %v1707, %v1706
        %1727 = vst.msk [vmem:[#allocation2] sm:$0xff] %vm957, %v1708
        %1728 = vst.msk [vmem:[#allocation2 + $0x8] sm:$0xff] %vm957, %v1709
        %1729 = vst.msk [vmem:[#allocation2 + $0x10] sm:$0xff] %vm957, %v1710
        %1730 = vst.msk [vmem:[#allocation2 + $0x18] sm:$0xff] %vm957, %v1711
        %1731 = vst.msk [vmem:[#allocation2 + $0x20] sm:$0xff] %vm957, %v1712
        %1732 = vst.msk [vmem:[#allocation2 + $0x28] sm:$0xff] %vm957, %v1713
        %1733 = vst.msk [vmem:[#allocation2 + $0x30] sm:$0xff] %vm957, %v1714
        %1734 = vst.msk [vmem:[#allocation2 + $0x38] sm:$0xff] %vm957, %v1715
        %1735 = vst.msk [vmem:[#allocation2 + $0x40] sm:$0xff] %vm957, %v1716
        %1736 = vst.msk [vmem:[#allocation2 + $0x48] sm:$0xff] %vm957, %v1717
        %1737 = vst.msk [vmem:[#allocation2 + $0x50] sm:$0xff] %vm957, %v1718
        %1738 = vst.msk [vmem:[#allocation2 + $0x58] sm:$0xff] %vm957, %v1719
        %1739 = vst.msk [vmem:[#allocation2 + $0x60] sm:$0xff] %vm957, %v1720
        %1740 = vst.msk [vmem:[#allocation2 + $0x68] sm:$0xff] %vm957, %v1721
        %1741 = vst.msk [vmem:[#allocation2 + $0x70] sm:$0xff] %vm957, %v1722
        %1742 = vst.msk [vmem:[#allocation2 + $0x78] sm:$0xff] %vm957, %v1723
        %1743 = vst.msk [vmem:[#allocation2 + $0x80] sm:$0xff] %vm957, %v1724
        %1744 = vst.msk [vmem:[#allocation2 + $0x88] sm:$0xff] %vm957, %v1725
        %1745 = vst.msk [vmem:[#allocation2 + $0x90] sm:$0xff] %vm957, %v1726
        %v1746 = vld [vmem:[#allocation2] sm:$0xff]
        %v1747 = vld [vmem:[#allocation2 + $0x8] sm:$0xff]
        %v1748 = vld [vmem:[#allocation2 + $0x10] sm:$0xff]
        %v1749 = vld [vmem:[#allocation2 + $0x18] sm:$0xff]
        %v1750 = vld [vmem:[#allocation2 + $0x20] sm:$0xff]
        %v1751 = vld [vmem:[#allocation2 + $0x28] sm:$0xff]
        %v1752 = vld [vmem:[#allocation2 + $0x30] sm:$0xff]
        %v1753 = vld [vmem:[#allocation2 + $0x38] sm:$0xff]
        %v1754 = vld [vmem:[#allocation2 + $0x40] sm:$0xff]
        %v1755 = vld [vmem:[#allocation2 + $0x48] sm:$0xff]
        %v1756 = vld [vmem:[#allocation2 + $0x50] sm:$0xff]
        %v1757 = vld [vmem:[#allocation2 + $0x58] sm:$0xff]
        %v1758 = vld [vmem:[#allocation2 + $0x60] sm:$0xff]
        %v1759 = vld [vmem:[#allocation2 + $0x68] sm:$0xff]
        %v1760 = vld [vmem:[#allocation2 + $0x70] sm:$0xff]
        %v1761 = vld [vmem:[#allocation2 + $0x78] sm:$0xff]
        %v1762 = vld [vmem:[#allocation2 + $0x80] sm:$0xff]
        %v1763 = vld [vmem:[#allocation2 + $0x88] sm:$0xff]
        %v1764 = vld [vmem:[#allocation2 + $0x90] sm:$0xff]
        %v1765 = vld [vmem:[%s8] sm:$0xf]
        %v1766 = vld [vmem:[%s8 + $0x4] sm:$0xf]
        %v1767 = vld [vmem:[%s8 + $0x8] sm:$0xf]
        %v1768 = vld [vmem:[%s8 + $0xc] sm:$0xf]
        %v1769 = vld [vmem:[%s8 + $0x10] sm:$0xf]
        %v1770 = vld [vmem:[%s8 + $0x14] sm:$0xf]
        %v1771 = vld [vmem:[%s8 + $0x18] sm:$0xf]
        %v1772 = vld [vmem:[%s8 + $0x1c] sm:$0xf]
        %v1773 = vld [vmem:[%s9] sm:$0x1]
        %v1775 = vlaneseq
        %v1776 = vshrl.u32 %v1775, 7
        %v1777 = vsub.s32 0, %v1776
        %v1778 = vrot.slane %v1773, %v1777
        %v1788 = vunpack.c.l.b16 %v1765
        %v1789 = vunpack.c.l.b16 %v1766
        %v1790 = vunpack.c.l.b16 %v1767
        %v1791 = vunpack.c.l.b16 %v1768
        %v1792 = vunpack.c.l.b16 %v1769
        %v1793 = vunpack.c.l.b16 %v1770
        %v1794 = vunpack.c.l.b16 %v1771
        %v1795 = vunpack.c.l.b16 %v1772
        %v1796 = vpack.c.b16 %v1789, %v1788
        %v1797 = vpack.c.b16 %v1791, %v1790
        %v1798 = vpack.c.b16 %v1793, %v1792
        %v1799 = vpack.c.b16 %v1795, %v1794
        %v1805 = vsel %vm957, %v1746, 0
        %v1808 = vsel %vm957, %v1747, 0
        %v1811 = vsel %vm957, %v1748, 0
        %v1814 = vsel %vm957, %v1749, 0
        %v1817 = vsel %vm957, %v1750, 0
        %v1820 = vsel %vm957, %v1751, 0
        %v1823 = vsel %vm957, %v1752, 0
        %v1826 = vsel %vm957, %v1753, 0
        %v1829 = vsel %vm957, %v1754, 0
        %v1832 = vsel %vm957, %v1755, 0
        %v1835 = vsel %vm957, %v1756, 0
        %v1838 = vsel %vm957, %v1757, 0
        %v1841 = vsel %vm957, %v1758, 0
        %v1844 = vsel %vm957, %v1759, 0
        %v1847 = vsel %vm957, %v1760, 0
        %v1850 = vsel %vm957, %v1761, 0
        %v1853 = vsel %vm957, %v1762, 0
        %v1856 = vsel %vm957, %v1763, 0
        %v1859 = vsel %vm957, %v1764, 0
        %1861 = vmatprep.subr.bf16.mxu0 0
        %1862 = vmatpush1.bf16.msra.mxu0 %v1796
        %1863 = vmatprep.subr.bf16.mxu0 0
        %1864 = vmatpush1.bf16.msra.mxu0 %v1797
        %1865 = vmatprep.subr.bf16.mxu0 0
        %1866 = vmatpush1.bf16.msra.mxu0 %v1798
        %1867 = vmatprep.subr.bf16.mxu0 0
        %1868 = vmatpush1.bf16.msra.mxu0 %v1799
        %1869 = vmatprep.subr.bf16.mxu0 0
        %1870 = vmatpush1.bf16.msra.mxu0 0
        %1871 = vmatprep.subr.bf16.mxu0 0
        %1872 = vmatpush1.bf16.msra.mxu0 0
        %1873 = vmatprep.subr.bf16.mxu0 0
        %1874 = vmatpush1.bf16.msra.mxu0 0
        %1875 = vmatprep.subr.bf16.mxu0 0
        %1876 = vmatpush1.bf16.msra.mxu0 0
        %1877 = vmatprep.subr.bf16.mxu0 0
        %1878 = vmatpush1.bf16.msra.mxu0 0
        %1879 = vmatprep.subr.bf16.mxu0 0
        %1880 = vmatpush1.bf16.msra.mxu0 0
        %1881 = vmatprep.subr.bf16.mxu0 0
        %1882 = vmatpush1.bf16.msra.mxu0 0
        %1883 = vmatprep.subr.bf16.mxu0 0
        %1884 = vmatpush1.bf16.msra.mxu0 0
        %1885 = vmatprep.subr.bf16.mxu0 0
        %1886 = vmatpush1.bf16.msra.mxu0 0
        %1887 = vmatprep.subr.bf16.mxu0 0
        %1888 = vmatpush1.bf16.msra.mxu0 0
        %1889 = vmatprep.subr.bf16.mxu0 0
        %1890 = vmatpush1.bf16.msra.mxu0 0
        %1891 = vmatprep.subr.bf16.mxu0 0
        %1892 = vmatpush1.bf16.msra.mxu0 0
        %1893 = vmatprep.mubr.bf16.mxu0 0
        %1894 = vmatmul.mubr.bf16.gmra.mrb[0].mxu0 %v1805
        %v1895 = vpop.f32.mrb[0].mxu0
        %v1896 = vadd.f32 %v1778, %v1895
        %v1897 = vpop.f32.mrb[0].mxu0
        %v1898 = vpop.f32.mrb[0].mxu0
        %v1899 = vadd.f32 %v1778, %v1898
        %v1900 = vpop.f32.mrb[0].mxu0
        %1901 = vmatprep.mubr.bf16.mxu0 0
        %1902 = vmatmul.mubr.bf16.gmra.mrb[0].mxu0 %v1808
        %v1903 = vpop.f32.mrb[0].mxu0
        %v1904 = vadd.f32 %v1778, %v1903
        %v1905 = vpop.f32.mrb[0].mxu0
        %v1906 = vpop.f32.mrb[0].mxu0
        %v1907 = vadd.f32 %v1778, %v1906
        %v1908 = vpop.f32.mrb[0].mxu0
        %1909 = vmatprep.mubr.bf16.mxu0 0
        %1910 = vmatmul.mubr.bf16.gmra.mrb[0].mxu0 %v1811
        %v1911 = vpop.f32.mrb[0].mxu0
        %v1912 = vadd.f32 %v1778, %v1911
        %v1913 = vpop.f32.mrb[0].mxu0
        %v1914 = vpop.f32.mrb[0].mxu0
        %v1915 = vadd.f32 %v1778, %v1914
        %v1916 = vpop.f32.mrb[0].mxu0
        %1917 = vmatprep.mubr.bf16.mxu0 0
        %1918 = vmatmul.mubr.bf16.gmra.mrb[0].mxu0 %v1814
        %v1919 = vpop.f32.mrb[0].mxu0
        %v1920 = vadd.f32 %v1778, %v1919
        %v1921 = vpop.f32.mrb[0].mxu0
        %v1922 = vpop.f32.mrb[0].mxu0
        %v1923 = vadd.f32 %v1778, %v1922
        %v1924 = vpop.f32.mrb[0].mxu0
        %1925 = vmatprep.mubr.bf16.mxu0 0
        %1926 = vmatmul.mubr.bf16.gmra.mrb[0].mxu0 %v1817
        %v1927 = vpop.f32.mrb[0].mxu0
        %v1928 = vadd.f32 %v1778, %v1927
        %v1929 = vpop.f32.mrb[0].mxu0
        %v1930 = vpop.f32.mrb[0].mxu0
        %v1931 = vadd.f32 %v1778, %v1930
        %v1932 = vpop.f32.mrb[0].mxu0
        %1933 = vmatprep.mubr.bf16.mxu0 0
        %1934 = vmatmul.mubr.bf16.gmra.mrb[0].mxu0 %v1820
        %v1935 = vpop.f32.mrb[0].mxu0
        %v1936 = vadd.f32 %v1778, %v1935
        %v1937 = vpop.f32.mrb[0].mxu0
        %v1938 = vpop.f32.mrb[0].mxu0
        %v1939 = vadd.f32 %v1778, %v1938
        %v1940 = vpop.f32.mrb[0].mxu0
        %1941 = vmatprep.mubr.bf16.mxu0 0
        %1942 = vmatmul.mubr.bf16.gmra.mrb[0].mxu0 %v1823
        %v1943 = vpop.f32.mrb[0].mxu0
        %v1944 = vadd.f32 %v1778, %v1943
        %v1945 = vpop.f32.mrb[0].mxu0
        %v1946 = vpop.f32.mrb[0].mxu0
        %v1947 = vadd.f32 %v1778, %v1946
        %v1948 = vpop.f32.mrb[0].mxu0
        %1949 = vmatprep.mubr.bf16.mxu0 0
        %1950 = vmatmul.mubr.bf16.gmra.mrb[0].mxu0 %v1826
        %v1951 = vpop.f32.mrb[0].mxu0
        %v1952 = vadd.f32 %v1778, %v1951
        %v1953 = vpop.f32.mrb[0].mxu0
        %v1954 = vpop.f32.mrb[0].mxu0
        %v1955 = vadd.f32 %v1778, %v1954
        %v1956 = vpop.f32.mrb[0].mxu0
        %1957 = vmatprep.mubr.bf16.mxu0 0
        %1958 = vmatmul.mubr.bf16.gmra.mrb[0].mxu0 %v1829
        %v1959 = vpop.f32.mrb[0].mxu0
        %v1960 = vadd.f32 %v1778, %v1959
        %v1961 = vpop.f32.mrb[0].mxu0
        %v1962 = vpop.f32.mrb[0].mxu0
        %v1963 = vadd.f32 %v1778, %v1962
        %v1964 = vpop.f32.mrb[0].mxu0
        %1965 = vmatprep.mubr.bf16.mxu0 0
        %1966 = vmatmul.mubr.bf16.gmra.mrb[0].mxu0 %v1832
        %v1967 = vpop.f32.mrb[0].mxu0
        %v1968 = vadd.f32 %v1778, %v1967
        %v1969 = vpop.f32.mrb[0].mxu0
        %v1970 = vpop.f32.mrb[0].mxu0
        %v1971 = vadd.f32 %v1778, %v1970
        %v1972 = vpop.f32.mrb[0].mxu0
        %1973 = vmatprep.mubr.bf16.mxu0 0
        %1974 = vmatmul.mubr.bf16.gmra.mrb[0].mxu0 %v1835
        %v1975 = vpop.f32.mrb[0].mxu0
        %v1976 = vadd.f32 %v1778, %v1975
        %v1977 = vpop.f32.mrb[0].mxu0
        %v1978 = vpop.f32.mrb[0].mxu0
        %v1979 = vadd.f32 %v1778, %v1978
        %v1980 = vpop.f32.mrb[0].mxu0
        %1981 = vmatprep.mubr.bf16.mxu0 0
        %1982 = vmatmul.mubr.bf16.gmra.mrb[0].mxu0 %v1838
        %v1983 = vpop.f32.mrb[0].mxu0
        %v1984 = vadd.f32 %v1778, %v1983
        %v1985 = vpop.f32.mrb[0].mxu0
        %v1986 = vpop.f32.mrb[0].mxu0
        %v1987 = vadd.f32 %v1778, %v1986
        %v1988 = vpop.f32.mrb[0].mxu0
        %1989 = vmatprep.mubr.bf16.mxu0 0
        %1990 = vmatmul.mubr.bf16.gmra.mrb[0].mxu0 %v1841
        %v1991 = vpop.f32.mrb[0].mxu0
        %v1992 = vadd.f32 %v1778, %v1991
        %v1993 = vpop.f32.mrb[0].mxu0
        %v1994 = vpop.f32.mrb[0].mxu0
        %v1995 = vadd.f32 %v1778, %v1994
        %v1996 = vpop.f32.mrb[0].mxu0
        %1997 = vmatprep.mubr.bf16.mxu0 0
        %1998 = vmatmul.mubr.bf16.gmra.mrb[0].mxu0 %v1844
        %v1999 = vpop.f32.mrb[0].mxu0
        %v2000 = vadd.f32 %v1778, %v1999
        %v2001 = vpop.f32.mrb[0].mxu0
        %v2002 = vpop.f32.mrb[0].mxu0
        %v2003 = vadd.f32 %v1778, %v2002
        %v2004 = vpop.f32.mrb[0].mxu0
        %2005 = vmatprep.mubr.bf16.mxu0 0
        %2006 = vmatmul.mubr.bf16.gmra.mrb[0].mxu0 %v1847
        %v2007 = vpop.f32.mrb[0].mxu0
        %v2008 = vadd.f32 %v1778, %v2007
        %v2009 = vpop.f32.mrb[0].mxu0
        %v2010 = vpop.f32.mrb[0].mxu0
        %v2011 = vadd.f32 %v1778, %v2010
        %v2012 = vpop.f32.mrb[0].mxu0
        %2013 = vmatprep.mubr.bf16.mxu0 0
        %2014 = vmatmul.mubr.bf16.gmra.mrb[0].mxu0 %v1850
        %v2015 = vpop.f32.mrb[0].mxu0
        %v2016 = vadd.f32 %v1778, %v2015
        %v2017 = vpop.f32.mrb[0].mxu0
        %v2018 = vpop.f32.mrb[0].mxu0
        %v2019 = vadd.f32 %v1778, %v2018
        %v2020 = vpop.f32.mrb[0].mxu0
        %2021 = vmatprep.mubr.bf16.mxu0 0
        %2022 = vmatmul.mubr.bf16.gmra.mrb[0].mxu0 %v1853
        %v2023 = vpop.f32.mrb[0].mxu0
        %v2024 = vadd.f32 %v1778, %v2023
        %v2025 = vpop.f32.mrb[0].mxu0
        %v2026 = vpop.f32.mrb[0].mxu0
        %v2027 = vadd.f32 %v1778, %v2026
        %v2028 = vpop.f32.mrb[0].mxu0
        %2029 = vmatprep.mubr.bf16.mxu0 0
        %2030 = vmatmul.mubr.bf16.gmra.mrb[0].mxu0 %v1856
        %v2031 = vpop.f32.mrb[0].mxu0
        %v2032 = vadd.f32 %v1778, %v2031
        %v2033 = vpop.f32.mrb[0].mxu0
        %v2034 = vpop.f32.mrb[0].mxu0
        %v2035 = vadd.f32 %v1778, %v2034
        %v2036 = vpop.f32.mrb[0].mxu0
        %2037 = vmatprep.mubr.bf16.mxu0 0
        %2038 = vmatmul.mubr.bf16.gmra.mrb[0].mxu0 %v1859
        %v2039 = vpop.f32.mrb[0].mxu0
        %v2040 = vadd.f32 %v1778, %v2039
        %v2041 = vpop.f32.mrb[0].mxu0
        %v2042 = vpop.f32.mrb[0].mxu0
        %v2043 = vadd.f32 %v1778, %v2042
        %v2044 = vpop.f32.mrb[0].mxu0
        %2045 = vdwg.mxu0
        %v2046 = vmax.f32 %v1896, 0.0
        %v2047 = vmax.f32 %v1899, 0.0
        %v2048 = vmax.f32 %v1904, 0.0
        %v2049 = vmax.f32 %v1907, 0.0
        %v2050 = vmax.f32 %v1912, 0.0
        %v2051 = vmax.f32 %v1915, 0.0
        %v2052 = vmax.f32 %v1920, 0.0
        %v2053 = vmax.f32 %v1923, 0.0
        %v2054 = vmax.f32 %v1928, 0.0
        %v2055 = vmax.f32 %v1931, 0.0
        %v2056 = vmax.f32 %v1936, 0.0
        %v2057 = vmax.f32 %v1939, 0.0
        %v2058 = vmax.f32 %v1944, 0.0
        %v2059 = vmax.f32 %v1947, 0.0
        %v2060 = vmax.f32 %v1952, 0.0
        %v2061 = vmax.f32 %v1955, 0.0
        %v2062 = vmax.f32 %v1960, 0.0
        %v2063 = vmax.f32 %v1963, 0.0
        %v2064 = vmax.f32 %v1968, 0.0
        %v2065 = vmax.f32 %v1971, 0.0
        %v2066 = vmax.f32 %v1976, 0.0
        %v2067 = vmax.f32 %v1979, 0.0
        %v2068 = vmax.f32 %v1984, 0.0
        %v2069 = vmax.f32 %v1987, 0.0
        %v2070 = vmax.f32 %v1992, 0.0
        %v2071 = vmax.f32 %v1995, 0.0
        %v2072 = vmax.f32 %v2000, 0.0
        %v2073 = vmax.f32 %v2003, 0.0
        %v2074 = vmax.f32 %v2008, 0.0
        %v2075 = vmax.f32 %v2011, 0.0
        %v2076 = vmax.f32 %v2016, 0.0
        %v2077 = vmax.f32 %v2019, 0.0
        %v2078 = vmax.f32 %v2024, 0.0
        %v2079 = vmax.f32 %v2027, 0.0
        %v2080 = vmax.f32 %v2032, 0.0
        %v2081 = vmax.f32 %v2035, 0.0
        %v2082 = vmax.f32 %v2040, 0.0
        %v2083 = vmax.f32 %v2043, 0.0
        %2084 = vst.msk [vmem:[%s389] sm:$0xff] %vm957, %v2046
        %2085 = vst.msk [vmem:[%s389 + $0x8] sm:$0xff] %vm957, %v2047
        %2086 = vst.msk [vmem:[%s389 + $0x10] sm:$0xff] %vm957, %v2048
        %2087 = vst.msk [vmem:[%s389 + $0x18] sm:$0xff] %vm957, %v2049
        %2088 = vst.msk [vmem:[%s389 + $0x20] sm:$0xff] %vm957, %v2050
        %2089 = vst.msk [vmem:[%s389 + $0x28] sm:$0xff] %vm957, %v2051
        %2090 = vst.msk [vmem:[%s389 + $0x30] sm:$0xff] %vm957, %v2052
        %2091 = vst.msk [vmem:[%s389 + $0x38] sm:$0xff] %vm957, %v2053
        %2092 = vst.msk [vmem:[%s389 + $0x40] sm:$0xff] %vm957, %v2054
        %2093 = vst.msk [vmem:[%s389 + $0x48] sm:$0xff] %vm957, %v2055
        %2094 = vst.msk [vmem:[%s389 + $0x50] sm:$0xff] %vm957, %v2056
        %2095 = vst.msk [vmem:[%s389 + $0x58] sm:$0xff] %vm957, %v2057
        %2096 = vst.msk [vmem:[%s389 + $0x60] sm:$0xff] %vm957, %v2058
        %2097 = vst.msk [vmem:[%s389 + $0x68] sm:$0xff] %vm957, %v2059
        %2098 = vst.msk [vmem:[%s389 + $0x70] sm:$0xff] %vm957, %v2060
        %2099 = vst.msk [vmem:[%s389 + $0x78] sm:$0xff] %vm957, %v2061
        %2100 = vst.msk [vmem:[%s389 + $0x80] sm:$0xff] %vm957, %v2062
        %2101 = vst.msk [vmem:[%s389 + $0x88] sm:$0xff] %vm957, %v2063
        %2102 = vst.msk [vmem:[%s389 + $0x90] sm:$0xff] %vm957, %v2064
        %2103 = vst.msk [vmem:[%s389 + $0x98] sm:$0xff] %vm957, %v2065
        %2104 = vst.msk [vmem:[%s389 + $0xa0] sm:$0xff] %vm957, %v2066
        %2105 = vst.msk [vmem:[%s389 + $0xa8] sm:$0xff] %vm957, %v2067
        %2106 = vst.msk [vmem:[%s389 + $0xb0] sm:$0xff] %vm957, %v2068
        %2107 = vst.msk [vmem:[%s389 + $0xb8] sm:$0xff] %vm957, %v2069
        %2108 = vst.msk [vmem:[%s389 + $0xc0] sm:$0xff] %vm957, %v2070
        %2109 = vst.msk [vmem:[%s389 + $0xc8] sm:$0xff] %vm957, %v2071
        %2110 = vst.msk [vmem:[%s389 + $0xd0] sm:$0xff] %vm957, %v2072
        %2111 = vst.msk [vmem:[%s389 + $0xd8] sm:$0xff] %vm957, %v2073
        %2112 = vst.msk [vmem:[%s389 + $0xe0] sm:$0xff] %vm957, %v2074
        %2113 = vst.msk [vmem:[%s389 + $0xe8] sm:$0xff] %vm957, %v2075
        %2114 = vst.msk [vmem:[%s389 + $0xf0] sm:$0xff] %vm957, %v2076
        %2115 = vst.msk [vmem:[%s389 + $0xf8] sm:$0xff] %vm957, %v2077
        %2116 = vst.msk [vmem:[%s389 + $0x100] sm:$0xff] %vm957, %v2078
        %2117 = vst.msk [vmem:[%s389 + $0x108] sm:$0xff] %vm957, %v2079
        %2118 = vst.msk [vmem:[%s389 + $0x110] sm:$0xff] %vm957, %v2080
        %2119 = vst.msk [vmem:[%s389 + $0x118] sm:$0xff] %vm957, %v2081
        %2120 = vst.msk [vmem:[%s389 + $0x120] sm:$0xff] %vm957, %v2082
        %2121 = vst.msk [vmem:[%s389 + $0x128] sm:$0xff] %vm957, %v2083
        %s2122 = sand.u32 %s249, 1
        %s2123 = sand.u32 %s249, 1
        %s2124 = smul.addr %s2123, 304
        %s2125 = scalar_lea.vmem [#allocation3], %s2124
        // Predicated region
        $region61: #{tpu_custom_call.1} parent=59 // pred_check
          %p2126 = pneg %p259
        $region62: #{tpu_custom_call.1} parent=59 // pred_check_branch
          %2128 = sbr.rel (%p2126) target = $region64
        $region63: #{tpu_custom_call.1} parent=59 // pred_region
          %s2129 = smul.u32 38, %s21
          %s2130 = ssub.s32 75, %s2129
          %p2131 = scmp.lt.s32.totalorder %s2130, 38
          %s2132 = scalar_select %p2131, %s2130, 38
          %s2133 = smul.u32 128, %s2132
          %p2134 = scmp.ne.s32.totalorder 0, %s2133
          %s2135 = smul.addr %s2129, 8
          %s2136 = scalar_lea.vmem %s10, %s2135
          // Predicated region
          $region65: #{tpu_custom_call.1} parent=63 // pred_check
            %p2137 = pneg %p2134
          $region66: #{tpu_custom_call.1} parent=63 // pred_check_branch
            %2139 = sbr.rel (%p2137) target = $region68
          $region67: #{tpu_custom_call.1} parent=63 // pred_region
            // Predicated region
            $region69: #{tpu_custom_call.1} parent=67 // pred_check
              _
            $region70: #{tpu_custom_call.1} parent=67 // pred_check_branch
              %2141 = sbr.rel (0) target = $region72
            $region71: #{tpu_custom_call.1} parent=67 // pred_region
              // Predicated region
              $region91: #{tpu_custom_call.1} parent=71 // pred_check
                _
              $region92: #{tpu_custom_call.1} parent=71 // pred_check_branch
                %2265 = sbr.rel (0) target = $region94
              $region93: #{tpu_custom_call.1} parent=71 // pred_region
                %s2266 = sdiv.u32.pop %s2132, 38
                %s2267 = srem.u32.pop %s2132, 38
                // While loop
                $region95: #{tpu_custom_call.1} parent=93 // loop_pre_header
                  _
                $region96: #{tpu_custom_call.1} parent=93 // loop_header
                  %s2269 = sphi 0, %s2271
                  %p2270 = scmp.ge.s32.totalorder %s2269, %s2266
                  %s2274 = sphi 0, %s2355
                  %s2275 = sphi %s2125, %s2358
                  %s2276 = sphi %s2136, %s2359
                $region97: #{tpu_custom_call.1} parent=93 // loop_header_branch
                  %2273 = sbr.rel (%p2270) target = $region101
                $region98: #{tpu_custom_call.1} parent=93 // loop_body
                  %v2277 = vld [vmem:[%s2275] sm:$0xff]
                  %2278 = vst [vmem:[%s2276] sm:$0xff] %v2277
                  %v2279 = vld [vmem:[%s2275 + $0x8] sm:$0xff]
                  %2280 = vst [vmem:[%s2276 + $0x8] sm:$0xff] %v2279
                  %v2281 = vld [vmem:[%s2275 + $0x10] sm:$0xff]
                  %2282 = vst [vmem:[%s2276 + $0x10] sm:$0xff] %v2281
                  %v2283 = vld [vmem:[%s2275 + $0x18] sm:$0xff]
                  %2284 = vst [vmem:[%s2276 + $0x18] sm:$0xff] %v2283
                  %v2285 = vld [vmem:[%s2275 + $0x20] sm:$0xff]
                  %2286 = vst [vmem:[%s2276 + $0x20] sm:$0xff] %v2285
                  %v2287 = vld [vmem:[%s2275 + $0x28] sm:$0xff]
                  %2288 = vst [vmem:[%s2276 + $0x28] sm:$0xff] %v2287
                  %v2289 = vld [vmem:[%s2275 + $0x30] sm:$0xff]
                  %2290 = vst [vmem:[%s2276 + $0x30] sm:$0xff] %v2289
                  %v2291 = vld [vmem:[%s2275 + $0x38] sm:$0xff]
                  %2292 = vst [vmem:[%s2276 + $0x38] sm:$0xff] %v2291
                  %v2293 = vld [vmem:[%s2275 + $0x40] sm:$0xff]
                  %2294 = vst [vmem:[%s2276 + $0x40] sm:$0xff] %v2293
                  %v2295 = vld [vmem:[%s2275 + $0x48] sm:$0xff]
                  %2296 = vst [vmem:[%s2276 + $0x48] sm:$0xff] %v2295
                  %v2297 = vld [vmem:[%s2275 + $0x50] sm:$0xff]
                  %2298 = vst [vmem:[%s2276 + $0x50] sm:$0xff] %v2297
                  %v2299 = vld [vmem:[%s2275 + $0x58] sm:$0xff]
                  %2300 = vst [vmem:[%s2276 + $0x58] sm:$0xff] %v2299
                  %v2301 = vld [vmem:[%s2275 + $0x60] sm:$0xff]
                  %2302 = vst [vmem:[%s2276 + $0x60] sm:$0xff] %v2301
                  %v2303 = vld [vmem:[%s2275 + $0x68] sm:$0xff]
                  %2304 = vst [vmem:[%s2276 + $0x68] sm:$0xff] %v2303
                  %v2305 = vld [vmem:[%s2275 + $0x70] sm:$0xff]
                  %2306 = vst [vmem:[%s2276 + $0x70] sm:$0xff] %v2305
                  %v2307 = vld [vmem:[%s2275 + $0x78] sm:$0xff]
                  %2308 = vst [vmem:[%s2276 + $0x78] sm:$0xff] %v2307
                  %v2309 = vld [vmem:[%s2275 + $0x80] sm:$0xff]
                  %2310 = vst [vmem:[%s2276 + $0x80] sm:$0xff] %v2309
                  %v2311 = vld [vmem:[%s2275 + $0x88] sm:$0xff]
                  %2312 = vst [vmem:[%s2276 + $0x88] sm:$0xff] %v2311
                  %v2313 = vld [vmem:[%s2275 + $0x90] sm:$0xff]
                  %2314 = vst [vmem:[%s2276 + $0x90] sm:$0xff] %v2313
                  %v2315 = vld [vmem:[%s2275 + $0x98] sm:$0xff]
                  %2316 = vst [vmem:[%s2276 + $0x98] sm:$0xff] %v2315
                  %v2317 = vld [vmem:[%s2275 + $0xa0] sm:$0xff]
                  %2318 = vst [vmem:[%s2276 + $0xa0] sm:$0xff] %v2317
                  %v2319 = vld [vmem:[%s2275 + $0xa8] sm:$0xff]
                  %2320 = vst [vmem:[%s2276 + $0xa8] sm:$0xff] %v2319
                  %v2321 = vld [vmem:[%s2275 + $0xb0] sm:$0xff]
                  %2322 = vst [vmem:[%s2276 + $0xb0] sm:$0xff] %v2321
                  %v2323 = vld [vmem:[%s2275 + $0xb8] sm:$0xff]
                  %2324 = vst [vmem:[%s2276 + $0xb8] sm:$0xff] %v2323
                  %v2325 = vld [vmem:[%s2275 + $0xc0] sm:$0xff]
                  %2326 = vst [vmem:[%s2276 + $0xc0] sm:$0xff] %v2325
                  %v2327 = vld [vmem:[%s2275 + $0xc8] sm:$0xff]
                  %2328 = vst [vmem:[%s2276 + $0xc8] sm:$0xff] %v2327
                  %v2329 = vld [vmem:[%s2275 + $0xd0] sm:$0xff]
                  %2330 = vst [vmem:[%s2276 + $0xd0] sm:$0xff] %v2329
                  %v2331 = vld [vmem:[%s2275 + $0xd8] sm:$0xff]
                  %2332 = vst [vmem:[%s2276 + $0xd8] sm:$0xff] %v2331
                  %v2333 = vld [vmem:[%s2275 + $0xe0] sm:$0xff]
                  %2334 = vst [vmem:[%s2276 + $0xe0] sm:$0xff] %v2333
                  %v2335 = vld [vmem:[%s2275 + $0xe8] sm:$0xff]
                  %2336 = vst [vmem:[%s2276 + $0xe8] sm:$0xff] %v2335
                  %v2337 = vld [vmem:[%s2275 + $0xf0] sm:$0xff]
                  %2338 = vst [vmem:[%s2276 + $0xf0] sm:$0xff] %v2337
                  %v2339 = vld [vmem:[%s2275 + $0xf8] sm:$0xff]
                  %2340 = vst [vmem:[%s2276 + $0xf8] sm:$0xff] %v2339
                  %v2341 = vld [vmem:[%s2275 + $0x100] sm:$0xff]
                  %2342 = vst [vmem:[%s2276 + $0x100] sm:$0xff] %v2341
                  %v2343 = vld [vmem:[%s2275 + $0x108] sm:$0xff]
                  %2344 = vst [vmem:[%s2276 + $0x108] sm:$0xff] %v2343
                  %v2345 = vld [vmem:[%s2275 + $0x110] sm:$0xff]
                  %2346 = vst [vmem:[%s2276 + $0x110] sm:$0xff] %v2345
                  %v2347 = vld [vmem:[%s2275 + $0x118] sm:$0xff]
                  %2348 = vst [vmem:[%s2276 + $0x118] sm:$0xff] %v2347
                  %v2349 = vld [vmem:[%s2275 + $0x120] sm:$0xff]
                  %2350 = vst [vmem:[%s2276 + $0x120] sm:$0xff] %v2349
                  %v2351 = vld [vmem:[%s2275 + $0x128] sm:$0xff]
                  %2352 = vst [vmem:[%s2276 + $0x128] sm:$0xff] %v2351
                  %s2353 = sadd.s32 1, %s2274
                  %p2354 = scmp.ge.s32.totalorder %s2353, %s2266
                  %s2355 = scalar_select %p2354, 0, %s2353
                  %s2356 = smul.u32 %s2355, 304
                  %s2357 = smul.u32 %s2355, 304
                  %s2358 = scalar_lea.vmem %s2125, %s2356 [#allocation3]
                  %s2359 = scalar_lea.vmem %s2136, %s2357
                $region99: #{tpu_custom_call.1} parent=93 // loop_footer
                  %s2271 = sadd.s32 %s2269, 1
                $region100: #{tpu_custom_call.1} parent=93 // loop_footer_branch
                  %2268 = sbr.rel target = $region96
                $region101: #{tpu_custom_call.1} parent=93 // loop_exit
                  _
                %s2360 = sdiv.u32.pop %s2132, 38
                %s2361 = srem.u32.pop %s2132, 38
                %s2362 = smul.u32 %s2360, 38
                %s2363 = smul.u32 8, %s2362
                %s2364 = scalar_lea.vmem %s2125, %s2363 [#allocation3]
                %s2365 = smul.u32 8, %s2362
                %s2366 = scalar_lea.vmem %s2136, %s2365
                // While loop
                $region102: #{tpu_custom_call.1} parent=93 // loop_pre_header
                  _
                $region103: #{tpu_custom_call.1} parent=93 // loop_header
                  %s2368 = sphi 0, %s2370
                  %p2369 = scmp.ge.s32.totalorder %s2368, %s2361
                  %s2373 = sphi 0, %s2380
                  %s2374 = sphi %s2364, %s2383
                  %s2375 = sphi %s2366, %s2384
                $region104: #{tpu_custom_call.1} parent=93 // loop_header_branch
                  %2372 = sbr.rel (%p2369) target = $region108
                $region105: #{tpu_custom_call.1} parent=93 // loop_body
                  %v2376 = vld [vmem:[%s2374] sm:$0xff]
                  %2377 = vst [vmem:[%s2375] sm:$0xff] %v2376
                  %s2378 = sadd.s32 1, %s2373
                  %p2379 = scmp.ge.s32.totalorder %s2378, %s2361
                  %s2380 = scalar_select %p2379, 0, %s2378
                  %s2381 = smul.u32 %s2380, 8
                  %s2382 = smul.u32 %s2380, 8
                  %s2383 = scalar_lea.vmem %s2364, %s2381 [#allocation3]
                  %s2384 = scalar_lea.vmem %s2366, %s2382
                $region106: #{tpu_custom_call.1} parent=93 // loop_footer
                  %s2370 = sadd.s32 %s2368, 1
                $region107: #{tpu_custom_call.1} parent=93 // loop_footer_branch
                  %2367 = sbr.rel target = $region103
                $region108: #{tpu_custom_call.1} parent=93 // loop_exit
                  _
              $region94: #{tpu_custom_call.1} parent=71 // pred_fallthru
                _
              // Predicated region
              $region109: #{tpu_custom_call.1} parent=71 // pred_check
                _
              $region110: #{tpu_custom_call.1} parent=71 // pred_check_branch
                %2386 = sbr.rel target = $region112
              $region111: #{tpu_custom_call.1} parent=71 // pred_region
                _
              $region112: #{tpu_custom_call.1} parent=71 // pred_fallthru
                _
            $region72: #{tpu_custom_call.1} parent=67 // pred_fallthru
              _
            // Predicated region
            $region73: #{tpu_custom_call.1} parent=67 // pred_check
              _
            $region74: #{tpu_custom_call.1} parent=67 // pred_check_branch
              %2143 = sbr.rel target = $region76
            $region75: #{tpu_custom_call.1} parent=67 // pred_region
              %s2145 = sdiv.u32.pop %s2132, 38
              %s2146 = srem.u32.pop %s2132, 38
              // While loop
              $region77: #{tpu_custom_call.1} parent=75 // loop_pre_header
                _
              $region78: #{tpu_custom_call.1} parent=75 // loop_header
                %s2148 = sphi 0, %s2150
                %p2149 = scmp.ge.s32.totalorder %s2148, %s2145
                %s2153 = sphi 0, %s2234
                %s2154 = sphi %s2125, %s2237
                %s2155 = sphi %s2136, %s2238
              $region79: #{tpu_custom_call.1} parent=75 // loop_header_branch
                %2152 = sbr.rel (%p2149) target = $region83
              $region80: #{tpu_custom_call.1} parent=75 // loop_body
                %v2156 = vld [vmem:[%s2154] sm:$0xff]
                %2157 = vst [vmem:[%s2155] sm:$0xff] %v2156
                %v2158 = vld [vmem:[%s2154 + $0x8] sm:$0xff]
                %2159 = vst [vmem:[%s2155 + $0x8] sm:$0xff] %v2158
                %v2160 = vld [vmem:[%s2154 + $0x10] sm:$0xff]
                %2161 = vst [vmem:[%s2155 + $0x10] sm:$0xff] %v2160
                %v2162 = vld [vmem:[%s2154 + $0x18] sm:$0xff]
                %2163 = vst [vmem:[%s2155 + $0x18] sm:$0xff] %v2162
                %v2164 = vld [vmem:[%s2154 + $0x20] sm:$0xff]
                %2165 = vst [vmem:[%s2155 + $0x20] sm:$0xff] %v2164
                %v2166 = vld [vmem:[%s2154 + $0x28] sm:$0xff]
                %2167 = vst [vmem:[%s2155 + $0x28] sm:$0xff] %v2166
                %v2168 = vld [vmem:[%s2154 + $0x30] sm:$0xff]
                %2169 = vst [vmem:[%s2155 + $0x30] sm:$0xff] %v2168
                %v2170 = vld [vmem:[%s2154 + $0x38] sm:$0xff]
                %2171 = vst [vmem:[%s2155 + $0x38] sm:$0xff] %v2170
                %v2172 = vld [vmem:[%s2154 + $0x40] sm:$0xff]
                %2173 = vst [vmem:[%s2155 + $0x40] sm:$0xff] %v2172
                %v2174 = vld [vmem:[%s2154 + $0x48] sm:$0xff]
                %2175 = vst [vmem:[%s2155 + $0x48] sm:$0xff] %v2174
                %v2176 = vld [vmem:[%s2154 + $0x50] sm:$0xff]
                %2177 = vst [vmem:[%s2155 + $0x50] sm:$0xff] %v2176
                %v2178 = vld [vmem:[%s2154 + $0x58] sm:$0xff]
                %2179 = vst [vmem:[%s2155 + $0x58] sm:$0xff] %v2178
                %v2180 = vld [vmem:[%s2154 + $0x60] sm:$0xff]
                %2181 = vst [vmem:[%s2155 + $0x60] sm:$0xff] %v2180
                %v2182 = vld [vmem:[%s2154 + $0x68] sm:$0xff]
                %2183 = vst [vmem:[%s2155 + $0x68] sm:$0xff] %v2182
                %v2184 = vld [vmem:[%s2154 + $0x70] sm:$0xff]
                %2185 = vst [vmem:[%s2155 + $0x70] sm:$0xff] %v2184
                %v2186 = vld [vmem:[%s2154 + $0x78] sm:$0xff]
                %2187 = vst [vmem:[%s2155 + $0x78] sm:$0xff] %v2186
                %v2188 = vld [vmem:[%s2154 + $0x80] sm:$0xff]
                %2189 = vst [vmem:[%s2155 + $0x80] sm:$0xff] %v2188
                %v2190 = vld [vmem:[%s2154 + $0x88] sm:$0xff]
                %2191 = vst [vmem:[%s2155 + $0x88] sm:$0xff] %v2190
                %v2192 = vld [vmem:[%s2154 + $0x90] sm:$0xff]
                %2193 = vst [vmem:[%s2155 + $0x90] sm:$0xff] %v2192
                %v2194 = vld [vmem:[%s2154 + $0x98] sm:$0xff]
                %2195 = vst [vmem:[%s2155 + $0x98] sm:$0xff] %v2194
                %v2196 = vld [vmem:[%s2154 + $0xa0] sm:$0xff]
                %2197 = vst [vmem:[%s2155 + $0xa0] sm:$0xff] %v2196
                %v2198 = vld [vmem:[%s2154 + $0xa8] sm:$0xff]
                %2199 = vst [vmem:[%s2155 + $0xa8] sm:$0xff] %v2198
                %v2200 = vld [vmem:[%s2154 + $0xb0] sm:$0xff]
                %2201 = vst [vmem:[%s2155 + $0xb0] sm:$0xff] %v2200
                %v2202 = vld [vmem:[%s2154 + $0xb8] sm:$0xff]
                %2203 = vst [vmem:[%s2155 + $0xb8] sm:$0xff] %v2202
                %v2204 = vld [vmem:[%s2154 + $0xc0] sm:$0xff]
                %2205 = vst [vmem:[%s2155 + $0xc0] sm:$0xff] %v2204
                %v2206 = vld [vmem:[%s2154 + $0xc8] sm:$0xff]
                %2207 = vst [vmem:[%s2155 + $0xc8] sm:$0xff] %v2206
                %v2208 = vld [vmem:[%s2154 + $0xd0] sm:$0xff]
                %2209 = vst [vmem:[%s2155 + $0xd0] sm:$0xff] %v2208
                %v2210 = vld [vmem:[%s2154 + $0xd8] sm:$0xff]
                %2211 = vst [vmem:[%s2155 + $0xd8] sm:$0xff] %v2210
                %v2212 = vld [vmem:[%s2154 + $0xe0] sm:$0xff]
                %2213 = vst [vmem:[%s2155 + $0xe0] sm:$0xff] %v2212
                %v2214 = vld [vmem:[%s2154 + $0xe8] sm:$0xff]
                %2215 = vst [vmem:[%s2155 + $0xe8] sm:$0xff] %v2214
                %v2216 = vld [vmem:[%s2154 + $0xf0] sm:$0xff]
                %2217 = vst [vmem:[%s2155 + $0xf0] sm:$0xff] %v2216
                %v2218 = vld [vmem:[%s2154 + $0xf8] sm:$0xff]
                %2219 = vst [vmem:[%s2155 + $0xf8] sm:$0xff] %v2218
                %v2220 = vld [vmem:[%s2154 + $0x100] sm:$0xff]
                %2221 = vst [vmem:[%s2155 + $0x100] sm:$0xff] %v2220
                %v2222 = vld [vmem:[%s2154 + $0x108] sm:$0xff]
                %2223 = vst [vmem:[%s2155 + $0x108] sm:$0xff] %v2222
                %v2224 = vld [vmem:[%s2154 + $0x110] sm:$0xff]
                %2225 = vst [vmem:[%s2155 + $0x110] sm:$0xff] %v2224
                %v2226 = vld [vmem:[%s2154 + $0x118] sm:$0xff]
                %2227 = vst [vmem:[%s2155 + $0x118] sm:$0xff] %v2226
                %v2228 = vld [vmem:[%s2154 + $0x120] sm:$0xff]
                %2229 = vst [vmem:[%s2155 + $0x120] sm:$0xff] %v2228
                %v2230 = vld [vmem:[%s2154 + $0x128] sm:$0xff]
                %2231 = vst [vmem:[%s2155 + $0x128] sm:$0xff] %v2230
                %s2232 = sadd.s32 1, %s2153
                %p2233 = scmp.ge.s32.totalorder %s2232, %s2145
                %s2234 = scalar_select %p2233, 0, %s2232
                %s2235 = smul.u32 %s2234, 304
                %s2236 = smul.u32 %s2234, 304
                %s2237 = scalar_lea.vmem %s2125, %s2235 [#allocation3]
                %s2238 = scalar_lea.vmem %s2136, %s2236
              $region81: #{tpu_custom_call.1} parent=75 // loop_footer
                %s2150 = sadd.s32 %s2148, 1
              $region82: #{tpu_custom_call.1} parent=75 // loop_footer_branch
                %2147 = sbr.rel target = $region78
              $region83: #{tpu_custom_call.1} parent=75 // loop_exit
                _
              %s2239 = sdiv.u32.pop %s2132, 38
              %s2240 = srem.u32.pop %s2132, 38
              %s2241 = smul.u32 %s2239, 38
              %s2242 = smul.u32 8, %s2241
              %s2243 = scalar_lea.vmem %s2125, %s2242 [#allocation3]
              %s2244 = smul.u32 8, %s2241
              %s2245 = scalar_lea.vmem %s2136, %s2244
              // While loop
              $region84: #{tpu_custom_call.1} parent=75 // loop_pre_header
                _
              $region85: #{tpu_custom_call.1} parent=75 // loop_header
                %s2247 = sphi 0, %s2249
                %p2248 = scmp.ge.s32.totalorder %s2247, %s2240
                %s2252 = sphi 0, %s2259
                %s2253 = sphi %s2243, %s2262
                %s2254 = sphi %s2245, %s2263
              $region86: #{tpu_custom_call.1} parent=75 // loop_header_branch
                %2251 = sbr.rel (%p2248) target = $region90
              $region87: #{tpu_custom_call.1} parent=75 // loop_body
                %v2255 = vld [vmem:[%s2253] sm:$0xff]
                %2256 = vst [vmem:[%s2254] sm:$0xff] %v2255
                %s2257 = sadd.s32 1, %s2252
                %p2258 = scmp.ge.s32.totalorder %s2257, %s2240
                %s2259 = scalar_select %p2258, 0, %s2257
                %s2260 = smul.u32 %s2259, 8
                %s2261 = smul.u32 %s2259, 8
                %s2262 = scalar_lea.vmem %s2243, %s2260 [#allocation3]
                %s2263 = scalar_lea.vmem %s2245, %s2261
              $region88: #{tpu_custom_call.1} parent=75 // loop_footer
                %s2249 = sadd.s32 %s2247, 1
              $region89: #{tpu_custom_call.1} parent=75 // loop_footer_branch
                %2246 = sbr.rel target = $region85
              $region90: #{tpu_custom_call.1} parent=75 // loop_exit
                _
            $region76: #{tpu_custom_call.1} parent=67 // pred_fallthru
              _
          $region68: #{tpu_custom_call.1} parent=63 // pred_fallthru
            _
          %2387 = vnop
        $region64: #{tpu_custom_call.1} parent=59 // pred_fallthru
          _
      $region60: #{tpu_custom_call.1} parent=5 // pred_fallthru
        _
      %p2388 = scmp.le.s32.totalorder 2, %s16
      // Predicated region
      $region113: #{tpu_custom_call.1} parent=5 // pred_check
        %p2389 = pneg %p2388
      $region114: #{tpu_custom_call.1} parent=5 // pred_check_branch
        %2391 = sbr.rel (%p2389) target = $region116
      $region115: #{tpu_custom_call.1} parent=5 // pred_region
        %s2392 = ssub.s32 %s16, 2
        // Predicated region
        $region117: #{tpu_custom_call.1} parent=115 // pred_check
          %p2393 = pneg %p265
        $region118: #{tpu_custom_call.1} parent=115 // pred_check_branch
          %2395 = sbr.rel (%p2393) target = $region120
        $region119: #{tpu_custom_call.1} parent=115 // pred_region
          %s2396 = sand.u32 %s250, 1
          %s2397 = sand.u32 %s250, 1
          %s2398 = smul.addr %s2397, 304
          %s2399 = scalar_lea.vmem [#allocation3], %s2398
        $region120: #{tpu_custom_call.1} parent=115 // pred_fallthru
          _
      $region116: #{tpu_custom_call.1} parent=5 // pred_fallthru
        _
    $region6: #{tpu_custom_call.1} parent=1 // loop_footer
      %s20 = sadd.s32 1, %s16
    $region7: #{tpu_custom_call.1} parent=1 // loop_footer_branch
      %15 = sbr.rel target = $region3
    $region8: #{tpu_custom_call.1} parent=1 // loop_exit
      _

</llo_original>
